<compile_context>
chip_gen: v6e
topology: v6e:2x2x1
jax: 0.10.0
libtpu: 0.0.40
codegen_flags: <defaults>
</compile_context>

<pallas_src>
import jax
import jax.numpy as jnp
from jax.experimental import pallas as pl
from jax.experimental.pallas import tpu as pltpu

NUM_CLASSES = 3
D_IN, D_H1, D_H2, D_H3 = 9, 784, 300, 100
# Lane-aligned (multiple-of-128) padded dims used inside the kernel.
H1P, H2P, H3P, OUT_PAD = 896, 384, 128, 128
B_TILE = 1024          # batch tile (multiple of 256); sweepable 512/1024/2048


def _fc1_kernel(x_ref, w1_ref, b1_ref, w2_ref, b2_ref, w3_ref, b3_ref,
                w4_ref, b4_ref, out_ref):
    # (bt, 9) f32 -> bf16 for the MXU; every matmul accumulates in f32.
    h = x_ref[...].astype(jnp.bfloat16)

    # Linear(9, 896-padded) + ReLU.  K=9 pads an MXU pass but is still far
    # cheaper than doing 9 rank-1 VPU updates (see header note).
    h = jnp.dot(h, w1_ref[...], preferred_element_type=jnp.float32) + b1_ref[...]
    h = jnp.maximum(h, 0.0).astype(jnp.bfloat16)            # (bt, 896)

    # Linear(896, 384-padded) + ReLU   (the dominant matmul)
    h = jnp.dot(h, w2_ref[...], preferred_element_type=jnp.float32) + b2_ref[...]
    h = jnp.maximum(h, 0.0).astype(jnp.bfloat16)            # (bt, 384)

    # Linear(384, 128-padded) + ReLU
    h = jnp.dot(h, w3_ref[...], preferred_element_type=jnp.float32) + b3_ref[...]
    h = jnp.maximum(h, 0.0).astype(jnp.bfloat16)            # (bt, 128)

    # Linear(128, 128-padded): lane-dense, unmasked full-vreg store.
    out = jnp.dot(h, w4_ref[...], preferred_element_type=jnp.float32) + b4_ref[...]
    out_ref[...] = out.astype(out_ref.dtype)                # (bt, 128)


def _cdiv(a, b):
    return -(-a // b)


def _round_up(n, m):
    return _cdiv(n, m) * m


def _plan_batch(B):
    """Return (bt, n_tiles): bt is a multiple of 256, bt * n_tiles >= B.

    - B <= 512: a single tile (rounded up to 256) — not enough work to split.
    - larger B: at least 2 (and an even number of) tiles, each <= B_TILE, so
      v7x's two TensorCores get a balanced share under "parallel" semantics.
    """
    if B <= 512:
        return max(256, _round_up(B, 256)), 1
    n = max(2, _cdiv(B, B_TILE))
    if n % 2:
        n += 1
    bt = _round_up(_cdiv(B, n), 256)
    return bt, n


def _pad2(a, rows, cols):
    r, c = a.shape
    return jnp.pad(a, ((0, rows - r), (0, cols - c)))


@jax.jit
def fc1_large_forward(x, params):
    """x: (B, 9) float32. params: dict of (w_i, b_i) with w_i stored as (in, out)."""
    B = x.shape[0]
    bt, n_tiles = _plan_batch(B)
    Bp = bt * n_tiles
    if Bp != B:
        x = jnp.pad(x, ((0, Bp - B), (0, 0)))
    grid = (n_tiles,)

    bf16 = jnp.bfloat16
    f32 = jnp.float32
    # Weights converted / lane-padded once in the wrapper; biases stay f32.
    # Zero padding is inert: padded lanes stay 0 through bias+ReLU and multiply
    # against zero rows of the next weight matrix.
    w1 = _pad2(params["w1"], D_IN, H1P).astype(bf16)             # (9,   896)
    w2 = _pad2(params["w2"], H1P, H2P).astype(bf16)              # (896, 384)
    w3 = _pad2(params["w3"], H2P, H3P).astype(bf16)              # (384, 128)
    w4 = _pad2(params["w4"], H3P, OUT_PAD).astype(bf16)          # (128, 128)
    b1 = _pad2(params["b1"].reshape(1, D_H1), 1, H1P).astype(f32)
    b2 = _pad2(params["b2"].reshape(1, D_H2), 1, H2P).astype(f32)
    b3 = _pad2(params["b3"].reshape(1, D_H3), 1, H3P).astype(f32)
    b4 = _pad2(params["b4"].reshape(1, NUM_CLASSES), 1, OUT_PAD).astype(f32)

    # Full-array block with a constant index_map -> VMEM-resident across the grid.
    resident = lambda a: pl.BlockSpec(a.shape, lambda i: (0,) * a.ndim)

    mm = D_IN * H1P + H1P * H2P + H2P * H3P + H3P * OUT_PAD
    cost = pl.CostEstimate(
        flops=2 * Bp * mm,
        transcendentals=0,
        bytes_accessed=Bp * D_IN * 4 + Bp * OUT_PAD * 4
        + 2 * mm + 4 * (H1P + H2P + H3P + OUT_PAD),
    )

    # v5e's scoped-VMEM default (16 MiB) is tight at bt>=1024 with the f32
    # pre-ReLU intermediates; 48 MiB leaves headroom on every generation
    # (v7x physical is 64 MiB).
    vmem_limit = 48 * 1024 * 1024 if bt >= 512 else None

    out = pl.pallas_call(
        _fc1_kernel,
        out_shape=jax.ShapeDtypeStruct((Bp, OUT_PAD), jnp.float32),
        grid=grid,
        in_specs=[pl.BlockSpec((bt, D_IN), lambda i: (i, 0)),
                  resident(w1), resident(b1),
                  resident(w2), resident(b2),
                  resident(w3), resident(b3),
                  resident(w4), resident(b4)],
        out_specs=pl.BlockSpec((bt, OUT_PAD), lambda i: (i, 0)),
        compiler_params=pltpu.CompilerParams(
            # batch axis is independent -> shard across TCs on v7x
            # (switch to pltpu.CORE_PARALLEL if a v7x trace shows one idle TC).
            dimension_semantics=("parallel",),
            vmem_limit_bytes=vmem_limit),
        cost_estimate=cost,
    )(x, w1, b1, w2, b2, w3, b3, w4, b4)

    return out[:B, :NUM_CLASSES]


def init_params(key):
    """Deterministic init mimicking PyTorch nn.Linear default (uniform +-1/sqrt(fan_in))."""
    def linear(key, fan_in, fan_out):
        kw, kb = jax.random.split(key)
        bound = 1.0 / jnp.sqrt(fan_in)
        # stored as (in, out), i.e. transposed relative to torch's (out, in)
        w = jax.random.uniform(kw, (fan_in, fan_out), jnp.float32, -bound, bound)
        b = jax.random.uniform(kb, (fan_out,), jnp.float32, -bound, bound)
        return w, b

    k1, k2, k3, k4 = jax.random.split(key, 4)
    w1, b1 = linear(k1, D_IN, D_H1)
    w2, b2 = linear(k2, D_H1, D_H2)
    w3, b3 = linear(k3, D_H2, D_H3)
    w4, b4 = linear(k4, D_H3, NUM_CLASSES)
    return {"w1": w1, "b1": b1, "w2": w2, "b2": b2,
            "w3": w3, "b3": b3, "w4": w4, "b4": b4}


def _reference(x, p):
    """Pure-JAX reference mirroring the kernel's bf16-matmul / f32-accumulate path.

    Note: inter-layer activations are bf16, so results match a strict f32 PyTorch
    forward only to ~1e-2; keep h in f32 between layers if exact parity is needed.
    """
    bf16 = jnp.bfloat16
    h = x.astype(bf16)
    h = jnp.maximum(jnp.dot(h, p["w1"].astype(bf16),
                            preferred_element_type=jnp.float32) + p["b1"], 0.0)
    h = h.astype(bf16)
    h = jnp.maximum(jnp.dot(h, p["w2"].astype(bf16),
                            preferred_element_type=jnp.float32) + p["b2"], 0.0)
    h = h.astype(bf16)
    h = jnp.maximum(jnp.dot(h, p["w3"].astype(bf16),
                            preferred_element_type=jnp.float32) + p["b3"], 0.0)
    h = h.astype(bf16)
    return jnp.dot(h, p["w4"].astype(bf16),
                   preferred_element_type=jnp.float32) + p["b4"]


if __name__ == "__main__":
    key = jax.random.PRNGKey(0)
    kx, kx2, kp = jax.random.split(key, 3)
    params = init_params(kp)

    # Small batch: single 256-row tile (rows zero-padded, sliced back out).
    batch = 8
    x = jax.random.normal(kx, (batch, D_IN), jnp.float32)
    out = jax.block_until_ready(fc1_large_forward(x, params))
    ref = _reference(x, params)
    assert out.shape == (batch, NUM_CLASSES)
    assert jnp.allclose(out, ref, atol=1e-2, rtol=1e-2), float(jnp.max(jnp.abs(out - ref)))

    # Larger ragged batch: exercises the multi-tile grid (2 steps of 512 rows).
    batch2 = 600
    x2 = jax.random.normal(kx2, (batch2, D_IN), jnp.float32)
    out2 = jax.block_until_ready(fc1_large_forward(x2, params))
    ref2 = _reference(x2, params)
    assert out2.shape == (batch2, NUM_CLASSES)
    assert jnp.allclose(out2, ref2, atol=1e-2, rtol=1e-2), float(jnp.max(jnp.abs(out2 - ref2)))

    print("KERNEL_OK")
</pallas_src>

<mosaic_0001>
module attributes {stable_mosaic.version = 11 : i64} {
  func.func @_fc1_kernel(%arg0: i32, %arg1: memref<256x9xf32, #tpu.memory_space<vmem>>, %arg2: memref<9x896xbf16, #tpu.memory_space<vmem>>, %arg3: memref<1x896xf32, #tpu.memory_space<vmem>>, %arg4: memref<896x384xbf16, #tpu.memory_space<vmem>>, %arg5: memref<1x384xf32, #tpu.memory_space<vmem>>, %arg6: memref<384x128xbf16, #tpu.memory_space<vmem>>, %arg7: memref<1x128xf32, #tpu.memory_space<vmem>>, %arg8: memref<128x128xbf16, #tpu.memory_space<vmem>>, %arg9: memref<1x128xf32, #tpu.memory_space<vmem>>, %arg10: memref<256x128xf32, #tpu.memory_space<vmem>>) attributes {dimension_semantics = [#tpu.dimension_semantics<parallel>], iteration_bounds = array<i64: 1>, scalar_prefetch = 0 : i64, scratch_operands = 0 : i64, tpu.core_type = #tpu.core_type<tc>, window_params = [{transform_indices = @transform_0, window_bounds = array<i64: 256, 9>}, {pipeline_mode = #tpu.pipeline_mode<synchronous>, transform_indices = @transform_1, window_bounds = array<i64: 9, 896>}, {pipeline_mode = #tpu.pipeline_mode<synchronous>, transform_indices = @transform_2, window_bounds = array<i64: 1, 896>}, {pipeline_mode = #tpu.pipeline_mode<synchronous>, transform_indices = @transform_3, window_bounds = array<i64: 896, 384>}, {pipeline_mode = #tpu.pipeline_mode<synchronous>, transform_indices = @transform_4, window_bounds = array<i64: 1, 384>}, {pipeline_mode = #tpu.pipeline_mode<synchronous>, transform_indices = @transform_5, window_bounds = array<i64: 384, 128>}, {pipeline_mode = #tpu.pipeline_mode<synchronous>, transform_indices = @transform_6, window_bounds = array<i64: 1, 128>}, {pipeline_mode = #tpu.pipeline_mode<synchronous>, transform_indices = @transform_7, window_bounds = array<i64: 128, 128>}, {pipeline_mode = #tpu.pipeline_mode<synchronous>, transform_indices = @transform_8, window_bounds = array<i64: 1, 128>}, {transform_indices = @transform_9, window_bounds = array<i64: 256, 128>}]} {
    %c0 = arith.constant 0 : index
    %c0_0 = arith.constant 0 : index
    %0 = vector.load %arg1[%c0, %c0_0] : memref<256x9xf32, #tpu.memory_space<vmem>>, vector<256x9xf32>
    %1 = arith.truncf %0 : vector<256x9xf32> to vector<256x9xbf16>
    %c0_1 = arith.constant 0 : index
    %c0_2 = arith.constant 0 : index
    %2 = vector.load %arg2[%c0_1, %c0_2] : memref<9x896xbf16, #tpu.memory_space<vmem>>, vector<9x896xbf16>
    %cst = arith.constant dense<0.000000e+00> : vector<256x896xf32>
    %3 = tpu.matmul %1, %2, %cst {dimension_numbers = #tpu.dot_dimension_numbers<[1], [0], [0], [1], [0, 0, 1, 1], [], []>} : vector<256x9xbf16>, vector<9x896xbf16>, vector<256x896xf32> -> vector<256x896xf32>
    %c0_3 = arith.constant 0 : index
    %c0_4 = arith.constant 0 : index
    %4 = vector.load %arg3[%c0_3, %c0_4] : memref<1x896xf32, #tpu.memory_space<vmem>>, vector<1x896xf32>
    %5 = vector.broadcast %4 : vector<1x896xf32> to vector<256x896xf32>
    %6 = arith.addf %3, %5 : vector<256x896xf32>
    %cst_5 = arith.constant 0.000000e+00 : f32
    %7 = vector.broadcast %cst_5 : f32 to vector<256x896xf32>
    %8 = arith.maximumf %6, %7 : vector<256x896xf32>
    %9 = arith.truncf %8 : vector<256x896xf32> to vector<256x896xbf16>
    %c0_6 = arith.constant 0 : index
    %c0_7 = arith.constant 0 : index
    %10 = vector.load %arg4[%c0_6, %c0_7] : memref<896x384xbf16, #tpu.memory_space<vmem>>, vector<896x384xbf16>
    %cst_8 = arith.constant dense<0.000000e+00> : vector<256x384xf32>
    %11 = tpu.matmul %9, %10, %cst_8 {dimension_numbers = #tpu.dot_dimension_numbers<[1], [0], [0], [1], [0, 0, 1, 1], [], []>} : vector<256x896xbf16>, vector<896x384xbf16>, vector<256x384xf32> -> vector<256x384xf32>
    %c0_9 = arith.constant 0 : index
    %c0_10 = arith.constant 0 : index
    %12 = vector.load %arg5[%c0_9, %c0_10] : memref<1x384xf32, #tpu.memory_space<vmem>>, vector<1x384xf32>
    %13 = vector.broadcast %12 : vector<1x384xf32> to vector<256x384xf32>
    %14 = arith.addf %11, %13 : vector<256x384xf32>
    %cst_11 = arith.constant 0.000000e+00 : f32
    %15 = vector.broadcast %cst_11 : f32 to vector<256x384xf32>
    %16 = arith.maximumf %14, %15 : vector<256x384xf32>
    %17 = arith.truncf %16 : vector<256x384xf32> to vector<256x384xbf16>
    %c0_12 = arith.constant 0 : index
    %c0_13 = arith.constant 0 : index
    %18 = vector.load %arg6[%c0_12, %c0_13] : memref<384x128xbf16, #tpu.memory_space<vmem>>, vector<384x128xbf16>
    %cst_14 = arith.constant dense<0.000000e+00> : vector<256x128xf32>
    %19 = tpu.matmul %17, %18, %cst_14 {dimension_numbers = #tpu.dot_dimension_numbers<[1], [0], [0], [1], [0, 0, 1, 1], [], []>} : vector<256x384xbf16>, vector<384x128xbf16>, vector<256x128xf32> -> vector<256x128xf32>
    %c0_15 = arith.constant 0 : index
    %c0_16 = arith.constant 0 : index
    %20 = vector.load %arg7[%c0_15, %c0_16] : memref<1x128xf32, #tpu.memory_space<vmem>>, vector<1x128xf32>
    %21 = vector.broadcast %20 : vector<1x128xf32> to vector<256x128xf32>
    %22 = arith.addf %19, %21 : vector<256x128xf32>
    %cst_17 = arith.constant 0.000000e+00 : f32
    %23 = vector.broadcast %cst_17 : f32 to vector<256x128xf32>
    %24 = arith.maximumf %22, %23 : vector<256x128xf32>
    %25 = arith.truncf %24 : vector<256x128xf32> to vector<256x128xbf16>
    %c0_18 = arith.constant 0 : index
    %c0_19 = arith.constant 0 : index
    %26 = vector.load %arg8[%c0_18, %c0_19] : memref<128x128xbf16, #tpu.memory_space<vmem>>, vector<128x128xbf16>
    %cst_20 = arith.constant dense<0.000000e+00> : vector<256x128xf32>
    %27 = tpu.matmul %25, %26, %cst_20 {dimension_numbers = #tpu.dot_dimension_numbers<[1], [0], [0], [1], [0, 0, 1, 1], [], []>} : vector<256x128xbf16>, vector<128x128xbf16>, vector<256x128xf32> -> vector<256x128xf32>
    %c0_21 = arith.constant 0 : index
    %c0_22 = arith.constant 0 : index
    %28 = vector.load %arg9[%c0_21, %c0_22] : memref<1x128xf32, #tpu.memory_space<vmem>>, vector<1x128xf32>
    %29 = vector.broadcast %28 : vector<1x128xf32> to vector<256x128xf32>
    %30 = arith.addf %27, %29 : vector<256x128xf32>
    %c0_23 = arith.constant 0 : index
    %c0_24 = arith.constant 0 : index
    %31 = vector.load %arg10[%c0_23, %c0_24] : memref<256x128xf32, #tpu.memory_space<vmem>>, vector<256x128xf32>
    tpu.vector_store %arg10[%c0_23, %c0_24], %30 {strides = array<i32>} : memref<256x128xf32, #tpu.memory_space<vmem>>, vector<256x128xf32>,
    return
  }
  func.func @transform_0(%arg0: i32) -> (i32, i32) {
    %c0_i32 = arith.constant 0 : i32
    %c0_i32_0 = arith.constant 0 : i32
    return %arg0, %c0_i32 : i32, i32
  }
  func.func @transform_1(%arg0: i32) -> (i32, i32) {
    %c0_i32 = arith.constant 0 : i32
    %c0_i32_0 = arith.constant 0 : i32
    %c0_i32_1 = arith.constant 0 : i32
    return %c0_i32, %c0_i32_0 : i32, i32
  }
  func.func @transform_2(%arg0: i32) -> (i32, i32) {
    %c0_i32 = arith.constant 0 : i32
    %c0_i32_0 = arith.constant 0 : i32
    %c0_i32_1 = arith.constant 0 : i32
    return %c0_i32, %c0_i32_0 : i32, i32
  }
  func.func @transform_3(%arg0: i32) -> (i32, i32) {
    %c0_i32 = arith.constant 0 : i32
    %c0_i32_0 = arith.constant 0 : i32
    %c0_i32_1 = arith.constant 0 : i32
    return %c0_i32, %c0_i32_0 : i32, i32
  }
  func.func @transform_4(%arg0: i32) -> (i32, i32) {
    %c0_i32 = arith.constant 0 : i32
    %c0_i32_0 = arith.constant 0 : i32
    %c0_i32_1 = arith.constant 0 : i32
    return %c0_i32, %c0_i32_0 : i32, i32
  }
  func.func @transform_5(%arg0: i32) -> (i32, i32) {
    %c0_i32 = arith.constant 0 : i32
    %c0_i32_0 = arith.constant 0 : i32
    %c0_i32_1 = arith.constant 0 : i32
    return %c0_i32, %c0_i32_0 : i32, i32
  }
  func.func @transform_6(%arg0: i32) -> (i32, i32) {
    %c0_i32 = arith.constant 0 : i32
    %c0_i32_0 = arith.constant 0 : i32
    %c0_i32_1 = arith.constant 0 : i32
    return %c0_i32, %c0_i32_0 : i32, i32
  }
  func.func @transform_7(%arg0: i32) -> (i32, i32) {
    %c0_i32 = arith.constant 0 : i32
    %c0_i32_0 = arith.constant 0 : i32
    %c0_i32_1 = arith.constant 0 : i32
    return %c0_i32, %c0_i32_0 : i32, i32
  }
  func.func @transform_8(%arg0: i32) -> (i32, i32) {
    %c0_i32 = arith.constant 0 : i32
    %c0_i32_0 = arith.constant 0 : i32
    %c0_i32_1 = arith.constant 0 : i32
    return %c0_i32, %c0_i32_0 : i32, i32
  }
  func.func @transform_9(%arg0: i32) -> (i32, i32) {
    %c0_i32 = arith.constant 0 : i32
    %c0_i32_0 = arith.constant 0 : i32
    return %arg0, %c0_i32 : i32, i32
  }
}

</mosaic_0001>

<llo_original>
// kernel: fc1_large_forward.1
$region0: #{fc1_large_forward.1}
  #allocation0 [shape = 'u32[]', space=smem, size = 0x4, offset = 0x4, fixed_abs, tag = 'smem constant byte address 0x4 - core index']
  #allocation1 [shape = 'u32[144,128]{1,0:T(1,128)}', space=vmem, size = 0x12000, scoped, tag = 'internal scratch']
  %s0 = inlined_call_operand.vmem [shape: f32[256,9], index: 0, kind: input, shape index: {}]
  %s1 = inlined_call_operand.vmem [shape: bf16[9,896], index: 1, kind: input, shape index: {}]
  %s2 = inlined_call_operand.vmem [shape: f32[1,896], index: 2, kind: input, shape index: {}]
  %s3 = inlined_call_operand.vmem [shape: bf16[896,384], index: 3, kind: input, shape index: {}]
  %s4 = inlined_call_operand.vmem [shape: f32[1,384], index: 4, kind: input, shape index: {}]
  %s5 = inlined_call_operand.vmem [shape: bf16[384,128], index: 5, kind: input, shape index: {}]
  %s6 = inlined_call_operand.vmem [shape: f32[1,128], index: 6, kind: input, shape index: {}]
  %s7 = inlined_call_operand.vmem [shape: bf16[128,128], index: 7, kind: input, shape index: {}]
  %s8 = inlined_call_operand.vmem [shape: f32[1,128], index: 8, kind: input, shape index: {}]
  %s9 = inlined_call_operand.vmem [shape: f32[256,128], index: 9, kind: output, shape index: {}]
  %s10 = sld [smem:[#allocation0]]
  $region46: #{fc1_large_forward.1} parent=0
    _
  %s12 = ssub.s32 1, %s10
  %s13 = scalar_select 0, %s12, %s10
  // Predicated region
  $region2: #{fc1_large_forward.1} parent=0 // pred_check
    _
  $region3: #{fc1_large_forward.1} parent=0 // pred_check_branch
    %15 = sbr.rel (0) target = $region5
  $region4: #{fc1_large_forward.1} parent=0 // pred_region
    _
  $region5: #{fc1_large_forward.1} parent=0 // pred_fallthru
    _
  // Predicated region
  $region6: #{fc1_large_forward.1} parent=0 // pred_check
    _
  $region7: #{fc1_large_forward.1} parent=0 // pred_check_branch
    %17 = sbr.rel (0) target = $region9
  $region8: #{fc1_large_forward.1} parent=0 // pred_region
    _
  $region9: #{fc1_large_forward.1} parent=0 // pred_fallthru
    _
  // Predicated region
  $region10: #{fc1_large_forward.1} parent=0 // pred_check
    _
  $region11: #{fc1_large_forward.1} parent=0 // pred_check_branch
    %19 = sbr.rel (0) target = $region13
  $region12: #{fc1_large_forward.1} parent=0 // pred_region
    _
  $region13: #{fc1_large_forward.1} parent=0 // pred_fallthru
    _
  // Predicated region
  $region14: #{fc1_large_forward.1} parent=0 // pred_check
    _
  $region15: #{fc1_large_forward.1} parent=0 // pred_check_branch
    %21 = sbr.rel (0) target = $region17
  $region16: #{fc1_large_forward.1} parent=0 // pred_region
    _
  $region17: #{fc1_large_forward.1} parent=0 // pred_fallthru
    _
  // Predicated region
  $region18: #{fc1_large_forward.1} parent=0 // pred_check
    _
  $region19: #{fc1_large_forward.1} parent=0 // pred_check_branch
    %23 = sbr.rel (0) target = $region21
  $region20: #{fc1_large_forward.1} parent=0 // pred_region
    _
  $region21: #{fc1_large_forward.1} parent=0 // pred_fallthru
    _
  // Predicated region
  $region22: #{fc1_large_forward.1} parent=0 // pred_check
    _
  $region23: #{fc1_large_forward.1} parent=0 // pred_check_branch
    %25 = sbr.rel (0) target = $region25
  $region24: #{fc1_large_forward.1} parent=0 // pred_region
    _
  $region25: #{fc1_large_forward.1} parent=0 // pred_fallthru
    _
  // Predicated region
  $region26: #{fc1_large_forward.1} parent=0 // pred_check
    _
  $region27: #{fc1_large_forward.1} parent=0 // pred_check_branch
    %27 = sbr.rel (0) target = $region29
  $region28: #{fc1_large_forward.1} parent=0 // pred_region
    _
  $region29: #{fc1_large_forward.1} parent=0 // pred_fallthru
    _
  // Predicated region
  $region30: #{fc1_large_forward.1} parent=0 // pred_check
    _
  $region31: #{fc1_large_forward.1} parent=0 // pred_check_branch
    %29 = sbr.rel (0) target = $region33
  $region32: #{fc1_large_forward.1} parent=0 // pred_region
    _
  $region33: #{fc1_large_forward.1} parent=0 // pred_fallthru
    _
  // Predicated region
  $region34: #{fc1_large_forward.1} parent=0 // pred_check
    _
  $region35: #{fc1_large_forward.1} parent=0 // pred_check_branch
    %31 = sbr.rel (0) target = $region37
  $region36: #{fc1_large_forward.1} parent=0 // pred_region
    _
  $region37: #{fc1_large_forward.1} parent=0 // pred_fallthru
    _
  %v33 = vld [vmem:[%s0] sm:$0xff]
  %v34 = vld [vmem:[%s0 + $0x8] sm:$0xff]
  %v35 = vld [vmem:[%s0 + $0x10] sm:$0xff]
  %v36 = vld [vmem:[%s0 + $0x18] sm:$0xff]
  %v37 = vld [vmem:[%s0 + $0x20] sm:$0xff]
  %v38 = vld [vmem:[%s0 + $0x28] sm:$0xff]
  %v39 = vld [vmem:[%s0 + $0x30] sm:$0xff]
  %v40 = vld [vmem:[%s0 + $0x38] sm:$0xff]
  %v41 = vld [vmem:[%s0 + $0x40] sm:$0xff]
  %v42 = vld [vmem:[%s0 + $0x48] sm:$0xff]
  %v43 = vld [vmem:[%s0 + $0x50] sm:$0xff]
  %v44 = vld [vmem:[%s0 + $0x58] sm:$0xff]
  %v45 = vld [vmem:[%s0 + $0x60] sm:$0xff]
  %v46 = vld [vmem:[%s0 + $0x68] sm:$0xff]
  %v47 = vld [vmem:[%s0 + $0x70] sm:$0xff]
  %v48 = vld [vmem:[%s0 + $0x78] sm:$0xff]
  %v49 = vld [vmem:[%s0 + $0x80] sm:$0xff]
  %v50 = vld [vmem:[%s0 + $0x88] sm:$0xff]
  %v51 = vld [vmem:[%s0 + $0x90] sm:$0xff]
  %v52 = vld [vmem:[%s0 + $0x98] sm:$0xff]
  %v53 = vld [vmem:[%s0 + $0xa0] sm:$0xff]
  %v54 = vld [vmem:[%s0 + $0xa8] sm:$0xff]
  %v55 = vld [vmem:[%s0 + $0xb0] sm:$0xff]
  %v56 = vld [vmem:[%s0 + $0xb8] sm:$0xff]
  %v57 = vld [vmem:[%s0 + $0xc0] sm:$0xff]
  %v58 = vld [vmem:[%s0 + $0xc8] sm:$0xff]
  %v59 = vld [vmem:[%s0 + $0xd0] sm:$0xff]
  %v60 = vld [vmem:[%s0 + $0xd8] sm:$0xff]
  %v61 = vld [vmem:[%s0 + $0xe0] sm:$0xff]
  %v62 = vld [vmem:[%s0 + $0xe8] sm:$0xff]
  %v63 = vld [vmem:[%s0 + $0xf0] sm:$0xff]
  %v64 = vld [vmem:[%s0 + $0xf8] sm:$0xff]
  %v65 = vpack.c.bf16 %v34, %v33
  %v66 = vpack.c.bf16 %v36, %v35
  %v67 = vpack.c.bf16 %v38, %v37
  %v68 = vpack.c.bf16 %v40, %v39
  %v69 = vpack.c.bf16 %v42, %v41
  %v70 = vpack.c.bf16 %v44, %v43
  %v71 = vpack.c.bf16 %v46, %v45
  %v72 = vpack.c.bf16 %v48, %v47
  %v73 = vpack.c.bf16 %v50, %v49
  %v74 = vpack.c.bf16 %v52, %v51
  %v75 = vpack.c.bf16 %v54, %v53
  %v76 = vpack.c.bf16 %v56, %v55
  %v77 = vpack.c.bf16 %v58, %v57
  %v78 = vpack.c.bf16 %v60, %v59
  %v79 = vpack.c.bf16 %v62, %v61
  %v80 = vpack.c.bf16 %v64, %v63
  %v81 = vld [vmem:[%s1] sm:$0xff]
  %v82 = vld [vmem:[%s1 + $0x8] sm:$0xff]
  %v83 = vld [vmem:[%s1 + $0x10] sm:$0xff]
  %v84 = vld [vmem:[%s1 + $0x18] sm:$0xf]
  %v85 = vld [vmem:[%s1 + $0x1c] sm:$0x11]
  %v86 = vld [vmem:[%s1 + $0x24] sm:$0x11]
  %v87 = vld [vmem:[%s1 + $0x2c] sm:$0x11]
  %v88 = vld [vmem:[%s1 + $0x34] sm:$0x1]
  %v89 = vld [vmem:[%s2] sm:$0xff]
  %v91 = vlaneseq
  %v92 = vshrl.u32 %v91, 7
  %v93 = vsub.s32 0, %v92
  %v94 = vrot.slane %v89, %v93
  %v95 = vlaneseq
  %v96 = vshrl.u32 %v95, 7
  %v97 = vsub.s32 1, %v96
  %v98 = vrot.slane %v89, %v97
  %v99 = vlaneseq
  %v100 = vshrl.u32 %v99, 7
  %v101 = vsub.s32 2, %v100
  %v102 = vrot.slane %v89, %v101
  %v103 = vlaneseq
  %v104 = vshrl.u32 %v103, 7
  %v105 = vsub.s32 3, %v104
  %v106 = vrot.slane %v89, %v105
  %v107 = vlaneseq
  %v108 = vshrl.u32 %v107, 7
  %v109 = vsub.s32 4, %v108
  %v110 = vrot.slane %v89, %v109
  %v111 = vlaneseq
  %v112 = vshrl.u32 %v111, 7
  %v113 = vsub.s32 5, %v112
  %v114 = vrot.slane %v89, %v113
  %v115 = vlaneseq
  %v116 = vshrl.u32 %v115, 7
  %v117 = vsub.s32 6, %v116
  %v118 = vrot.slane %v89, %v117
  %v134 = vunpack.c.l.b16 %v81
  %v135 = vunpack.c.h.b16 %v81
  %v136 = vunpack.c.l.b16 %v82
  %v137 = vunpack.c.h.b16 %v82
  %v138 = vunpack.c.l.b16 %v83
  %v139 = vunpack.c.h.b16 %v83
  %v140 = vunpack.c.l.b16 %v84
  %v141 = vunpack.c.l.b16 %v85
  %v142 = vunpack.c.h.b16 %v85
  %v143 = vunpack.c.l.b16 %v86
  %v144 = vunpack.c.h.b16 %v86
  %v145 = vunpack.c.l.b16 %v87
  %v146 = vunpack.c.h.b16 %v87
  %v147 = vunpack.c.l.b16 %v88
  %v148 = vpack.c.b16 %v141, %v134
  %v149 = vpack.c.b16 %v142, %v135
  %v150 = vpack.c.b16 %v143, %v136
  %v151 = vpack.c.b16 %v144, %v137
  %v152 = vpack.c.b16 %v145, %v138
  %v153 = vpack.c.b16 %v146, %v139
  %v154 = vpack.c.b16 %v147, %v140
  %vm155 = vcmask 72704
  %v157 = vsel %vm155, %v65, 0
  %v160 = vsel %vm155, %v66, 0
  %v163 = vsel %vm155, %v67, 0
  %v166 = vsel %vm155, %v68, 0
  %v169 = vsel %vm155, %v69, 0
  %v172 = vsel %vm155, %v70, 0
  %v175 = vsel %vm155, %v71, 0
  %v178 = vsel %vm155, %v72, 0
  %v181 = vsel %vm155, %v73, 0
  %v184 = vsel %vm155, %v74, 0
  %v187 = vsel %vm155, %v75, 0
  %v190 = vsel %vm155, %v76, 0
  %v193 = vsel %vm155, %v77, 0
  %v196 = vsel %vm155, %v78, 0
  %v199 = vsel %vm155, %v79, 0
  %v202 = vsel %vm155, %v80, 0
  %vm204 = vcmask 1043456
  %vm205 = vcmask 1044480
  %v206 = vsel %vm204, 4294967295, 65535
  %v207 = vsel %vm205, %v206, 0
  %v209 = vand.u32 %v148, %v207
  %v212 = vand.u32 %v149, %v207
  %v215 = vand.u32 %v150, %v207
  %v218 = vand.u32 %v151, %v207
  %v221 = vand.u32 %v152, %v207
  %v224 = vand.u32 %v153, %v207
  %v227 = vand.u32 %v154, %v207
  %229 = vmatprep.subr.bf16.mxu0 0
  %230 = vmatpush1.bf16.msra.mxu0 0
  %231 = vmatprep.subr.bf16.mxu0 0
  %232 = vmatpush1.bf16.msra.mxu0 0
  %233 = vmatprep.subr.bf16.mxu0 0
  %234 = vmatpush1.bf16.msra.mxu0 0
  %235 = vmatprep.subr.bf16.mxu0 0
  %236 = vmatpush1.bf16.msra.mxu0 0
  %237 = vmatprep.subr.bf16.mxu0 0
  %238 = vmatpush1.bf16.msra.mxu0 0
  %239 = vmatprep.subr.bf16.mxu0 0
  %240 = vmatpush1.bf16.msra.mxu0 0
  %241 = vmatprep.subr.bf16.mxu0 0
  %242 = vmatpush1.bf16.msra.mxu0 0
  %243 = vmatprep.subr.bf16.mxu0 %v212
  %244 = vmatpush1.bf16.msra.mxu0 %v209
  %245 = vmatprep.subr.bf16.mxu0 0
  %246 = vmatpush2.bf16.msra.mxu0 0
  %247 = vmatprep.subr.bf16.mxu0 0
  %248 = vmatpush2.bf16.msra.mxu0 0
  %249 = vmatprep.subr.bf16.mxu0 0
  %250 = vmatpush2.bf16.msra.mxu0 0
  %251 = vmatprep.subr.bf16.mxu0 0
  %252 = vmatpush2.bf16.msra.mxu0 0
  %253 = vmatprep.subr.bf16.mxu0 0
  %254 = vmatpush2.bf16.msra.mxu0 0
  %255 = vmatprep.subr.bf16.mxu0 0
  %256 = vmatpush2.bf16.msra.mxu0 0
  %257 = vmatprep.subr.bf16.mxu0 0
  %258 = vmatpush2.bf16.msra.mxu0 0
  %259 = vmatprep.subr.bf16.mxu0 0
  %260 = vmatpush2.bf16.msra.mxu0 0
  %261 = vmatprep.mubr.bf16.mxu0 0
  %262 = vmatmul.mubr.bf16.gmra.mxu0 %v157
  %v263 = vpop.f32.mrf.mxu0
  %v264 = vadd.f32 %v94, %v263
  %v265 = vpop.f32.mrf.mxu0
  %v266 = vadd.f32 %v98, %v265
  %v267 = vpop.f32.mrf.mxu0
  %v268 = vadd.f32 %v94, %v267
  %v269 = vpop.f32.mrf.mxu0
  %v270 = vadd.f32 %v98, %v269
  %271 = vmatprep.mubr.bf16.mxu0 0
  %272 = vmatmul.mubr.bf16.gmra.mxu0 %v160
  %v273 = vpop.f32.mrf.mxu0
  %v274 = vadd.f32 %v94, %v273
  %v275 = vpop.f32.mrf.mxu0
  %v276 = vadd.f32 %v98, %v275
  %v277 = vpop.f32.mrf.mxu0
  %v278 = vadd.f32 %v94, %v277
  %v279 = vpop.f32.mrf.mxu0
  %v280 = vadd.f32 %v98, %v279
  %281 = vmatprep.mubr.bf16.mxu0 0
  %282 = vmatmul.mubr.bf16.gmra.mxu0 %v163
  %v283 = vpop.f32.mrf.mxu0
  %v284 = vadd.f32 %v94, %v283
  %v285 = vpop.f32.mrf.mxu0
  %v286 = vadd.f32 %v98, %v285
  %v287 = vpop.f32.mrf.mxu0
  %v288 = vadd.f32 %v94, %v287
  %v289 = vpop.f32.mrf.mxu0
  %v290 = vadd.f32 %v98, %v289
  %291 = vmatprep.mubr.bf16.mxu0 0
  %292 = vmatmul.mubr.bf16.gmra.mxu0 %v166
  %v293 = vpop.f32.mrf.mxu0
  %v294 = vadd.f32 %v94, %v293
  %v295 = vpop.f32.mrf.mxu0
  %v296 = vadd.f32 %v98, %v295
  %v297 = vpop.f32.mrf.mxu0
  %v298 = vadd.f32 %v94, %v297
  %v299 = vpop.f32.mrf.mxu0
  %v300 = vadd.f32 %v98, %v299
  %301 = vmatprep.mubr.bf16.mxu0 0
  %302 = vmatmul.mubr.bf16.gmra.mxu0 %v169
  %v303 = vpop.f32.mrf.mxu0
  %v304 = vadd.f32 %v94, %v303
  %v305 = vpop.f32.mrf.mxu0
  %v306 = vadd.f32 %v98, %v305
  %v307 = vpop.f32.mrf.mxu0
  %v308 = vadd.f32 %v94, %v307
  %v309 = vpop.f32.mrf.mxu0
  %v310 = vadd.f32 %v98, %v309
  %311 = vmatprep.mubr.bf16.mxu0 0
  %312 = vmatmul.mubr.bf16.gmra.mxu0 %v172
  %v313 = vpop.f32.mrf.mxu0
  %v314 = vadd.f32 %v94, %v313
  %v315 = vpop.f32.mrf.mxu0
  %v316 = vadd.f32 %v98, %v315
  %v317 = vpop.f32.mrf.mxu0
  %v318 = vadd.f32 %v94, %v317
  %v319 = vpop.f32.mrf.mxu0
  %v320 = vadd.f32 %v98, %v319
  %321 = vmatprep.mubr.bf16.mxu0 0
  %322 = vmatmul.mubr.bf16.gmra.mxu0 %v175
  %v323 = vpop.f32.mrf.mxu0
  %v324 = vadd.f32 %v94, %v323
  %v325 = vpop.f32.mrf.mxu0
  %v326 = vadd.f32 %v98, %v325
  %v327 = vpop.f32.mrf.mxu0
  %v328 = vadd.f32 %v94, %v327
  %v329 = vpop.f32.mrf.mxu0
  %v330 = vadd.f32 %v98, %v329
  %331 = vmatprep.mubr.bf16.mxu0 0
  %332 = vmatmul.mubr.bf16.gmra.mxu0 %v178
  %v333 = vpop.f32.mrf.mxu0
  %v334 = vadd.f32 %v94, %v333
  %v335 = vpop.f32.mrf.mxu0
  %v336 = vadd.f32 %v98, %v335
  %v337 = vpop.f32.mrf.mxu0
  %v338 = vadd.f32 %v94, %v337
  %v339 = vpop.f32.mrf.mxu0
  %v340 = vadd.f32 %v98, %v339
  %341 = vmatprep.mubr.bf16.mxu0 0
  %342 = vmatmul.mubr.bf16.gmra.mxu0 %v181
  %v343 = vpop.f32.mrf.mxu0
  %v344 = vadd.f32 %v94, %v343
  %v345 = vpop.f32.mrf.mxu0
  %v346 = vadd.f32 %v98, %v345
  %v347 = vpop.f32.mrf.mxu0
  %v348 = vadd.f32 %v94, %v347
  %v349 = vpop.f32.mrf.mxu0
  %v350 = vadd.f32 %v98, %v349
  %351 = vmatprep.mubr.bf16.mxu0 0
  %352 = vmatmul.mubr.bf16.gmra.mxu0 %v184
  %v353 = vpop.f32.mrf.mxu0
  %v354 = vadd.f32 %v94, %v353
  %v355 = vpop.f32.mrf.mxu0
  %v356 = vadd.f32 %v98, %v355
  %v357 = vpop.f32.mrf.mxu0
  %v358 = vadd.f32 %v94, %v357
  %v359 = vpop.f32.mrf.mxu0
  %v360 = vadd.f32 %v98, %v359
  %361 = vmatprep.mubr.bf16.mxu0 0
  %362 = vmatmul.mubr.bf16.gmra.mxu0 %v187
  %v363 = vpop.f32.mrf.mxu0
  %v364 = vadd.f32 %v94, %v363
  %v365 = vpop.f32.mrf.mxu0
  %v366 = vadd.f32 %v98, %v365
  %v367 = vpop.f32.mrf.mxu0
  %v368 = vadd.f32 %v94, %v367
  %v369 = vpop.f32.mrf.mxu0
  %v370 = vadd.f32 %v98, %v369
  %371 = vmatprep.mubr.bf16.mxu0 0
  %372 = vmatmul.mubr.bf16.gmra.mxu0 %v190
  %v373 = vpop.f32.mrf.mxu0
  %v374 = vadd.f32 %v94, %v373
  %v375 = vpop.f32.mrf.mxu0
  %v376 = vadd.f32 %v98, %v375
  %v377 = vpop.f32.mrf.mxu0
  %v378 = vadd.f32 %v94, %v377
  %v379 = vpop.f32.mrf.mxu0
  %v380 = vadd.f32 %v98, %v379
  %381 = vmatprep.mubr.bf16.mxu0 0
  %382 = vmatmul.mubr.bf16.gmra.mxu0 %v193
  %v383 = vpop.f32.mrf.mxu0
  %v384 = vadd.f32 %v94, %v383
  %v385 = vpop.f32.mrf.mxu0
  %v386 = vadd.f32 %v98, %v385
  %v387 = vpop.f32.mrf.mxu0
  %v388 = vadd.f32 %v94, %v387
  %v389 = vpop.f32.mrf.mxu0
  %v390 = vadd.f32 %v98, %v389
  %391 = vmatprep.mubr.bf16.mxu0 0
  %392 = vmatmul.mubr.bf16.gmra.mxu0 %v196
  %v393 = vpop.f32.mrf.mxu0
  %v394 = vadd.f32 %v94, %v393
  %v395 = vpop.f32.mrf.mxu0
  %v396 = vadd.f32 %v98, %v395
  %v397 = vpop.f32.mrf.mxu0
  %v398 = vadd.f32 %v94, %v397
  %v399 = vpop.f32.mrf.mxu0
  %v400 = vadd.f32 %v98, %v399
  %401 = vmatprep.mubr.bf16.mxu0 0
  %402 = vmatmul.mubr.bf16.gmra.mxu0 %v199
  %v403 = vpop.f32.mrf.mxu0
  %v404 = vadd.f32 %v94, %v403
  %v405 = vpop.f32.mrf.mxu0
  %v406 = vadd.f32 %v98, %v405
  %v407 = vpop.f32.mrf.mxu0
  %v408 = vadd.f32 %v94, %v407
  %v409 = vpop.f32.mrf.mxu0
  %v410 = vadd.f32 %v98, %v409
  %411 = vmatprep.mubr.bf16.mxu0 0
  %412 = vmatmul.mubr.bf16.gmra.mxu0 %v202
  %v413 = vpop.f32.mrf.mxu0
  %v414 = vadd.f32 %v94, %v413
  %v415 = vpop.f32.mrf.mxu0
  %v416 = vadd.f32 %v98, %v415
  %v417 = vpop.f32.mrf.mxu0
  %v418 = vadd.f32 %v94, %v417
  %v419 = vpop.f32.mrf.mxu0
  %v420 = vadd.f32 %v98, %v419
  %421 = vdwg.mxu0
  %422 = vmatprep.subr.bf16.mxu0 0
  %423 = vmatpush1.bf16.msra.mxu0 0
  %424 = vmatprep.subr.bf16.mxu0 0
  %425 = vmatpush1.bf16.msra.mxu0 0
  %426 = vmatprep.subr.bf16.mxu0 0
  %427 = vmatpush1.bf16.msra.mxu0 0
  %428 = vmatprep.subr.bf16.mxu0 0
  %429 = vmatpush1.bf16.msra.mxu0 0
  %430 = vmatprep.subr.bf16.mxu0 0
  %431 = vmatpush1.bf16.msra.mxu0 0
  %432 = vmatprep.subr.bf16.mxu0 0
  %433 = vmatpush1.bf16.msra.mxu0 0
  %434 = vmatprep.subr.bf16.mxu0 0
  %435 = vmatpush1.bf16.msra.mxu0 0
  %436 = vmatprep.subr.bf16.mxu0 %v218
  %437 = vmatpush1.bf16.msra.mxu0 %v215
  %438 = vmatprep.subr.bf16.mxu0 0
  %439 = vmatpush2.bf16.msra.mxu0 0
  %440 = vmatprep.subr.bf16.mxu0 0
  %441 = vmatpush2.bf16.msra.mxu0 0
  %442 = vmatprep.subr.bf16.mxu0 0
  %443 = vmatpush2.bf16.msra.mxu0 0
  %444 = vmatprep.subr.bf16.mxu0 0
  %445 = vmatpush2.bf16.msra.mxu0 0
  %446 = vmatprep.subr.bf16.mxu0 0
  %447 = vmatpush2.bf16.msra.mxu0 0
  %448 = vmatprep.subr.bf16.mxu0 0
  %449 = vmatpush2.bf16.msra.mxu0 0
  %450 = vmatprep.subr.bf16.mxu0 0
  %451 = vmatpush2.bf16.msra.mxu0 0
  %452 = vmatprep.subr.bf16.mxu0 0
  %453 = vmatpush2.bf16.msra.mxu0 0
  %454 = vmatprep.mubr.bf16.mxu0 0
  %455 = vmatmul.mubr.bf16.gmra.mxu0 %v157
  %v456 = vpop.f32.mrf.mxu0
  %v457 = vadd.f32 %v102, %v456
  %v458 = vpop.f32.mrf.mxu0
  %v459 = vadd.f32 %v106, %v458
  %v460 = vpop.f32.mrf.mxu0
  %v461 = vadd.f32 %v102, %v460
  %v462 = vpop.f32.mrf.mxu0
  %v463 = vadd.f32 %v106, %v462
  %464 = vmatprep.mubr.bf16.mxu0 0
  %465 = vmatmul.mubr.bf16.gmra.mxu0 %v160
  %v466 = vpop.f32.mrf.mxu0
  %v467 = vadd.f32 %v102, %v466
  %v468 = vpop.f32.mrf.mxu0
  %v469 = vadd.f32 %v106, %v468
  %v470 = vpop.f32.mrf.mxu0
  %v471 = vadd.f32 %v102, %v470
  %v472 = vpop.f32.mrf.mxu0
  %v473 = vadd.f32 %v106, %v472
  %474 = vmatprep.mubr.bf16.mxu0 0
  %475 = vmatmul.mubr.bf16.gmra.mxu0 %v163
  %v476 = vpop.f32.mrf.mxu0
  %v477 = vadd.f32 %v102, %v476
  %v478 = vpop.f32.mrf.mxu0
  %v479 = vadd.f32 %v106, %v478
  %v480 = vpop.f32.mrf.mxu0
  %v481 = vadd.f32 %v102, %v480
  %v482 = vpop.f32.mrf.mxu0
  %v483 = vadd.f32 %v106, %v482
  %484 = vmatprep.mubr.bf16.mxu0 0
  %485 = vmatmul.mubr.bf16.gmra.mxu0 %v166
  %v486 = vpop.f32.mrf.mxu0
  %v487 = vadd.f32 %v102, %v486
  %v488 = vpop.f32.mrf.mxu0
  %v489 = vadd.f32 %v106, %v488
  %v490 = vpop.f32.mrf.mxu0
  %v491 = vadd.f32 %v102, %v490
  %v492 = vpop.f32.mrf.mxu0
  %v493 = vadd.f32 %v106, %v492
  %494 = vmatprep.mubr.bf16.mxu0 0
  %495 = vmatmul.mubr.bf16.gmra.mxu0 %v169
  %v496 = vpop.f32.mrf.mxu0
  %v497 = vadd.f32 %v102, %v496
  %v498 = vpop.f32.mrf.mxu0
  %v499 = vadd.f32 %v106, %v498
  %v500 = vpop.f32.mrf.mxu0
  %v501 = vadd.f32 %v102, %v500
  %v502 = vpop.f32.mrf.mxu0
  %v503 = vadd.f32 %v106, %v502
  %504 = vmatprep.mubr.bf16.mxu0 0
  %505 = vmatmul.mubr.bf16.gmra.mxu0 %v172
  %v506 = vpop.f32.mrf.mxu0
  %v507 = vadd.f32 %v102, %v506
  %v508 = vpop.f32.mrf.mxu0
  %v509 = vadd.f32 %v106, %v508
  %v510 = vpop.f32.mrf.mxu0
  %v511 = vadd.f32 %v102, %v510
  %v512 = vpop.f32.mrf.mxu0
  %v513 = vadd.f32 %v106, %v512
  %514 = vmatprep.mubr.bf16.mxu0 0
  %515 = vmatmul.mubr.bf16.gmra.mxu0 %v175
  %v516 = vpop.f32.mrf.mxu0
  %v517 = vadd.f32 %v102, %v516
  %v518 = vpop.f32.mrf.mxu0
  %v519 = vadd.f32 %v106, %v518
  %v520 = vpop.f32.mrf.mxu0
  %v521 = vadd.f32 %v102, %v520
  %v522 = vpop.f32.mrf.mxu0
  %v523 = vadd.f32 %v106, %v522
  %524 = vmatprep.mubr.bf16.mxu0 0
  %525 = vmatmul.mubr.bf16.gmra.mxu0 %v178
  %v526 = vpop.f32.mrf.mxu0
  %v527 = vadd.f32 %v102, %v526
  %v528 = vpop.f32.mrf.mxu0
  %v529 = vadd.f32 %v106, %v528
  %v530 = vpop.f32.mrf.mxu0
  %v531 = vadd.f32 %v102, %v530
  %v532 = vpop.f32.mrf.mxu0
  %v533 = vadd.f32 %v106, %v532
  %534 = vmatprep.mubr.bf16.mxu0 0
  %535 = vmatmul.mubr.bf16.gmra.mxu0 %v181
  %v536 = vpop.f32.mrf.mxu0
  %v537 = vadd.f32 %v102, %v536
  %v538 = vpop.f32.mrf.mxu0
  %v539 = vadd.f32 %v106, %v538
  %v540 = vpop.f32.mrf.mxu0
  %v541 = vadd.f32 %v102, %v540
  %v542 = vpop.f32.mrf.mxu0
  %v543 = vadd.f32 %v106, %v542
  %544 = vmatprep.mubr.bf16.mxu0 0
  %545 = vmatmul.mubr.bf16.gmra.mxu0 %v184
  %v546 = vpop.f32.mrf.mxu0
  %v547 = vadd.f32 %v102, %v546
  %v548 = vpop.f32.mrf.mxu0
  %v549 = vadd.f32 %v106, %v548
  %v550 = vpop.f32.mrf.mxu0
  %v551 = vadd.f32 %v102, %v550
  %v552 = vpop.f32.mrf.mxu0
  %v553 = vadd.f32 %v106, %v552
  %554 = vmatprep.mubr.bf16.mxu0 0
  %555 = vmatmul.mubr.bf16.gmra.mxu0 %v187
  %v556 = vpop.f32.mrf.mxu0
  %v557 = vadd.f32 %v102, %v556
  %v558 = vpop.f32.mrf.mxu0
  %v559 = vadd.f32 %v106, %v558
  %v560 = vpop.f32.mrf.mxu0
  %v561 = vadd.f32 %v102, %v560
  %v562 = vpop.f32.mrf.mxu0
  %v563 = vadd.f32 %v106, %v562
  %564 = vmatprep.mubr.bf16.mxu0 0
  %565 = vmatmul.mubr.bf16.gmra.mxu0 %v190
  %v566 = vpop.f32.mrf.mxu0
  %v567 = vadd.f32 %v102, %v566
  %v568 = vpop.f32.mrf.mxu0
  %v569 = vadd.f32 %v106, %v568
  %v570 = vpop.f32.mrf.mxu0
  %v571 = vadd.f32 %v102, %v570
  %v572 = vpop.f32.mrf.mxu0
  %v573 = vadd.f32 %v106, %v572
  %574 = vmatprep.mubr.bf16.mxu0 0
  %575 = vmatmul.mubr.bf16.gmra.mxu0 %v193
  %v576 = vpop.f32.mrf.mxu0
  %v577 = vadd.f32 %v102, %v576
  %v578 = vpop.f32.mrf.mxu0
  %v579 = vadd.f32 %v106, %v578
  %v580 = vpop.f32.mrf.mxu0
  %v581 = vadd.f32 %v102, %v580
  %v582 = vpop.f32.mrf.mxu0
  %v583 = vadd.f32 %v106, %v582
  %584 = vmatprep.mubr.bf16.mxu0 0
  %585 = vmatmul.mubr.bf16.gmra.mxu0 %v196
  %v586 = vpop.f32.mrf.mxu0
  %v587 = vadd.f32 %v102, %v586
  %v588 = vpop.f32.mrf.mxu0
  %v589 = vadd.f32 %v106, %v588
  %v590 = vpop.f32.mrf.mxu0
  %v591 = vadd.f32 %v102, %v590
  %v592 = vpop.f32.mrf.mxu0
  %v593 = vadd.f32 %v106, %v592
  %594 = vmatprep.mubr.bf16.mxu0 0
  %595 = vmatmul.mubr.bf16.gmra.mxu0 %v199
  %v596 = vpop.f32.mrf.mxu0
  %v597 = vadd.f32 %v102, %v596
  %v598 = vpop.f32.mrf.mxu0
  %v599 = vadd.f32 %v106, %v598
  %v600 = vpop.f32.mrf.mxu0
  %v601 = vadd.f32 %v102, %v600
  %v602 = vpop.f32.mrf.mxu0
  %v603 = vadd.f32 %v106, %v602
  %604 = vmatprep.mubr.bf16.mxu0 0
  %605 = vmatmul.mubr.bf16.gmra.mxu0 %v202
  %v606 = vpop.f32.mrf.mxu0
  %v607 = vadd.f32 %v102, %v606
  %v608 = vpop.f32.mrf.mxu0
  %v609 = vadd.f32 %v106, %v608
  %v610 = vpop.f32.mrf.mxu0
  %v611 = vadd.f32 %v102, %v610
  %v612 = vpop.f32.mrf.mxu0
  %v613 = vadd.f32 %v106, %v612
  %614 = vdwg.mxu0
  %615 = vmatprep.subr.bf16.mxu0 0
  %616 = vmatpush1.bf16.msra.mxu0 0
  %617 = vmatprep.subr.bf16.mxu0 0
  %618 = vmatpush1.bf16.msra.mxu0 0
  %619 = vmatprep.subr.bf16.mxu0 0
  %620 = vmatpush1.bf16.msra.mxu0 0
  %621 = vmatprep.subr.bf16.mxu0 0
  %622 = vmatpush1.bf16.msra.mxu0 0
  %623 = vmatprep.subr.bf16.mxu0 0
  %624 = vmatpush1.bf16.msra.mxu0 0
  %625 = vmatprep.subr.bf16.mxu0 0
  %626 = vmatpush1.bf16.msra.mxu0 0
  %627 = vmatprep.subr.bf16.mxu0 0
  %628 = vmatpush1.bf16.msra.mxu0 0
  %629 = vmatprep.subr.bf16.mxu0 %v224
  %630 = vmatpush1.bf16.msra.mxu0 %v221
  %631 = vmatprep.subr.bf16.mxu0 0
  %632 = vmatpush2.bf16.msra.mxu0 0
  %633 = vmatprep.subr.bf16.mxu0 0
  %634 = vmatpush2.bf16.msra.mxu0 0
  %635 = vmatprep.subr.bf16.mxu0 0
  %636 = vmatpush2.bf16.msra.mxu0 0
  %637 = vmatprep.subr.bf16.mxu0 0
  %638 = vmatpush2.bf16.msra.mxu0 0
  %639 = vmatprep.subr.bf16.mxu0 0
  %640 = vmatpush2.bf16.msra.mxu0 0
  %641 = vmatprep.subr.bf16.mxu0 0
  %642 = vmatpush2.bf16.msra.mxu0 0
  %643 = vmatprep.subr.bf16.mxu0 0
  %644 = vmatpush2.bf16.msra.mxu0 0
  %645 = vmatprep.subr.bf16.mxu0 0
  %646 = vmatpush2.bf16.msra.mxu0 0
  %647 = vmatprep.mubr.bf16.mxu0 0
  %648 = vmatmul.mubr.bf16.gmra.mxu0 %v157
  %v649 = vpop.f32.mrf.mxu0
  %v650 = vadd.f32 %v110, %v649
  %v651 = vpop.f32.mrf.mxu0
  %v652 = vadd.f32 %v114, %v651
  %v653 = vpop.f32.mrf.mxu0
  %v654 = vadd.f32 %v110, %v653
  %v655 = vpop.f32.mrf.mxu0
  %v656 = vadd.f32 %v114, %v655
  %657 = vmatprep.mubr.bf16.mxu0 0
  %658 = vmatmul.mubr.bf16.gmra.mxu0 %v160
  %v659 = vpop.f32.mrf.mxu0
  %v660 = vadd.f32 %v110, %v659
  %v661 = vpop.f32.mrf.mxu0
  %v662 = vadd.f32 %v114, %v661
  %v663 = vpop.f32.mrf.mxu0
  %v664 = vadd.f32 %v110, %v663
  %v665 = vpop.f32.mrf.mxu0
  %v666 = vadd.f32 %v114, %v665
  %667 = vmatprep.mubr.bf16.mxu0 0
  %668 = vmatmul.mubr.bf16.gmra.mxu0 %v163
  %v669 = vpop.f32.mrf.mxu0
  %v670 = vadd.f32 %v110, %v669
  %v671 = vpop.f32.mrf.mxu0
  %v672 = vadd.f32 %v114, %v671
  %v673 = vpop.f32.mrf.mxu0
  %v674 = vadd.f32 %v110, %v673
  %v675 = vpop.f32.mrf.mxu0
  %v676 = vadd.f32 %v114, %v675
  %677 = vmatprep.mubr.bf16.mxu0 0
  %678 = vmatmul.mubr.bf16.gmra.mxu0 %v166
  %v679 = vpop.f32.mrf.mxu0
  %v680 = vadd.f32 %v110, %v679
  %v681 = vpop.f32.mrf.mxu0
  %v682 = vadd.f32 %v114, %v681
  %v683 = vpop.f32.mrf.mxu0
  %v684 = vadd.f32 %v110, %v683
  %v685 = vpop.f32.mrf.mxu0
  %v686 = vadd.f32 %v114, %v685
  %687 = vmatprep.mubr.bf16.mxu0 0
  %688 = vmatmul.mubr.bf16.gmra.mxu0 %v169
  %v689 = vpop.f32.mrf.mxu0
  %v690 = vadd.f32 %v110, %v689
  %v691 = vpop.f32.mrf.mxu0
  %v692 = vadd.f32 %v114, %v691
  %v693 = vpop.f32.mrf.mxu0
  %v694 = vadd.f32 %v110, %v693
  %v695 = vpop.f32.mrf.mxu0
  %v696 = vadd.f32 %v114, %v695
  %697 = vmatprep.mubr.bf16.mxu0 0
  %698 = vmatmul.mubr.bf16.gmra.mxu0 %v172
  %v699 = vpop.f32.mrf.mxu0
  %v700 = vadd.f32 %v110, %v699
  %v701 = vpop.f32.mrf.mxu0
  %v702 = vadd.f32 %v114, %v701
  %v703 = vpop.f32.mrf.mxu0
  %v704 = vadd.f32 %v110, %v703
  %v705 = vpop.f32.mrf.mxu0
  %v706 = vadd.f32 %v114, %v705
  %707 = vmatprep.mubr.bf16.mxu0 0
  %708 = vmatmul.mubr.bf16.gmra.mxu0 %v175
  %v709 = vpop.f32.mrf.mxu0
  %v710 = vadd.f32 %v110, %v709
  %v711 = vpop.f32.mrf.mxu0
  %v712 = vadd.f32 %v114, %v711
  %v713 = vpop.f32.mrf.mxu0
  %v714 = vadd.f32 %v110, %v713
  %v715 = vpop.f32.mrf.mxu0
  %v716 = vadd.f32 %v114, %v715
  %717 = vmatprep.mubr.bf16.mxu0 0
  %718 = vmatmul.mubr.bf16.gmra.mxu0 %v178
  %v719 = vpop.f32.mrf.mxu0
  %v720 = vadd.f32 %v110, %v719
  %v721 = vpop.f32.mrf.mxu0
  %v722 = vadd.f32 %v114, %v721
  %v723 = vpop.f32.mrf.mxu0
  %v724 = vadd.f32 %v110, %v723
  %v725 = vpop.f32.mrf.mxu0
  %v726 = vadd.f32 %v114, %v725
  %727 = vmatprep.mubr.bf16.mxu0 0
  %728 = vmatmul.mubr.bf16.gmra.mxu0 %v181
  %v729 = vpop.f32.mrf.mxu0
  %v730 = vadd.f32 %v110, %v729
  %v731 = vpop.f32.mrf.mxu0
  %v732 = vadd.f32 %v114, %v731
  %v733 = vpop.f32.mrf.mxu0
  %v734 = vadd.f32 %v110, %v733
  %v735 = vpop.f32.mrf.mxu0
  %v736 = vadd.f32 %v114, %v735
  %737 = vmatprep.mubr.bf16.mxu0 0
  %738 = vmatmul.mubr.bf16.gmra.mxu0 %v184
  %v739 = vpop.f32.mrf.mxu0
  %v740 = vadd.f32 %v110, %v739
  %v741 = vpop.f32.mrf.mxu0
  %v742 = vadd.f32 %v114, %v741
  %v743 = vpop.f32.mrf.mxu0
  %v744 = vadd.f32 %v110, %v743
  %v745 = vpop.f32.mrf.mxu0
  %v746 = vadd.f32 %v114, %v745
  %747 = vmatprep.mubr.bf16.mxu0 0
  %748 = vmatmul.mubr.bf16.gmra.mxu0 %v187
  %v749 = vpop.f32.mrf.mxu0
  %v750 = vadd.f32 %v110, %v749
  %v751 = vpop.f32.mrf.mxu0
  %v752 = vadd.f32 %v114, %v751
  %v753 = vpop.f32.mrf.mxu0
  %v754 = vadd.f32 %v110, %v753
  %v755 = vpop.f32.mrf.mxu0
  %v756 = vadd.f32 %v114, %v755
  %757 = vmatprep.mubr.bf16.mxu0 0
  %758 = vmatmul.mubr.bf16.gmra.mxu0 %v190
  %v759 = vpop.f32.mrf.mxu0
  %v760 = vadd.f32 %v110, %v759
  %v761 = vpop.f32.mrf.mxu0
  %v762 = vadd.f32 %v114, %v761
  %v763 = vpop.f32.mrf.mxu0
  %v764 = vadd.f32 %v110, %v763
  %v765 = vpop.f32.mrf.mxu0
  %v766 = vadd.f32 %v114, %v765
  %767 = vmatprep.mubr.bf16.mxu0 0
  %768 = vmatmul.mubr.bf16.gmra.mxu0 %v193
  %v769 = vpop.f32.mrf.mxu0
  %v770 = vadd.f32 %v110, %v769
  %v771 = vpop.f32.mrf.mxu0
  %v772 = vadd.f32 %v114, %v771
  %v773 = vpop.f32.mrf.mxu0
  %v774 = vadd.f32 %v110, %v773
  %v775 = vpop.f32.mrf.mxu0
  %v776 = vadd.f32 %v114, %v775
  %777 = vmatprep.mubr.bf16.mxu0 0
  %778 = vmatmul.mubr.bf16.gmra.mxu0 %v196
  %v779 = vpop.f32.mrf.mxu0
  %v780 = vadd.f32 %v110, %v779
  %v781 = vpop.f32.mrf.mxu0
  %v782 = vadd.f32 %v114, %v781
  %v783 = vpop.f32.mrf.mxu0
  %v784 = vadd.f32 %v110, %v783
  %v785 = vpop.f32.mrf.mxu0
  %v786 = vadd.f32 %v114, %v785
  %787 = vmatprep.mubr.bf16.mxu0 0
  %788 = vmatmul.mubr.bf16.gmra.mxu0 %v199
  %v789 = vpop.f32.mrf.mxu0
  %v790 = vadd.f32 %v110, %v789
  %v791 = vpop.f32.mrf.mxu0
  %v792 = vadd.f32 %v114, %v791
  %v793 = vpop.f32.mrf.mxu0
  %v794 = vadd.f32 %v110, %v793
  %v795 = vpop.f32.mrf.mxu0
  %v796 = vadd.f32 %v114, %v795
  %797 = vmatprep.mubr.bf16.mxu0 0
  %798 = vmatmul.mubr.bf16.gmra.mxu0 %v202
  %v799 = vpop.f32.mrf.mxu0
  %v800 = vadd.f32 %v110, %v799
  %v801 = vpop.f32.mrf.mxu0
  %v802 = vadd.f32 %v114, %v801
  %v803 = vpop.f32.mrf.mxu0
  %v804 = vadd.f32 %v110, %v803
  %v805 = vpop.f32.mrf.mxu0
  %v806 = vadd.f32 %v114, %v805
  %807 = vdwg.mxu0
  %808 = vmatprep.subr.bf16.mxu0 0
  %809 = vmatpush1.bf16.msra.mxu0 0
  %810 = vmatprep.subr.bf16.mxu0 0
  %811 = vmatpush1.bf16.msra.mxu0 0
  %812 = vmatprep.subr.bf16.mxu0 0
  %813 = vmatpush1.bf16.msra.mxu0 0
  %814 = vmatprep.subr.bf16.mxu0 0
  %815 = vmatpush1.bf16.msra.mxu0 0
  %816 = vmatprep.subr.bf16.mxu0 0
  %817 = vmatpush1.bf16.msra.mxu0 0
  %818 = vmatprep.subr.bf16.mxu0 0
  %819 = vmatpush1.bf16.msra.mxu0 0
  %820 = vmatprep.subr.bf16.mxu0 0
  %821 = vmatpush1.bf16.msra.mxu0 0
  %822 = vmatprep.subr.bf16.mxu0 0
  %823 = vmatpush1.bf16.msra.mxu0 %v227
  %824 = vmatprep.subr.bf16.mxu0 0
  %825 = vmatpush2.bf16.msra.mxu0 0
  %826 = vmatprep.subr.bf16.mxu0 0
  %827 = vmatpush2.bf16.msra.mxu0 0
  %828 = vmatprep.subr.bf16.mxu0 0
  %829 = vmatpush2.bf16.msra.mxu0 0
  %830 = vmatprep.subr.bf16.mxu0 0
  %831 = vmatpush2.bf16.msra.mxu0 0
  %832 = vmatprep.subr.bf16.mxu0 0
  %833 = vmatpush2.bf16.msra.mxu0 0
  %834 = vmatprep.subr.bf16.mxu0 0
  %835 = vmatpush2.bf16.msra.mxu0 0
  %836 = vmatprep.subr.bf16.mxu0 0
  %837 = vmatpush2.bf16.msra.mxu0 0
  %838 = vmatprep.subr.bf16.mxu0 0
  %839 = vmatpush2.bf16.msra.mxu0 0
  %840 = vmatprep.mubr.bf16.mxu0 0
  %841 = vmatmul.mubr.bf16.gmra.mxu0 %v157
  %v842 = vpop.f32.mrf.mxu0
  %v843 = vadd.f32 %v118, %v842
  %v844 = vpop.f32.mrf.mxu0
  %v845 = vpop.f32.mrf.mxu0
  %v846 = vadd.f32 %v118, %v845
  %v847 = vpop.f32.mrf.mxu0
  %848 = vmatprep.mubr.bf16.mxu0 0
  %849 = vmatmul.mubr.bf16.gmra.mxu0 %v160
  %v850 = vpop.f32.mrf.mxu0
  %v851 = vadd.f32 %v118, %v850
  %v852 = vpop.f32.mrf.mxu0
  %v853 = vpop.f32.mrf.mxu0
  %v854 = vadd.f32 %v118, %v853
  %v855 = vpop.f32.mrf.mxu0
  %856 = vmatprep.mubr.bf16.mxu0 0
  %857 = vmatmul.mubr.bf16.gmra.mxu0 %v163
  %v858 = vpop.f32.mrf.mxu0
  %v859 = vadd.f32 %v118, %v858
  %v860 = vpop.f32.mrf.mxu0
  %v861 = vpop.f32.mrf.mxu0
  %v862 = vadd.f32 %v118, %v861
  %v863 = vpop.f32.mrf.mxu0
  %864 = vmatprep.mubr.bf16.mxu0 0
  %865 = vmatmul.mubr.bf16.gmra.mxu0 %v166
  %v866 = vpop.f32.mrf.mxu0
  %v867 = vadd.f32 %v118, %v866
  %v868 = vpop.f32.mrf.mxu0
  %v869 = vpop.f32.mrf.mxu0
  %v870 = vadd.f32 %v118, %v869
  %v871 = vpop.f32.mrf.mxu0
  %872 = vmatprep.mubr.bf16.mxu0 0
  %873 = vmatmul.mubr.bf16.gmra.mxu0 %v169
  %v874 = vpop.f32.mrf.mxu0
  %v875 = vadd.f32 %v118, %v874
  %v876 = vpop.f32.mrf.mxu0
  %v877 = vpop.f32.mrf.mxu0
  %v878 = vadd.f32 %v118, %v877
  %v879 = vpop.f32.mrf.mxu0
  %880 = vmatprep.mubr.bf16.mxu0 0
  %881 = vmatmul.mubr.bf16.gmra.mxu0 %v172
  %v882 = vpop.f32.mrf.mxu0
  %v883 = vadd.f32 %v118, %v882
  %v884 = vpop.f32.mrf.mxu0
  %v885 = vpop.f32.mrf.mxu0
  %v886 = vadd.f32 %v118, %v885
  %v887 = vpop.f32.mrf.mxu0
  %888 = vmatprep.mubr.bf16.mxu0 0
  %889 = vmatmul.mubr.bf16.gmra.mxu0 %v175
  %v890 = vpop.f32.mrf.mxu0
  %v891 = vadd.f32 %v118, %v890
  %v892 = vpop.f32.mrf.mxu0
  %v893 = vpop.f32.mrf.mxu0
  %v894 = vadd.f32 %v118, %v893
  %v895 = vpop.f32.mrf.mxu0
  %896 = vmatprep.mubr.bf16.mxu0 0
  %897 = vmatmul.mubr.bf16.gmra.mxu0 %v178
  %v898 = vpop.f32.mrf.mxu0
  %v899 = vadd.f32 %v118, %v898
  %v900 = vpop.f32.mrf.mxu0
  %v901 = vpop.f32.mrf.mxu0
  %v902 = vadd.f32 %v118, %v901
  %v903 = vpop.f32.mrf.mxu0
  %904 = vmatprep.mubr.bf16.mxu0 0
  %905 = vmatmul.mubr.bf16.gmra.mxu0 %v181
  %v906 = vpop.f32.mrf.mxu0
  %v907 = vadd.f32 %v118, %v906
  %v908 = vpop.f32.mrf.mxu0
  %v909 = vpop.f32.mrf.mxu0
  %v910 = vadd.f32 %v118, %v909
  %v911 = vpop.f32.mrf.mxu0
  %912 = vmatprep.mubr.bf16.mxu0 0
  %913 = vmatmul.mubr.bf16.gmra.mxu0 %v184
  %v914 = vpop.f32.mrf.mxu0
  %v915 = vadd.f32 %v118, %v914
  %v916 = vpop.f32.mrf.mxu0
  %v917 = vpop.f32.mrf.mxu0
  %v918 = vadd.f32 %v118, %v917
  %v919 = vpop.f32.mrf.mxu0
  %920 = vmatprep.mubr.bf16.mxu0 0
  %921 = vmatmul.mubr.bf16.gmra.mxu0 %v187
  %v922 = vpop.f32.mrf.mxu0
  %v923 = vadd.f32 %v118, %v922
  %v924 = vpop.f32.mrf.mxu0
  %v925 = vpop.f32.mrf.mxu0
  %v926 = vadd.f32 %v118, %v925
  %v927 = vpop.f32.mrf.mxu0
  %928 = vmatprep.mubr.bf16.mxu0 0
  %929 = vmatmul.mubr.bf16.gmra.mxu0 %v190
  %v930 = vpop.f32.mrf.mxu0
  %v931 = vadd.f32 %v118, %v930
  %v932 = vpop.f32.mrf.mxu0
  %v933 = vpop.f32.mrf.mxu0
  %v934 = vadd.f32 %v118, %v933
  %v935 = vpop.f32.mrf.mxu0
  %936 = vmatprep.mubr.bf16.mxu0 0
  %937 = vmatmul.mubr.bf16.gmra.mxu0 %v193
  %v938 = vpop.f32.mrf.mxu0
  %v939 = vadd.f32 %v118, %v938
  %v940 = vpop.f32.mrf.mxu0
  %v941 = vpop.f32.mrf.mxu0
  %v942 = vadd.f32 %v118, %v941
  %v943 = vpop.f32.mrf.mxu0
  %944 = vmatprep.mubr.bf16.mxu0 0
  %945 = vmatmul.mubr.bf16.gmra.mxu0 %v196
  %v946 = vpop.f32.mrf.mxu0
  %v947 = vadd.f32 %v118, %v946
  %v948 = vpop.f32.mrf.mxu0
  %v949 = vpop.f32.mrf.mxu0
  %v950 = vadd.f32 %v118, %v949
  %v951 = vpop.f32.mrf.mxu0
  %952 = vmatprep.mubr.bf16.mxu0 0
  %953 = vmatmul.mubr.bf16.gmra.mxu0 %v199
  %v954 = vpop.f32.mrf.mxu0
  %v955 = vadd.f32 %v118, %v954
  %v956 = vpop.f32.mrf.mxu0
  %v957 = vpop.f32.mrf.mxu0
  %v958 = vadd.f32 %v118, %v957
  %v959 = vpop.f32.mrf.mxu0
  %960 = vmatprep.mubr.bf16.mxu0 0
  %961 = vmatmul.mubr.bf16.gmra.mxu0 %v202
  %v962 = vpop.f32.mrf.mxu0
  %v963 = vadd.f32 %v118, %v962
  %v964 = vpop.f32.mrf.mxu0
  %v965 = vpop.f32.mrf.mxu0
  %v966 = vadd.f32 %v118, %v965
  %v967 = vpop.f32.mrf.mxu0
  %968 = vdwg.mxu0
  %v969 = vmax.f32 %v264, 0.0
  %v970 = vmax.f32 %v266, 0.0
  %v971 = vmax.f32 %v457, 0.0
  %v972 = vmax.f32 %v459, 0.0
  %v973 = vmax.f32 %v650, 0.0
  %v974 = vmax.f32 %v652, 0.0
  %v975 = vmax.f32 %v843, 0.0
  %v976 = vmax.f32 %v268, 0.0
  %v977 = vmax.f32 %v270, 0.0
  %v978 = vmax.f32 %v461, 0.0
  %v979 = vmax.f32 %v463, 0.0
  %v980 = vmax.f32 %v654, 0.0
  %v981 = vmax.f32 %v656, 0.0
  %v982 = vmax.f32 %v846, 0.0
  %v983 = vmax.f32 %v274, 0.0
  %v984 = vmax.f32 %v276, 0.0
  %v985 = vmax.f32 %v467, 0.0
  %v986 = vmax.f32 %v469, 0.0
  %v987 = vmax.f32 %v660, 0.0
  %v988 = vmax.f32 %v662, 0.0
  %v989 = vmax.f32 %v851, 0.0
  %v990 = vmax.f32 %v278, 0.0
  %v991 = vmax.f32 %v280, 0.0
  %v992 = vmax.f32 %v471, 0.0
  %v993 = vmax.f32 %v473, 0.0
  %v994 = vmax.f32 %v664, 0.0
  %v995 = vmax.f32 %v666, 0.0
  %v996 = vmax.f32 %v854, 0.0
  %v997 = vmax.f32 %v284, 0.0
  %v998 = vmax.f32 %v286, 0.0
  %v999 = vmax.f32 %v477, 0.0
  %v1000 = vmax.f32 %v479, 0.0
  %v1001 = vmax.f32 %v670, 0.0
  %v1002 = vmax.f32 %v672, 0.0
  %v1003 = vmax.f32 %v859, 0.0
  %v1004 = vmax.f32 %v288, 0.0
  %v1005 = vmax.f32 %v290, 0.0
  %v1006 = vmax.f32 %v481, 0.0
  %v1007 = vmax.f32 %v483, 0.0
  %v1008 = vmax.f32 %v674, 0.0
  %v1009 = vmax.f32 %v676, 0.0
  %v1010 = vmax.f32 %v862, 0.0
  %v1011 = vmax.f32 %v294, 0.0
  %v1012 = vmax.f32 %v296, 0.0
  %v1013 = vmax.f32 %v487, 0.0
  %v1014 = vmax.f32 %v489, 0.0
  %v1015 = vmax.f32 %v680, 0.0
  %v1016 = vmax.f32 %v682, 0.0
  %v1017 = vmax.f32 %v867, 0.0
  %v1018 = vmax.f32 %v298, 0.0
  %v1019 = vmax.f32 %v300, 0.0
  %v1020 = vmax.f32 %v491, 0.0
  %v1021 = vmax.f32 %v493, 0.0
  %v1022 = vmax.f32 %v684, 0.0
  %v1023 = vmax.f32 %v686, 0.0
  %v1024 = vmax.f32 %v870, 0.0
  %v1025 = vmax.f32 %v304, 0.0
  %v1026 = vmax.f32 %v306, 0.0
  %v1027 = vmax.f32 %v497, 0.0
  %v1028 = vmax.f32 %v499, 0.0
  %v1029 = vmax.f32 %v690, 0.0
  %v1030 = vmax.f32 %v692, 0.0
  %v1031 = vmax.f32 %v875, 0.0
  %v1032 = vmax.f32 %v308, 0.0
  %v1033 = vmax.f32 %v310, 0.0
  %v1034 = vmax.f32 %v501, 0.0
  %v1035 = vmax.f32 %v503, 0.0
  %v1036 = vmax.f32 %v694, 0.0
  %v1037 = vmax.f32 %v696, 0.0
  %v1038 = vmax.f32 %v878, 0.0
  %v1039 = vmax.f32 %v314, 0.0
  %v1040 = vmax.f32 %v316, 0.0
  %v1041 = vmax.f32 %v507, 0.0
  %v1042 = vmax.f32 %v509, 0.0
  %v1043 = vmax.f32 %v700, 0.0
  %v1044 = vmax.f32 %v702, 0.0
  %v1045 = vmax.f32 %v883, 0.0
  %v1046 = vmax.f32 %v318, 0.0
  %v1047 = vmax.f32 %v320, 0.0
  %v1048 = vmax.f32 %v511, 0.0
  %v1049 = vmax.f32 %v513, 0.0
  %v1050 = vmax.f32 %v704, 0.0
  %v1051 = vmax.f32 %v706, 0.0
  %v1052 = vmax.f32 %v886, 0.0
  %v1053 = vmax.f32 %v324, 0.0
  %v1054 = vmax.f32 %v326, 0.0
  %v1055 = vmax.f32 %v517, 0.0
  %v1056 = vmax.f32 %v519, 0.0
  %v1057 = vmax.f32 %v710, 0.0
  %v1058 = vmax.f32 %v712, 0.0
  %v1059 = vmax.f32 %v891, 0.0
  %v1060 = vmax.f32 %v328, 0.0
  %v1061 = vmax.f32 %v330, 0.0
  %v1062 = vmax.f32 %v521, 0.0
  %v1063 = vmax.f32 %v523, 0.0
  %v1064 = vmax.f32 %v714, 0.0
  %v1065 = vmax.f32 %v716, 0.0
  %v1066 = vmax.f32 %v894, 0.0
  %v1067 = vmax.f32 %v334, 0.0
  %v1068 = vmax.f32 %v336, 0.0
  %v1069 = vmax.f32 %v527, 0.0
  %v1070 = vmax.f32 %v529, 0.0
  %v1071 = vmax.f32 %v720, 0.0
  %v1072 = vmax.f32 %v722, 0.0
  %v1073 = vmax.f32 %v899, 0.0
  %v1074 = vmax.f32 %v338, 0.0
  %v1075 = vmax.f32 %v340, 0.0
  %v1076 = vmax.f32 %v531, 0.0
  %v1077 = vmax.f32 %v533, 0.0
  %v1078 = vmax.f32 %v724, 0.0
  %v1079 = vmax.f32 %v726, 0.0
  %v1080 = vmax.f32 %v902, 0.0
  %v1081 = vmax.f32 %v344, 0.0
  %v1082 = vmax.f32 %v346, 0.0
  %v1083 = vmax.f32 %v537, 0.0
  %v1084 = vmax.f32 %v539, 0.0
  %v1085 = vmax.f32 %v730, 0.0
  %v1086 = vmax.f32 %v732, 0.0
  %v1087 = vmax.f32 %v907, 0.0
  %v1088 = vmax.f32 %v348, 0.0
  %v1089 = vmax.f32 %v350, 0.0
  %v1090 = vmax.f32 %v541, 0.0
  %v1091 = vmax.f32 %v543, 0.0
  %v1092 = vmax.f32 %v734, 0.0
  %v1093 = vmax.f32 %v736, 0.0
  %v1094 = vmax.f32 %v910, 0.0
  %v1095 = vmax.f32 %v354, 0.0
  %v1096 = vmax.f32 %v356, 0.0
  %v1097 = vmax.f32 %v547, 0.0
  %v1098 = vmax.f32 %v549, 0.0
  %v1099 = vmax.f32 %v740, 0.0
  %v1100 = vmax.f32 %v742, 0.0
  %v1101 = vmax.f32 %v915, 0.0
  %v1102 = vmax.f32 %v358, 0.0
  %v1103 = vmax.f32 %v360, 0.0
  %v1104 = vmax.f32 %v551, 0.0
  %v1105 = vmax.f32 %v553, 0.0
  %v1106 = vmax.f32 %v744, 0.0
  %v1107 = vmax.f32 %v746, 0.0
  %v1108 = vmax.f32 %v918, 0.0
  %v1109 = vmax.f32 %v364, 0.0
  %v1110 = vmax.f32 %v366, 0.0
  %v1111 = vmax.f32 %v557, 0.0
  %v1112 = vmax.f32 %v559, 0.0
  %v1113 = vmax.f32 %v750, 0.0
  %v1114 = vmax.f32 %v752, 0.0
  %v1115 = vmax.f32 %v923, 0.0
  %v1116 = vmax.f32 %v368, 0.0
  %v1117 = vmax.f32 %v370, 0.0
  %v1118 = vmax.f32 %v561, 0.0
  %v1119 = vmax.f32 %v563, 0.0
  %v1120 = vmax.f32 %v754, 0.0
  %v1121 = vmax.f32 %v756, 0.0
  %v1122 = vmax.f32 %v926, 0.0
  %v1123 = vmax.f32 %v374, 0.0
  %v1124 = vmax.f32 %v376, 0.0
  %v1125 = vmax.f32 %v567, 0.0
  %v1126 = vmax.f32 %v569, 0.0
  %v1127 = vmax.f32 %v760, 0.0
  %v1128 = vmax.f32 %v762, 0.0
  %v1129 = vmax.f32 %v931, 0.0
  %v1130 = vmax.f32 %v378, 0.0
  %v1131 = vmax.f32 %v380, 0.0
  %v1132 = vmax.f32 %v571, 0.0
  %v1133 = vmax.f32 %v573, 0.0
  %v1134 = vmax.f32 %v764, 0.0
  %v1135 = vmax.f32 %v766, 0.0
  %v1136 = vmax.f32 %v934, 0.0
  %v1137 = vmax.f32 %v384, 0.0
  %v1138 = vmax.f32 %v386, 0.0
  %v1139 = vmax.f32 %v577, 0.0
  %v1140 = vmax.f32 %v579, 0.0
  %v1141 = vmax.f32 %v770, 0.0
  %v1142 = vmax.f32 %v772, 0.0
  %v1143 = vmax.f32 %v939, 0.0
  %v1144 = vmax.f32 %v388, 0.0
  %v1145 = vmax.f32 %v390, 0.0
  %v1146 = vmax.f32 %v581, 0.0
  %v1147 = vmax.f32 %v583, 0.0
  %v1148 = vmax.f32 %v774, 0.0
  %v1149 = vmax.f32 %v776, 0.0
  %v1150 = vmax.f32 %v942, 0.0
  %v1151 = vmax.f32 %v394, 0.0
  %v1152 = vmax.f32 %v396, 0.0
  %v1153 = vmax.f32 %v587, 0.0
  %v1154 = vmax.f32 %v589, 0.0
  %v1155 = vmax.f32 %v780, 0.0
  %v1156 = vmax.f32 %v782, 0.0
  %v1157 = vmax.f32 %v947, 0.0
  %v1158 = vmax.f32 %v398, 0.0
  %v1159 = vmax.f32 %v400, 0.0
  %v1160 = vmax.f32 %v591, 0.0
  %v1161 = vmax.f32 %v593, 0.0
  %v1162 = vmax.f32 %v784, 0.0
  %v1163 = vmax.f32 %v786, 0.0
  %v1164 = vmax.f32 %v950, 0.0
  %v1165 = vmax.f32 %v404, 0.0
  %v1166 = vmax.f32 %v406, 0.0
  %v1167 = vmax.f32 %v597, 0.0
  %v1168 = vmax.f32 %v599, 0.0
  %v1169 = vmax.f32 %v790, 0.0
  %v1170 = vmax.f32 %v792, 0.0
  %v1171 = vmax.f32 %v955, 0.0
  %v1172 = vmax.f32 %v408, 0.0
  %v1173 = vmax.f32 %v410, 0.0
  %v1174 = vmax.f32 %v601, 0.0
  %v1175 = vmax.f32 %v603, 0.0
  %v1176 = vmax.f32 %v794, 0.0
  %v1177 = vmax.f32 %v796, 0.0
  %v1178 = vmax.f32 %v958, 0.0
  %v1179 = vmax.f32 %v414, 0.0
  %v1180 = vmax.f32 %v416, 0.0
  %v1181 = vmax.f32 %v607, 0.0
  %v1182 = vmax.f32 %v609, 0.0
  %v1183 = vmax.f32 %v800, 0.0
  %v1184 = vmax.f32 %v802, 0.0
  %v1185 = vmax.f32 %v963, 0.0
  %v1186 = vmax.f32 %v418, 0.0
  %v1187 = vmax.f32 %v420, 0.0
  %v1188 = vmax.f32 %v611, 0.0
  %v1189 = vmax.f32 %v613, 0.0
  %v1190 = vmax.f32 %v804, 0.0
  %v1191 = vmax.f32 %v806, 0.0
  %v1192 = vmax.f32 %v966, 0.0
  %v1193 = vpack.c.bf16 %v976, %v969
  %v1194 = vpack.c.bf16 %v977, %v970
  %v1195 = vpack.c.bf16 %v978, %v971
  %v1196 = vpack.c.bf16 %v979, %v972
  %v1197 = vpack.c.bf16 %v980, %v973
  %v1198 = vpack.c.bf16 %v981, %v974
  %v1199 = vpack.c.bf16 %v982, %v975
  %v1200 = vpack.c.bf16 %v990, %v983
  %v1201 = vpack.c.bf16 %v991, %v984
  %v1202 = vpack.c.bf16 %v992, %v985
  %v1203 = vpack.c.bf16 %v993, %v986
  %v1204 = vpack.c.bf16 %v994, %v987
  %v1205 = vpack.c.bf16 %v995, %v988
  %v1206 = vpack.c.bf16 %v996, %v989
  %v1207 = vpack.c.bf16 %v1004, %v997
  %v1208 = vpack.c.bf16 %v1005, %v998
  %v1209 = vpack.c.bf16 %v1006, %v999
  %v1210 = vpack.c.bf16 %v1007, %v1000
  %v1211 = vpack.c.bf16 %v1008, %v1001
  %v1212 = vpack.c.bf16 %v1009, %v1002
  %v1213 = vpack.c.bf16 %v1010, %v1003
  %v1214 = vpack.c.bf16 %v1018, %v1011
  %v1215 = vpack.c.bf16 %v1019, %v1012
  %v1216 = vpack.c.bf16 %v1020, %v1013
  %v1217 = vpack.c.bf16 %v1021, %v1014
  %v1218 = vpack.c.bf16 %v1022, %v1015
  %v1219 = vpack.c.bf16 %v1023, %v1016
  %v1220 = vpack.c.bf16 %v1024, %v1017
  %v1221 = vpack.c.bf16 %v1032, %v1025
  %v1222 = vpack.c.bf16 %v1033, %v1026
  %v1223 = vpack.c.bf16 %v1034, %v1027
  %v1224 = vpack.c.bf16 %v1035, %v1028
  %v1225 = vpack.c.bf16 %v1036, %v1029
  %v1226 = vpack.c.bf16 %v1037, %v1030
  %v1227 = vpack.c.bf16 %v1038, %v1031
  %v1228 = vpack.c.bf16 %v1046, %v1039
  %v1229 = vpack.c.bf16 %v1047, %v1040
  %v1230 = vpack.c.bf16 %v1048, %v1041
  %v1231 = vpack.c.bf16 %v1049, %v1042
  %v1232 = vpack.c.bf16 %v1050, %v1043
  %v1233 = vpack.c.bf16 %v1051, %v1044
  %v1234 = vpack.c.bf16 %v1052, %v1045
  %v1235 = vpack.c.bf16 %v1060, %v1053
  %v1236 = vpack.c.bf16 %v1061, %v1054
  %v1237 = vpack.c.bf16 %v1062, %v1055
  %v1238 = vpack.c.bf16 %v1063, %v1056
  %v1239 = vpack.c.bf16 %v1064, %v1057
  %v1240 = vpack.c.bf16 %v1065, %v1058
  %v1241 = vpack.c.bf16 %v1066, %v1059
  %v1242 = vpack.c.bf16 %v1074, %v1067
  %v1243 = vpack.c.bf16 %v1075, %v1068
  %v1244 = vpack.c.bf16 %v1076, %v1069
  %v1245 = vpack.c.bf16 %v1077, %v1070
  %v1246 = vpack.c.bf16 %v1078, %v1071
  %v1247 = vpack.c.bf16 %v1079, %v1072
  %v1248 = vpack.c.bf16 %v1080, %v1073
  %v1249 = vpack.c.bf16 %v1088, %v1081
  %v1250 = vpack.c.bf16 %v1089, %v1082
  %v1251 = vpack.c.bf16 %v1090, %v1083
  %v1252 = vpack.c.bf16 %v1091, %v1084
  %v1253 = vpack.c.bf16 %v1092, %v1085
  %v1254 = vpack.c.bf16 %v1093, %v1086
  %v1255 = vpack.c.bf16 %v1094, %v1087
  %v1256 = vpack.c.bf16 %v1102, %v1095
  %v1257 = vpack.c.bf16 %v1103, %v1096
  %v1258 = vpack.c.bf16 %v1104, %v1097
  %v1259 = vpack.c.bf16 %v1105, %v1098
  %v1260 = vpack.c.bf16 %v1106, %v1099
  %v1261 = vpack.c.bf16 %v1107, %v1100
  %v1262 = vpack.c.bf16 %v1108, %v1101
  %v1263 = vpack.c.bf16 %v1116, %v1109
  %v1264 = vpack.c.bf16 %v1117, %v1110
  %v1265 = vpack.c.bf16 %v1118, %v1111
  %v1266 = vpack.c.bf16 %v1119, %v1112
  %v1267 = vpack.c.bf16 %v1120, %v1113
  %v1268 = vpack.c.bf16 %v1121, %v1114
  %v1269 = vpack.c.bf16 %v1122, %v1115
  %v1270 = vpack.c.bf16 %v1130, %v1123
  %v1271 = vpack.c.bf16 %v1131, %v1124
  %v1272 = vpack.c.bf16 %v1132, %v1125
  %v1273 = vpack.c.bf16 %v1133, %v1126
  %v1274 = vpack.c.bf16 %v1134, %v1127
  %v1275 = vpack.c.bf16 %v1135, %v1128
  %v1276 = vpack.c.bf16 %v1136, %v1129
  %v1277 = vpack.c.bf16 %v1144, %v1137
  %v1278 = vpack.c.bf16 %v1145, %v1138
  %v1279 = vpack.c.bf16 %v1146, %v1139
  %v1280 = vpack.c.bf16 %v1147, %v1140
  %v1281 = vpack.c.bf16 %v1148, %v1141
  %v1282 = vpack.c.bf16 %v1149, %v1142
  %v1283 = vpack.c.bf16 %v1150, %v1143
  %v1284 = vpack.c.bf16 %v1158, %v1151
  %v1285 = vpack.c.bf16 %v1159, %v1152
  %v1286 = vpack.c.bf16 %v1160, %v1153
  %v1287 = vpack.c.bf16 %v1161, %v1154
  %v1288 = vpack.c.bf16 %v1162, %v1155
  %v1289 = vpack.c.bf16 %v1163, %v1156
  %v1290 = vpack.c.bf16 %v1164, %v1157
  %v1291 = vpack.c.bf16 %v1172, %v1165
  %v1292 = vpack.c.bf16 %v1173, %v1166
  %v1293 = vpack.c.bf16 %v1174, %v1167
  %v1294 = vpack.c.bf16 %v1175, %v1168
  %v1295 = vpack.c.bf16 %v1176, %v1169
  %v1296 = vpack.c.bf16 %v1177, %v1170
  %v1297 = vpack.c.bf16 %v1178, %v1171
  %v1298 = vpack.c.bf16 %v1186, %v1179
  %v1299 = vpack.c.bf16 %v1187, %v1180
  %v1300 = vpack.c.bf16 %v1188, %v1181
  %v1301 = vpack.c.bf16 %v1189, %v1182
  %v1302 = vpack.c.bf16 %v1190, %v1183
  %v1303 = vpack.c.bf16 %v1191, %v1184
  %v1304 = vpack.c.bf16 %v1192, %v1185
  %v1305 = vld [vmem:[%s3] sm:$0xff]
  %v1306 = vld [vmem:[%s3 + $0x8] sm:$0xf]
  %v1307 = vld [vmem:[%s3 + $0xc] sm:$0xff]
  %v1308 = vld [vmem:[%s3 + $0x14] sm:$0xf]
  %v1309 = vld [vmem:[%s3 + $0x18] sm:$0xff]
  %v1310 = vld [vmem:[%s3 + $0x20] sm:$0xf]
  %v1311 = vld [vmem:[%s3 + $0x24] sm:$0xff]
  %v1312 = vld [vmem:[%s3 + $0x2c] sm:$0xf]
  %v1313 = vld [vmem:[%s3 + $0x30] sm:$0xff]
  %v1314 = vld [vmem:[%s3 + $0x38] sm:$0xf]
  %v1315 = vld [vmem:[%s3 + $0x3c] sm:$0xff]
  %v1316 = vld [vmem:[%s3 + $0x44] sm:$0xf]
  %v1317 = vld [vmem:[%s3 + $0x48] sm:$0xff]
  %v1318 = vld [vmem:[%s3 + $0x50] sm:$0xf]
  %v1319 = vld [vmem:[%s3 + $0x54] sm:$0xff]
  %v1320 = vld [vmem:[%s3 + $0x5c] sm:$0xf]
  %v1321 = vld [vmem:[%s3 + $0x60] sm:$0xff]
  %v1322 = vld [vmem:[%s3 + $0x68] sm:$0xf]
  %v1323 = vld [vmem:[%s3 + $0x6c] sm:$0xff]
  %v1324 = vld [vmem:[%s3 + $0x74] sm:$0xf]
  %v1325 = vld [vmem:[%s3 + $0x78] sm:$0xff]
  %v1326 = vld [vmem:[%s3 + $0x80] sm:$0xf]
  %v1327 = vld [vmem:[%s3 + $0x84] sm:$0xff]
  %v1328 = vld [vmem:[%s3 + $0x8c] sm:$0xf]
  %v1329 = vld [vmem:[%s3 + $0x90] sm:$0xff]
  %v1330 = vld [vmem:[%s3 + $0x98] sm:$0xf]
  %v1331 = vld [vmem:[%s3 + $0x9c] sm:$0xff]
  %v1332 = vld [vmem:[%s3 + $0xa4] sm:$0xf]
  %v1333 = vld [vmem:[%s3 + $0xa8] sm:$0xff]
  %v1334 = vld [vmem:[%s3 + $0xb0] sm:$0xf]
  %v1335 = vld [vmem:[%s3 + $0xb4] sm:$0xff]
  %v1336 = vld [vmem:[%s3 + $0xbc] sm:$0xf]
  %v1337 = vld [vmem:[%s3 + $0xc0] sm:$0xff]
  %v1338 = vld [vmem:[%s3 + $0xc8] sm:$0xf]
  %v1339 = vld [vmem:[%s3 + $0xcc] sm:$0xff]
  %v1340 = vld [vmem:[%s3 + $0xd4] sm:$0xf]
  %v1341 = vld [vmem:[%s3 + $0xd8] sm:$0xff]
  %v1342 = vld [vmem:[%s3 + $0xe0] sm:$0xf]
  %v1343 = vld [vmem:[%s3 + $0xe4] sm:$0xff]
  %v1344 = vld [vmem:[%s3 + $0xec] sm:$0xf]
  %v1345 = vld [vmem:[%s3 + $0xf0] sm:$0xff]
  %v1346 = vld [vmem:[%s3 + $0xf8] sm:$0xf]
  %v1347 = vld [vmem:[%s3 + $0xfc] sm:$0xff]
  %v1348 = vld [vmem:[%s3 + $0x104] sm:$0xf]
  %v1349 = vld [vmem:[%s3 + $0x108] sm:$0xff]
  %v1350 = vld [vmem:[%s3 + $0x110] sm:$0xf]
  %v1351 = vld [vmem:[%s3 + $0x114] sm:$0xff]
  %v1352 = vld [vmem:[%s3 + $0x11c] sm:$0xf]
  %v1353 = vld [vmem:[%s3 + $0x120] sm:$0xff]
  %v1354 = vld [vmem:[%s3 + $0x128] sm:$0xf]
  %v1355 = vld [vmem:[%s3 + $0x12c] sm:$0xff]
  %v1356 = vld [vmem:[%s3 + $0x134] sm:$0xf]
  %v1357 = vld [vmem:[%s3 + $0x138] sm:$0xff]
  %v1358 = vld [vmem:[%s3 + $0x140] sm:$0xf]
  %v1359 = vld [vmem:[%s3 + $0x144] sm:$0xff]
  %v1360 = vld [vmem:[%s3 + $0x14c] sm:$0xf]
  %v1361 = vld [vmem:[%s3 + $0x150] sm:$0xff]
  %v1362 = vld [vmem:[%s3 + $0x158] sm:$0xf]
  %v1363 = vld [vmem:[%s3 + $0x15c] sm:$0xff]
  %v1364 = vld [vmem:[%s3 + $0x164] sm:$0xf]
  %v1365 = vld [vmem:[%s3 + $0x168] sm:$0xff]
  %v1366 = vld [vmem:[%s3 + $0x170] sm:$0xf]
  %v1367 = vld [vmem:[%s3 + $0x174] sm:$0xff]
  %v1368 = vld [vmem:[%s3 + $0x17c] sm:$0xf]
  %v1369 = vld [vmem:[%s3 + $0x180] sm:$0xff]
  %v1370 = vld [vmem:[%s3 + $0x188] sm:$0xf]
  %v1371 = vld [vmem:[%s3 + $0x18c] sm:$0xff]
  %v1372 = vld [vmem:[%s3 + $0x194] sm:$0xf]
  %v1373 = vld [vmem:[%s3 + $0x198] sm:$0xff]
  %v1374 = vld [vmem:[%s3 + $0x1a0] sm:$0xf]
  %v1375 = vld [vmem:[%s3 + $0x1a4] sm:$0xff]
  %v1376 = vld [vmem:[%s3 + $0x1ac] sm:$0xf]
  %v1377 = vld [vmem:[%s3 + $0x1b0] sm:$0xff]
  %v1378 = vld [vmem:[%s3 + $0x1b8] sm:$0xf]
  %v1379 = vld [vmem:[%s3 + $0x1bc] sm:$0xff]
  %v1380 = vld [vmem:[%s3 + $0x1c4] sm:$0xf]
  %v1381 = vld [vmem:[%s3 + $0x1c8] sm:$0xff]
  %v1382 = vld [vmem:[%s3 + $0x1d0] sm:$0xf]
  %v1383 = vld [vmem:[%s3 + $0x1d4] sm:$0xff]
  %v1384 = vld [vmem:[%s3 + $0x1dc] sm:$0xf]
  %v1385 = vld [vmem:[%s3 + $0x1e0] sm:$0xff]
  %v1386 = vld [vmem:[%s3 + $0x1e8] sm:$0xf]
  %v1387 = vld [vmem:[%s3 + $0x1ec] sm:$0xff]
  %v1388 = vld [vmem:[%s3 + $0x1f4] sm:$0xf]
  %v1389 = vld [vmem:[%s3 + $0x1f8] sm:$0xff]
  %v1390 = vld [vmem:[%s3 + $0x200] sm:$0xf]
  %v1391 = vld [vmem:[%s3 + $0x204] sm:$0xff]
  %v1392 = vld [vmem:[%s3 + $0x20c] sm:$0xf]
  %v1393 = vld [vmem:[%s3 + $0x210] sm:$0xff]
  %v1394 = vld [vmem:[%s3 + $0x218] sm:$0xf]
  %v1395 = vld [vmem:[%s3 + $0x21c] sm:$0xff]
  %v1396 = vld [vmem:[%s3 + $0x224] sm:$0xf]
  %v1397 = vld [vmem:[%s3 + $0x228] sm:$0xff]
  %v1398 = vld [vmem:[%s3 + $0x230] sm:$0xf]
  %v1399 = vld [vmem:[%s3 + $0x234] sm:$0xff]
  %v1400 = vld [vmem:[%s3 + $0x23c] sm:$0xf]
  %v1401 = vld [vmem:[%s3 + $0x240] sm:$0xff]
  %v1402 = vld [vmem:[%s3 + $0x248] sm:$0xf]
  %v1403 = vld [vmem:[%s3 + $0x24c] sm:$0xff]
  %v1404 = vld [vmem:[%s3 + $0x254] sm:$0xf]
  %v1405 = vld [vmem:[%s3 + $0x258] sm:$0xff]
  %v1406 = vld [vmem:[%s3 + $0x260] sm:$0xf]
  %v1407 = vld [vmem:[%s3 + $0x264] sm:$0xff]
  %v1408 = vld [vmem:[%s3 + $0x26c] sm:$0xf]
  %v1409 = vld [vmem:[%s3 + $0x270] sm:$0xff]
  %v1410 = vld [vmem:[%s3 + $0x278] sm:$0xf]
  %v1411 = vld [vmem:[%s3 + $0x27c] sm:$0xff]
  %v1412 = vld [vmem:[%s3 + $0x284] sm:$0xf]
  %v1413 = vld [vmem:[%s3 + $0x288] sm:$0xff]
  %v1414 = vld [vmem:[%s3 + $0x290] sm:$0xf]
  %v1415 = vld [vmem:[%s3 + $0x294] sm:$0xff]
  %v1416 = vld [vmem:[%s3 + $0x29c] sm:$0xf]
  %v1417 = vld [vmem:[%s3 + $0x2a0] sm:$0xff]
  %v1418 = vld [vmem:[%s3 + $0x2a8] sm:$0xf]
  %v1419 = vld [vmem:[%s3 + $0x2ac] sm:$0xff]
  %v1420 = vld [vmem:[%s3 + $0x2b4] sm:$0xf]
  %v1421 = vld [vmem:[%s3 + $0x2b8] sm:$0xff]
  %v1422 = vld [vmem:[%s3 + $0x2c0] sm:$0xf]
  %v1423 = vld [vmem:[%s3 + $0x2c4] sm:$0xff]
  %v1424 = vld [vmem:[%s3 + $0x2cc] sm:$0xf]
  %v1425 = vld [vmem:[%s3 + $0x2d0] sm:$0xff]
  %v1426 = vld [vmem:[%s3 + $0x2d8] sm:$0xf]
  %v1427 = vld [vmem:[%s3 + $0x2dc] sm:$0xff]
  %v1428 = vld [vmem:[%s3 + $0x2e4] sm:$0xf]
  %v1429 = vld [vmem:[%s3 + $0x2e8] sm:$0xff]
  %v1430 = vld [vmem:[%s3 + $0x2f0] sm:$0xf]
  %v1431 = vld [vmem:[%s3 + $0x2f4] sm:$0xff]
  %v1432 = vld [vmem:[%s3 + $0x2fc] sm:$0xf]
  %v1433 = vld [vmem:[%s3 + $0x300] sm:$0xff]
  %v1434 = vld [vmem:[%s3 + $0x308] sm:$0xf]
  %v1435 = vld [vmem:[%s3 + $0x30c] sm:$0xff]
  %v1436 = vld [vmem:[%s3 + $0x314] sm:$0xf]
  %v1437 = vld [vmem:[%s3 + $0x318] sm:$0xff]
  %v1438 = vld [vmem:[%s3 + $0x320] sm:$0xf]
  %v1439 = vld [vmem:[%s3 + $0x324] sm:$0xff]
  %v1440 = vld [vmem:[%s3 + $0x32c] sm:$0xf]
  %v1441 = vld [vmem:[%s3 + $0x330] sm:$0xff]
  %v1442 = vld [vmem:[%s3 + $0x338] sm:$0xf]
  %v1443 = vld [vmem:[%s3 + $0x33c] sm:$0xff]
  %v1444 = vld [vmem:[%s3 + $0x344] sm:$0xf]
  %v1445 = vld [vmem:[%s3 + $0x348] sm:$0xff]
  %v1446 = vld [vmem:[%s3 + $0x350] sm:$0xf]
  %v1447 = vld [vmem:[%s3 + $0x354] sm:$0xff]
  %v1448 = vld [vmem:[%s3 + $0x35c] sm:$0xf]
  %v1449 = vld [vmem:[%s3 + $0x360] sm:$0xff]
  %v1450 = vld [vmem:[%s3 + $0x368] sm:$0xf]
  %v1451 = vld [vmem:[%s3 + $0x36c] sm:$0xff]
  %v1452 = vld [vmem:[%s3 + $0x374] sm:$0xf]
  %v1453 = vld [vmem:[%s3 + $0x378] sm:$0xff]
  %v1454 = vld [vmem:[%s3 + $0x380] sm:$0xf]
  %v1455 = vld [vmem:[%s3 + $0x384] sm:$0xff]
  %v1456 = vld [vmem:[%s3 + $0x38c] sm:$0xf]
  %v1457 = vld [vmem:[%s3 + $0x390] sm:$0xff]
  %v1458 = vld [vmem:[%s3 + $0x398] sm:$0xf]
  %v1459 = vld [vmem:[%s3 + $0x39c] sm:$0xff]
  %v1460 = vld [vmem:[%s3 + $0x3a4] sm:$0xf]
  %v1461 = vld [vmem:[%s3 + $0x3a8] sm:$0xff]
  %v1462 = vld [vmem:[%s3 + $0x3b0] sm:$0xf]
  %v1463 = vld [vmem:[%s3 + $0x3b4] sm:$0xff]
  %v1464 = vld [vmem:[%s3 + $0x3bc] sm:$0xf]
  %v1465 = vld [vmem:[%s3 + $0x3c0] sm:$0xff]
  %v1466 = vld [vmem:[%s3 + $0x3c8] sm:$0xf]
  %v1467 = vld [vmem:[%s3 + $0x3cc] sm:$0xff]
  %v1468 = vld [vmem:[%s3 + $0x3d4] sm:$0xf]
  %v1469 = vld [vmem:[%s3 + $0x3d8] sm:$0xff]
  %v1470 = vld [vmem:[%s3 + $0x3e0] sm:$0xf]
  %v1471 = vld [vmem:[%s3 + $0x3e4] sm:$0xff]
  %v1472 = vld [vmem:[%s3 + $0x3ec] sm:$0xf]
  %v1473 = vld [vmem:[%s3 + $0x3f0] sm:$0xff]
  %v1474 = vld [vmem:[%s3 + $0x3f8] sm:$0xf]
  %v1475 = vld [vmem:[%s3 + $0x3fc] sm:$0xff]
  %v1476 = vld [vmem:[%s3 + $0x404] sm:$0xf]
  %v1477 = vld [vmem:[%s3 + $0x408] sm:$0xff]
  %v1478 = vld [vmem:[%s3 + $0x410] sm:$0xf]
  %v1479 = vld [vmem:[%s3 + $0x414] sm:$0xff]
  %v1480 = vld [vmem:[%s3 + $0x41c] sm:$0xf]
  %v1481 = vld [vmem:[%s3 + $0x420] sm:$0xff]
  %v1482 = vld [vmem:[%s3 + $0x428] sm:$0xf]
  %v1483 = vld [vmem:[%s3 + $0x42c] sm:$0xff]
  %v1484 = vld [vmem:[%s3 + $0x434] sm:$0xf]
  %v1485 = vld [vmem:[%s3 + $0x438] sm:$0xff]
  %v1486 = vld [vmem:[%s3 + $0x440] sm:$0xf]
  %v1487 = vld [vmem:[%s3 + $0x444] sm:$0xff]
  %v1488 = vld [vmem:[%s3 + $0x44c] sm:$0xf]
  %v1489 = vld [vmem:[%s3 + $0x450] sm:$0xff]
  %v1490 = vld [vmem:[%s3 + $0x458] sm:$0xf]
  %v1491 = vld [vmem:[%s3 + $0x45c] sm:$0xff]
  %v1492 = vld [vmem:[%s3 + $0x464] sm:$0xf]
  %v1493 = vld [vmem:[%s3 + $0x468] sm:$0xff]
  %v1494 = vld [vmem:[%s3 + $0x470] sm:$0xf]
  %v1495 = vld [vmem:[%s3 + $0x474] sm:$0xff]
  %v1496 = vld [vmem:[%s3 + $0x47c] sm:$0xf]
  %v1497 = vld [vmem:[%s3 + $0x480] sm:$0xff]
  %v1498 = vld [vmem:[%s3 + $0x488] sm:$0xf]
  %v1499 = vld [vmem:[%s3 + $0x48c] sm:$0xff]
  %v1500 = vld [vmem:[%s3 + $0x494] sm:$0xf]
  %v1501 = vld [vmem:[%s3 + $0x498] sm:$0xff]
  %v1502 = vld [vmem:[%s3 + $0x4a0] sm:$0xf]
  %v1503 = vld [vmem:[%s3 + $0x4a4] sm:$0xff]
  %v1504 = vld [vmem:[%s3 + $0x4ac] sm:$0xf]
  %v1505 = vld [vmem:[%s3 + $0x4b0] sm:$0xff]
  %v1506 = vld [vmem:[%s3 + $0x4b8] sm:$0xf]
  %v1507 = vld [vmem:[%s3 + $0x4bc] sm:$0xff]
  %v1508 = vld [vmem:[%s3 + $0x4c4] sm:$0xf]
  %v1509 = vld [vmem:[%s3 + $0x4c8] sm:$0xff]
  %v1510 = vld [vmem:[%s3 + $0x4d0] sm:$0xf]
  %v1511 = vld [vmem:[%s3 + $0x4d4] sm:$0xff]
  %v1512 = vld [vmem:[%s3 + $0x4dc] sm:$0xf]
  %v1513 = vld [vmem:[%s3 + $0x4e0] sm:$0xff]
  %v1514 = vld [vmem:[%s3 + $0x4e8] sm:$0xf]
  %v1515 = vld [vmem:[%s3 + $0x4ec] sm:$0xff]
  %v1516 = vld [vmem:[%s3 + $0x4f4] sm:$0xf]
  %v1517 = vld [vmem:[%s3 + $0x4f8] sm:$0xff]
  %v1518 = vld [vmem:[%s3 + $0x500] sm:$0xf]
  %v1519 = vld [vmem:[%s3 + $0x504] sm:$0xff]
  %v1520 = vld [vmem:[%s3 + $0x50c] sm:$0xf]
  %v1521 = vld [vmem:[%s3 + $0x510] sm:$0xff]
  %v1522 = vld [vmem:[%s3 + $0x518] sm:$0xf]
  %v1523 = vld [vmem:[%s3 + $0x51c] sm:$0xff]
  %v1524 = vld [vmem:[%s3 + $0x524] sm:$0xf]
  %v1525 = vld [vmem:[%s3 + $0x528] sm:$0xff]
  %v1526 = vld [vmem:[%s3 + $0x530] sm:$0xf]
  %v1527 = vld [vmem:[%s3 + $0x534] sm:$0xff]
  %v1528 = vld [vmem:[%s3 + $0x53c] sm:$0xf]
  %v1529 = vld [vmem:[%s4] sm:$0x7]
  %v1531 = vlaneseq
  %v1532 = vshrl.u32 %v1531, 7
  %v1533 = vsub.s32 0, %v1532
  %v1534 = vrot.slane %v1529, %v1533
  %v1535 = vlaneseq
  %v1536 = vshrl.u32 %v1535, 7
  %v1537 = vsub.s32 1, %v1536
  %v1538 = vrot.slane %v1529, %v1537
  %v1539 = vlaneseq
  %v1540 = vshrl.u32 %v1539, 7
  %v1541 = vsub.s32 2, %v1540
  %v1542 = vrot.slane %v1529, %v1541
  %v1770 = vunpack.c.l.b16 %v1305
  %v1771 = vunpack.c.h.b16 %v1305
  %v1772 = vunpack.c.l.b16 %v1306
  %v1773 = vunpack.c.l.b16 %v1307
  %v1774 = vunpack.c.h.b16 %v1307
  %v1775 = vunpack.c.l.b16 %v1308
  %v1776 = vunpack.c.l.b16 %v1309
  %v1777 = vunpack.c.h.b16 %v1309
  %v1778 = vunpack.c.l.b16 %v1310
  %v1779 = vunpack.c.l.b16 %v1311
  %v1780 = vunpack.c.h.b16 %v1311
  %v1781 = vunpack.c.l.b16 %v1312
  %v1782 = vunpack.c.l.b16 %v1313
  %v1783 = vunpack.c.h.b16 %v1313
  %v1784 = vunpack.c.l.b16 %v1314
  %v1785 = vunpack.c.l.b16 %v1315
  %v1786 = vunpack.c.h.b16 %v1315
  %v1787 = vunpack.c.l.b16 %v1316
  %v1788 = vunpack.c.l.b16 %v1317
  %v1789 = vunpack.c.h.b16 %v1317
  %v1790 = vunpack.c.l.b16 %v1318
  %v1791 = vunpack.c.l.b16 %v1319
  %v1792 = vunpack.c.h.b16 %v1319
  %v1793 = vunpack.c.l.b16 %v1320
  %v1794 = vunpack.c.l.b16 %v1321
  %v1795 = vunpack.c.h.b16 %v1321
  %v1796 = vunpack.c.l.b16 %v1322
  %v1797 = vunpack.c.l.b16 %v1323
  %v1798 = vunpack.c.h.b16 %v1323
  %v1799 = vunpack.c.l.b16 %v1324
  %v1800 = vunpack.c.l.b16 %v1325
  %v1801 = vunpack.c.h.b16 %v1325
  %v1802 = vunpack.c.l.b16 %v1326
  %v1803 = vunpack.c.l.b16 %v1327
  %v1804 = vunpack.c.h.b16 %v1327
  %v1805 = vunpack.c.l.b16 %v1328
  %v1806 = vunpack.c.l.b16 %v1329
  %v1807 = vunpack.c.h.b16 %v1329
  %v1808 = vunpack.c.l.b16 %v1330
  %v1809 = vunpack.c.l.b16 %v1331
  %v1810 = vunpack.c.h.b16 %v1331
  %v1811 = vunpack.c.l.b16 %v1332
  %v1812 = vunpack.c.l.b16 %v1333
  %v1813 = vunpack.c.h.b16 %v1333
  %v1814 = vunpack.c.l.b16 %v1334
  %v1815 = vunpack.c.l.b16 %v1335
  %v1816 = vunpack.c.h.b16 %v1335
  %v1817 = vunpack.c.l.b16 %v1336
  %v1818 = vunpack.c.l.b16 %v1337
  %v1819 = vunpack.c.h.b16 %v1337
  %v1820 = vunpack.c.l.b16 %v1338
  %v1821 = vunpack.c.l.b16 %v1339
  %v1822 = vunpack.c.h.b16 %v1339
  %v1823 = vunpack.c.l.b16 %v1340
  %v1824 = vunpack.c.l.b16 %v1341
  %v1825 = vunpack.c.h.b16 %v1341
  %v1826 = vunpack.c.l.b16 %v1342
  %v1827 = vunpack.c.l.b16 %v1343
  %v1828 = vunpack.c.h.b16 %v1343
  %v1829 = vunpack.c.l.b16 %v1344
  %v1830 = vunpack.c.l.b16 %v1345
  %v1831 = vunpack.c.h.b16 %v1345
  %v1832 = vunpack.c.l.b16 %v1346
  %v1833 = vunpack.c.l.b16 %v1347
  %v1834 = vunpack.c.h.b16 %v1347
  %v1835 = vunpack.c.l.b16 %v1348
  %v1836 = vunpack.c.l.b16 %v1349
  %v1837 = vunpack.c.h.b16 %v1349
  %v1838 = vunpack.c.l.b16 %v1350
  %v1839 = vunpack.c.l.b16 %v1351
  %v1840 = vunpack.c.h.b16 %v1351
  %v1841 = vunpack.c.l.b16 %v1352
  %v1842 = vunpack.c.l.b16 %v1353
  %v1843 = vunpack.c.h.b16 %v1353
  %v1844 = vunpack.c.l.b16 %v1354
  %v1845 = vunpack.c.l.b16 %v1355
  %v1846 = vunpack.c.h.b16 %v1355
  %v1847 = vunpack.c.l.b16 %v1356
  %v1848 = vunpack.c.l.b16 %v1357
  %v1849 = vunpack.c.h.b16 %v1357
  %v1850 = vunpack.c.l.b16 %v1358
  %v1851 = vunpack.c.l.b16 %v1359
  %v1852 = vunpack.c.h.b16 %v1359
  %v1853 = vunpack.c.l.b16 %v1360
  %v1854 = vunpack.c.l.b16 %v1361
  %v1855 = vunpack.c.h.b16 %v1361
  %v1856 = vunpack.c.l.b16 %v1362
  %v1857 = vunpack.c.l.b16 %v1363
  %v1858 = vunpack.c.h.b16 %v1363
  %v1859 = vunpack.c.l.b16 %v1364
  %v1860 = vunpack.c.l.b16 %v1365
  %v1861 = vunpack.c.h.b16 %v1365
  %v1862 = vunpack.c.l.b16 %v1366
  %v1863 = vunpack.c.l.b16 %v1367
  %v1864 = vunpack.c.h.b16 %v1367
  %v1865 = vunpack.c.l.b16 %v1368
  %v1866 = vunpack.c.l.b16 %v1369
  %v1867 = vunpack.c.h.b16 %v1369
  %v1868 = vunpack.c.l.b16 %v1370
  %v1869 = vunpack.c.l.b16 %v1371
  %v1870 = vunpack.c.h.b16 %v1371
  %v1871 = vunpack.c.l.b16 %v1372
  %v1872 = vunpack.c.l.b16 %v1373
  %v1873 = vunpack.c.h.b16 %v1373
  %v1874 = vunpack.c.l.b16 %v1374
  %v1875 = vunpack.c.l.b16 %v1375
  %v1876 = vunpack.c.h.b16 %v1375
  %v1877 = vunpack.c.l.b16 %v1376
  %v1878 = vunpack.c.l.b16 %v1377
  %v1879 = vunpack.c.h.b16 %v1377
  %v1880 = vunpack.c.l.b16 %v1378
  %v1881 = vunpack.c.l.b16 %v1379
  %v1882 = vunpack.c.h.b16 %v1379
  %v1883 = vunpack.c.l.b16 %v1380
  %v1884 = vunpack.c.l.b16 %v1381
  %v1885 = vunpack.c.h.b16 %v1381
  %v1886 = vunpack.c.l.b16 %v1382
  %v1887 = vunpack.c.l.b16 %v1383
  %v1888 = vunpack.c.h.b16 %v1383
  %v1889 = vunpack.c.l.b16 %v1384
  %v1890 = vunpack.c.l.b16 %v1385
  %v1891 = vunpack.c.h.b16 %v1385
  %v1892 = vunpack.c.l.b16 %v1386
  %v1893 = vunpack.c.l.b16 %v1387
  %v1894 = vunpack.c.h.b16 %v1387
  %v1895 = vunpack.c.l.b16 %v1388
  %v1896 = vunpack.c.l.b16 %v1389
  %v1897 = vunpack.c.h.b16 %v1389
  %v1898 = vunpack.c.l.b16 %v1390
  %v1899 = vunpack.c.l.b16 %v1391
  %v1900 = vunpack.c.h.b16 %v1391
  %v1901 = vunpack.c.l.b16 %v1392
  %v1902 = vunpack.c.l.b16 %v1393
  %v1903 = vunpack.c.h.b16 %v1393
  %v1904 = vunpack.c.l.b16 %v1394
  %v1905 = vunpack.c.l.b16 %v1395
  %v1906 = vunpack.c.h.b16 %v1395
  %v1907 = vunpack.c.l.b16 %v1396
  %v1908 = vunpack.c.l.b16 %v1397
  %v1909 = vunpack.c.h.b16 %v1397
  %v1910 = vunpack.c.l.b16 %v1398
  %v1911 = vunpack.c.l.b16 %v1399
  %v1912 = vunpack.c.h.b16 %v1399
  %v1913 = vunpack.c.l.b16 %v1400
  %v1914 = vunpack.c.l.b16 %v1401
  %v1915 = vunpack.c.h.b16 %v1401
  %v1916 = vunpack.c.l.b16 %v1402
  %v1917 = vunpack.c.l.b16 %v1403
  %v1918 = vunpack.c.h.b16 %v1403
  %v1919 = vunpack.c.l.b16 %v1404
  %v1920 = vunpack.c.l.b16 %v1405
  %v1921 = vunpack.c.h.b16 %v1405
  %v1922 = vunpack.c.l.b16 %v1406
  %v1923 = vunpack.c.l.b16 %v1407
  %v1924 = vunpack.c.h.b16 %v1407
  %v1925 = vunpack.c.l.b16 %v1408
  %v1926 = vunpack.c.l.b16 %v1409
  %v1927 = vunpack.c.h.b16 %v1409
  %v1928 = vunpack.c.l.b16 %v1410
  %v1929 = vunpack.c.l.b16 %v1411
  %v1930 = vunpack.c.h.b16 %v1411
  %v1931 = vunpack.c.l.b16 %v1412
  %v1932 = vunpack.c.l.b16 %v1413
  %v1933 = vunpack.c.h.b16 %v1413
  %v1934 = vunpack.c.l.b16 %v1414
  %v1935 = vunpack.c.l.b16 %v1415
  %v1936 = vunpack.c.h.b16 %v1415
  %v1937 = vunpack.c.l.b16 %v1416
  %v1938 = vunpack.c.l.b16 %v1417
  %v1939 = vunpack.c.h.b16 %v1417
  %v1940 = vunpack.c.l.b16 %v1418
  %v1941 = vunpack.c.l.b16 %v1419
  %v1942 = vunpack.c.h.b16 %v1419
  %v1943 = vunpack.c.l.b16 %v1420
  %v1944 = vunpack.c.l.b16 %v1421
  %v1945 = vunpack.c.h.b16 %v1421
  %v1946 = vunpack.c.l.b16 %v1422
  %v1947 = vunpack.c.l.b16 %v1423
  %v1948 = vunpack.c.h.b16 %v1423
  %v1949 = vunpack.c.l.b16 %v1424
  %v1950 = vunpack.c.l.b16 %v1425
  %v1951 = vunpack.c.h.b16 %v1425
  %v1952 = vunpack.c.l.b16 %v1426
  %v1953 = vunpack.c.l.b16 %v1427
  %v1954 = vunpack.c.h.b16 %v1427
  %v1955 = vunpack.c.l.b16 %v1428
  %v1956 = vunpack.c.l.b16 %v1429
  %v1957 = vunpack.c.h.b16 %v1429
  %v1958 = vunpack.c.l.b16 %v1430
  %v1959 = vunpack.c.l.b16 %v1431
  %v1960 = vunpack.c.h.b16 %v1431
  %v1961 = vunpack.c.l.b16 %v1432
  %v1962 = vunpack.c.l.b16 %v1433
  %v1963 = vunpack.c.h.b16 %v1433
  %v1964 = vunpack.c.l.b16 %v1434
  %v1965 = vunpack.c.l.b16 %v1435
  %v1966 = vunpack.c.h.b16 %v1435
  %v1967 = vunpack.c.l.b16 %v1436
  %v1968 = vunpack.c.l.b16 %v1437
  %v1969 = vunpack.c.h.b16 %v1437
  %v1970 = vunpack.c.l.b16 %v1438
  %v1971 = vunpack.c.l.b16 %v1439
  %v1972 = vunpack.c.h.b16 %v1439
  %v1973 = vunpack.c.l.b16 %v1440
  %v1974 = vunpack.c.l.b16 %v1441
  %v1975 = vunpack.c.h.b16 %v1441
  %v1976 = vunpack.c.l.b16 %v1442
  %v1977 = vunpack.c.l.b16 %v1443
  %v1978 = vunpack.c.h.b16 %v1443
  %v1979 = vunpack.c.l.b16 %v1444
  %v1980 = vunpack.c.l.b16 %v1445
  %v1981 = vunpack.c.h.b16 %v1445
  %v1982 = vunpack.c.l.b16 %v1446
  %v1983 = vunpack.c.l.b16 %v1447
  %v1984 = vunpack.c.h.b16 %v1447
  %v1985 = vunpack.c.l.b16 %v1448
  %v1986 = vunpack.c.l.b16 %v1449
  %v1987 = vunpack.c.h.b16 %v1449
  %v1988 = vunpack.c.l.b16 %v1450
  %v1989 = vunpack.c.l.b16 %v1451
  %v1990 = vunpack.c.h.b16 %v1451
  %v1991 = vunpack.c.l.b16 %v1452
  %v1992 = vunpack.c.l.b16 %v1453
  %v1993 = vunpack.c.h.b16 %v1453
  %v1994 = vunpack.c.l.b16 %v1454
  %v1995 = vunpack.c.l.b16 %v1455
  %v1996 = vunpack.c.h.b16 %v1455
  %v1997 = vunpack.c.l.b16 %v1456
  %v1998 = vunpack.c.l.b16 %v1457
  %v1999 = vunpack.c.h.b16 %v1457
  %v2000 = vunpack.c.l.b16 %v1458
  %v2001 = vunpack.c.l.b16 %v1459
  %v2002 = vunpack.c.h.b16 %v1459
  %v2003 = vunpack.c.l.b16 %v1460
  %v2004 = vunpack.c.l.b16 %v1461
  %v2005 = vunpack.c.h.b16 %v1461
  %v2006 = vunpack.c.l.b16 %v1462
  %v2007 = vunpack.c.l.b16 %v1463
  %v2008 = vunpack.c.h.b16 %v1463
  %v2009 = vunpack.c.l.b16 %v1464
  %v2010 = vunpack.c.l.b16 %v1465
  %v2011 = vunpack.c.h.b16 %v1465
  %v2012 = vunpack.c.l.b16 %v1466
  %v2013 = vunpack.c.l.b16 %v1467
  %v2014 = vunpack.c.h.b16 %v1467
  %v2015 = vunpack.c.l.b16 %v1468
  %v2016 = vunpack.c.l.b16 %v1469
  %v2017 = vunpack.c.h.b16 %v1469
  %v2018 = vunpack.c.l.b16 %v1470
  %v2019 = vunpack.c.l.b16 %v1471
  %v2020 = vunpack.c.h.b16 %v1471
  %v2021 = vunpack.c.l.b16 %v1472
  %v2022 = vunpack.c.l.b16 %v1473
  %v2023 = vunpack.c.h.b16 %v1473
  %v2024 = vunpack.c.l.b16 %v1474
  %v2025 = vunpack.c.l.b16 %v1475
  %v2026 = vunpack.c.h.b16 %v1475
  %v2027 = vunpack.c.l.b16 %v1476
  %v2028 = vunpack.c.l.b16 %v1477
  %v2029 = vunpack.c.h.b16 %v1477
  %v2030 = vunpack.c.l.b16 %v1478
  %v2031 = vunpack.c.l.b16 %v1479
  %v2032 = vunpack.c.h.b16 %v1479
  %v2033 = vunpack.c.l.b16 %v1480
  %v2034 = vunpack.c.l.b16 %v1481
  %v2035 = vunpack.c.h.b16 %v1481
  %v2036 = vunpack.c.l.b16 %v1482
  %v2037 = vunpack.c.l.b16 %v1483
  %v2038 = vunpack.c.h.b16 %v1483
  %v2039 = vunpack.c.l.b16 %v1484
  %v2040 = vunpack.c.l.b16 %v1485
  %v2041 = vunpack.c.h.b16 %v1485
  %v2042 = vunpack.c.l.b16 %v1486
  %v2043 = vunpack.c.l.b16 %v1487
  %v2044 = vunpack.c.h.b16 %v1487
  %v2045 = vunpack.c.l.b16 %v1488
  %v2046 = vunpack.c.l.b16 %v1489
  %v2047 = vunpack.c.h.b16 %v1489
  %v2048 = vunpack.c.l.b16 %v1490
  %v2049 = vunpack.c.l.b16 %v1491
  %v2050 = vunpack.c.h.b16 %v1491
  %v2051 = vunpack.c.l.b16 %v1492
  %v2052 = vunpack.c.l.b16 %v1493
  %v2053 = vunpack.c.h.b16 %v1493
  %v2054 = vunpack.c.l.b16 %v1494
  %v2055 = vunpack.c.l.b16 %v1495
  %v2056 = vunpack.c.h.b16 %v1495
  %v2057 = vunpack.c.l.b16 %v1496
  %v2058 = vunpack.c.l.b16 %v1497
  %v2059 = vunpack.c.h.b16 %v1497
  %v2060 = vunpack.c.l.b16 %v1498
  %v2061 = vunpack.c.l.b16 %v1499
  %v2062 = vunpack.c.h.b16 %v1499
  %v2063 = vunpack.c.l.b16 %v1500
  %v2064 = vunpack.c.l.b16 %v1501
  %v2065 = vunpack.c.h.b16 %v1501
  %v2066 = vunpack.c.l.b16 %v1502
  %v2067 = vunpack.c.l.b16 %v1503
  %v2068 = vunpack.c.h.b16 %v1503
  %v2069 = vunpack.c.l.b16 %v1504
  %v2070 = vunpack.c.l.b16 %v1505
  %v2071 = vunpack.c.h.b16 %v1505
  %v2072 = vunpack.c.l.b16 %v1506
  %v2073 = vunpack.c.l.b16 %v1507
  %v2074 = vunpack.c.h.b16 %v1507
  %v2075 = vunpack.c.l.b16 %v1508
  %v2076 = vunpack.c.l.b16 %v1509
  %v2077 = vunpack.c.h.b16 %v1509
  %v2078 = vunpack.c.l.b16 %v1510
  %v2079 = vunpack.c.l.b16 %v1511
  %v2080 = vunpack.c.h.b16 %v1511
  %v2081 = vunpack.c.l.b16 %v1512
  %v2082 = vunpack.c.l.b16 %v1513
  %v2083 = vunpack.c.h.b16 %v1513
  %v2084 = vunpack.c.l.b16 %v1514
  %v2085 = vunpack.c.l.b16 %v1515
  %v2086 = vunpack.c.h.b16 %v1515
  %v2087 = vunpack.c.l.b16 %v1516
  %v2088 = vunpack.c.l.b16 %v1517
  %v2089 = vunpack.c.h.b16 %v1517
  %v2090 = vunpack.c.l.b16 %v1518
  %v2091 = vunpack.c.l.b16 %v1519
  %v2092 = vunpack.c.h.b16 %v1519
  %v2093 = vunpack.c.l.b16 %v1520
  %v2094 = vunpack.c.l.b16 %v1521
  %v2095 = vunpack.c.h.b16 %v1521
  %v2096 = vunpack.c.l.b16 %v1522
  %v2097 = vunpack.c.l.b16 %v1523
  %v2098 = vunpack.c.h.b16 %v1523
  %v2099 = vunpack.c.l.b16 %v1524
  %v2100 = vunpack.c.l.b16 %v1525
  %v2101 = vunpack.c.h.b16 %v1525
  %v2102 = vunpack.c.l.b16 %v1526
  %v2103 = vunpack.c.l.b16 %v1527
  %v2104 = vunpack.c.h.b16 %v1527
  %v2105 = vunpack.c.l.b16 %v1528
  %v2106 = vpack.c.b16 %v1773, %v1770
  %v2107 = vpack.c.b16 %v1774, %v1771
  %v2108 = vpack.c.b16 %v1775, %v1772
  %v2109 = vpack.c.b16 %v1779, %v1776
  %v2110 = vpack.c.b16 %v1780, %v1777
  %v2111 = vpack.c.b16 %v1781, %v1778
  %v2112 = vpack.c.b16 %v1785, %v1782
  %v2113 = vpack.c.b16 %v1786, %v1783
  %v2114 = vpack.c.b16 %v1787, %v1784
  %v2115 = vpack.c.b16 %v1791, %v1788
  %v2116 = vpack.c.b16 %v1792, %v1789
  %v2117 = vpack.c.b16 %v1793, %v1790
  %v2118 = vpack.c.b16 %v1797, %v1794
  %v2119 = vpack.c.b16 %v1798, %v1795
  %v2120 = vpack.c.b16 %v1799, %v1796
  %v2121 = vpack.c.b16 %v1803, %v1800
  %v2122 = vpack.c.b16 %v1804, %v1801
  %v2123 = vpack.c.b16 %v1805, %v1802
  %v2124 = vpack.c.b16 %v1809, %v1806
  %v2125 = vpack.c.b16 %v1810, %v1807
  %v2126 = vpack.c.b16 %v1811, %v1808
  %v2127 = vpack.c.b16 %v1815, %v1812
  %v2128 = vpack.c.b16 %v1816, %v1813
  %v2129 = vpack.c.b16 %v1817, %v1814
  %v2130 = vpack.c.b16 %v1821, %v1818
  %v2131 = vpack.c.b16 %v1822, %v1819
  %v2132 = vpack.c.b16 %v1823, %v1820
  %v2133 = vpack.c.b16 %v1827, %v1824
  %v2134 = vpack.c.b16 %v1828, %v1825
  %v2135 = vpack.c.b16 %v1829, %v1826
  %v2136 = vpack.c.b16 %v1833, %v1830
  %v2137 = vpack.c.b16 %v1834, %v1831
  %v2138 = vpack.c.b16 %v1835, %v1832
  %v2139 = vpack.c.b16 %v1839, %v1836
  %v2140 = vpack.c.b16 %v1840, %v1837
  %v2141 = vpack.c.b16 %v1841, %v1838
  %v2142 = vpack.c.b16 %v1845, %v1842
  %v2143 = vpack.c.b16 %v1846, %v1843
  %v2144 = vpack.c.b16 %v1847, %v1844
  %v2145 = vpack.c.b16 %v1851, %v1848
  %v2146 = vpack.c.b16 %v1852, %v1849
  %v2147 = vpack.c.b16 %v1853, %v1850
  %v2148 = vpack.c.b16 %v1857, %v1854
  %v2149 = vpack.c.b16 %v1858, %v1855
  %v2150 = vpack.c.b16 %v1859, %v1856
  %v2151 = vpack.c.b16 %v1863, %v1860
  %v2152 = vpack.c.b16 %v1864, %v1861
  %v2153 = vpack.c.b16 %v1865, %v1862
  %v2154 = vpack.c.b16 %v1869, %v1866
  %v2155 = vpack.c.b16 %v1870, %v1867
  %v2156 = vpack.c.b16 %v1871, %v1868
  %v2157 = vpack.c.b16 %v1875, %v1872
  %v2158 = vpack.c.b16 %v1876, %v1873
  %v2159 = vpack.c.b16 %v1877, %v1874
  %v2160 = vpack.c.b16 %v1881, %v1878
  %v2161 = vpack.c.b16 %v1882, %v1879
  %v2162 = vpack.c.b16 %v1883, %v1880
  %v2163 = vpack.c.b16 %v1887, %v1884
  %v2164 = vpack.c.b16 %v1888, %v1885
  %v2165 = vpack.c.b16 %v1889, %v1886
  %v2166 = vpack.c.b16 %v1893, %v1890
  %v2167 = vpack.c.b16 %v1894, %v1891
  %v2168 = vpack.c.b16 %v1895, %v1892
  %v2169 = vpack.c.b16 %v1899, %v1896
  %v2170 = vpack.c.b16 %v1900, %v1897
  %v2171 = vpack.c.b16 %v1901, %v1898
  %v2172 = vpack.c.b16 %v1905, %v1902
  %v2173 = vpack.c.b16 %v1906, %v1903
  %v2174 = vpack.c.b16 %v1907, %v1904
  %v2175 = vpack.c.b16 %v1911, %v1908
  %v2176 = vpack.c.b16 %v1912, %v1909
  %v2177 = vpack.c.b16 %v1913, %v1910
  %v2178 = vpack.c.b16 %v1917, %v1914
  %v2179 = vpack.c.b16 %v1918, %v1915
  %v2180 = vpack.c.b16 %v1919, %v1916
  %v2181 = vpack.c.b16 %v1923, %v1920
  %v2182 = vpack.c.b16 %v1924, %v1921
  %v2183 = vpack.c.b16 %v1925, %v1922
  %v2184 = vpack.c.b16 %v1929, %v1926
  %v2185 = vpack.c.b16 %v1930, %v1927
  %v2186 = vpack.c.b16 %v1931, %v1928
  %v2187 = vpack.c.b16 %v1935, %v1932
  %v2188 = vpack.c.b16 %v1936, %v1933
  %v2189 = vpack.c.b16 %v1937, %v1934
  %v2190 = vpack.c.b16 %v1941, %v1938
  %v2191 = vpack.c.b16 %v1942, %v1939
  %v2192 = vpack.c.b16 %v1943, %v1940
  %v2193 = vpack.c.b16 %v1947, %v1944
  %v2194 = vpack.c.b16 %v1948, %v1945
  %v2195 = vpack.c.b16 %v1949, %v1946
  %v2196 = vpack.c.b16 %v1953, %v1950
  %v2197 = vpack.c.b16 %v1954, %v1951
  %v2198 = vpack.c.b16 %v1955, %v1952
  %v2199 = vpack.c.b16 %v1959, %v1956
  %v2200 = vpack.c.b16 %v1960, %v1957
  %v2201 = vpack.c.b16 %v1961, %v1958
  %v2202 = vpack.c.b16 %v1965, %v1962
  %v2203 = vpack.c.b16 %v1966, %v1963
  %v2204 = vpack.c.b16 %v1967, %v1964
  %v2205 = vpack.c.b16 %v1971, %v1968
  %v2206 = vpack.c.b16 %v1972, %v1969
  %v2207 = vpack.c.b16 %v1973, %v1970
  %v2208 = vpack.c.b16 %v1977, %v1974
  %v2209 = vpack.c.b16 %v1978, %v1975
  %v2210 = vpack.c.b16 %v1979, %v1976
  %v2211 = vpack.c.b16 %v1983, %v1980
  %v2212 = vpack.c.b16 %v1984, %v1981
  %v2213 = vpack.c.b16 %v1985, %v1982
  %v2214 = vpack.c.b16 %v1989, %v1986
  %v2215 = vpack.c.b16 %v1990, %v1987
  %v2216 = vpack.c.b16 %v1991, %v1988
  %v2217 = vpack.c.b16 %v1995, %v1992
  %v2218 = vpack.c.b16 %v1996, %v1993
  %v2219 = vpack.c.b16 %v1997, %v1994
  %v2220 = vpack.c.b16 %v2001, %v1998
  %v2221 = vpack.c.b16 %v2002, %v1999
  %v2222 = vpack.c.b16 %v2003, %v2000
  %v2223 = vpack.c.b16 %v2007, %v2004
  %v2224 = vpack.c.b16 %v2008, %v2005
  %v2225 = vpack.c.b16 %v2009, %v2006
  %v2226 = vpack.c.b16 %v2013, %v2010
  %v2227 = vpack.c.b16 %v2014, %v2011
  %v2228 = vpack.c.b16 %v2015, %v2012
  %v2229 = vpack.c.b16 %v2019, %v2016
  %v2230 = vpack.c.b16 %v2020, %v2017
  %v2231 = vpack.c.b16 %v2021, %v2018
  %v2232 = vpack.c.b16 %v2025, %v2022
  %v2233 = vpack.c.b16 %v2026, %v2023
  %v2234 = vpack.c.b16 %v2027, %v2024
  %v2235 = vpack.c.b16 %v2031, %v2028
  %v2236 = vpack.c.b16 %v2032, %v2029
  %v2237 = vpack.c.b16 %v2033, %v2030
  %v2238 = vpack.c.b16 %v2037, %v2034
  %v2239 = vpack.c.b16 %v2038, %v2035
  %v2240 = vpack.c.b16 %v2039, %v2036
  %v2241 = vpack.c.b16 %v2043, %v2040
  %v2242 = vpack.c.b16 %v2044, %v2041
  %v2243 = vpack.c.b16 %v2045, %v2042
  %v2244 = vpack.c.b16 %v2049, %v2046
  %v2245 = vpack.c.b16 %v2050, %v2047
  %v2246 = vpack.c.b16 %v2051, %v2048
  %v2247 = vpack.c.b16 %v2055, %v2052
  %v2248 = vpack.c.b16 %v2056, %v2053
  %v2249 = vpack.c.b16 %v2057, %v2054
  %v2250 = vpack.c.b16 %v2061, %v2058
  %v2251 = vpack.c.b16 %v2062, %v2059
  %v2252 = vpack.c.b16 %v2063, %v2060
  %v2253 = vpack.c.b16 %v2067, %v2064
  %v2254 = vpack.c.b16 %v2068, %v2065
  %v2255 = vpack.c.b16 %v2069, %v2066
  %v2256 = vpack.c.b16 %v2073, %v2070
  %v2257 = vpack.c.b16 %v2074, %v2071
  %v2258 = vpack.c.b16 %v2075, %v2072
  %v2259 = vpack.c.b16 %v2079, %v2076
  %v2260 = vpack.c.b16 %v2080, %v2077
  %v2261 = vpack.c.b16 %v2081, %v2078
  %v2262 = vpack.c.b16 %v2085, %v2082
  %v2263 = vpack.c.b16 %v2086, %v2083
  %v2264 = vpack.c.b16 %v2087, %v2084
  %v2265 = vpack.c.b16 %v2091, %v2088
  %v2266 = vpack.c.b16 %v2092, %v2089
  %v2267 = vpack.c.b16 %v2093, %v2090
  %v2268 = vpack.c.b16 %v2097, %v2094
  %v2269 = vpack.c.b16 %v2098, %v2095
  %v2270 = vpack.c.b16 %v2099, %v2096
  %v2271 = vpack.c.b16 %v2103, %v2100
  %v2272 = vpack.c.b16 %v2104, %v2101
  %v2273 = vpack.c.b16 %v2105, %v2102
  %2442 = vmatprep.subr.bf16.mxu0 %v2128
  %2443 = vmatpush1.bf16.msra.mxu0 %v2127
  %2444 = vmatprep.subr.bf16.mxu0 %v2125
  %2445 = vmatpush1.bf16.msra.mxu0 %v2124
  %2446 = vmatprep.subr.bf16.mxu0 %v2122
  %2447 = vmatpush1.bf16.msra.mxu0 %v2121
  %2448 = vmatprep.subr.bf16.mxu0 %v2119
  %2449 = vmatpush1.bf16.msra.mxu0 %v2118
  %2450 = vmatprep.subr.bf16.mxu0 %v2116
  %2451 = vmatpush1.bf16.msra.mxu0 %v2115
  %2452 = vmatprep.subr.bf16.mxu0 %v2113
  %2453 = vmatpush1.bf16.msra.mxu0 %v2112
  %2454 = vmatprep.subr.bf16.mxu0 %v2110
  %2455 = vmatpush1.bf16.msra.mxu0 %v2109
  %2456 = vmatprep.subr.bf16.mxu0 %v2107
  %2457 = vmatpush1.bf16.msra.mxu0 %v2106
  %2458 = vmatprep.subr.bf16.mxu0 %v2152
  %2459 = vmatpush2.bf16.msra.mxu0 %v2151
  %2460 = vmatprep.subr.bf16.mxu0 %v2149
  %2461 = vmatpush2.bf16.msra.mxu0 %v2148
  %2462 = vmatprep.subr.bf16.mxu0 %v2146
  %2463 = vmatpush2.bf16.msra.mxu0 %v2145
  %2464 = vmatprep.subr.bf16.mxu0 %v2143
  %2465 = vmatpush2.bf16.msra.mxu0 %v2142
  %2466 = vmatprep.subr.bf16.mxu0 %v2140
  %2467 = vmatpush2.bf16.msra.mxu0 %v2139
  %2468 = vmatprep.subr.bf16.mxu0 %v2137
  %2469 = vmatpush2.bf16.msra.mxu0 %v2136
  %2470 = vmatprep.subr.bf16.mxu0 %v2134
  %2471 = vmatpush2.bf16.msra.mxu0 %v2133
  %2472 = vmatprep.subr.bf16.mxu0 %v2131
  %2473 = vmatpush2.bf16.msra.mxu0 %v2130
  %2474 = vmatprep.mubr.bf16.mxu0 %v1194
  %2475 = vmatmul.mubr.bf16.gmra.mxu0 %v1193
  %v2476 = vpop.f32.mrf.mxu0
  %v2477 = vadd.f32 %v1534, %v2476
  %v2478 = vpop.f32.mrf.mxu0
  %v2479 = vadd.f32 %v1538, %v2478
  %v2480 = vpop.f32.mrf.mxu0
  %v2481 = vadd.f32 %v1534, %v2480
  %v2482 = vpop.f32.mrf.mxu0
  %v2483 = vadd.f32 %v1538, %v2482
  %2484 = vmatprep.mubr.bf16.mxu0 %v1201
  %2485 = vmatmul.mubr.bf16.gmra.mxu0 %v1200
  %v2486 = vpop.f32.mrf.mxu0
  %v2487 = vadd.f32 %v1534, %v2486
  %v2488 = vpop.f32.mrf.mxu0
  %v2489 = vadd.f32 %v1538, %v2488
  %v2490 = vpop.f32.mrf.mxu0
  %v2491 = vadd.f32 %v1534, %v2490
  %v2492 = vpop.f32.mrf.mxu0
  %v2493 = vadd.f32 %v1538, %v2492
  %2494 = vmatprep.mubr.bf16.mxu0 %v1208
  %2495 = vmatmul.mubr.bf16.gmra.mxu0 %v1207
  %v2496 = vpop.f32.mrf.mxu0
  %v2497 = vadd.f32 %v1534, %v2496
  %v2498 = vpop.f32.mrf.mxu0
  %v2499 = vadd.f32 %v1538, %v2498
  %v2500 = vpop.f32.mrf.mxu0
  %v2501 = vadd.f32 %v1534, %v2500
  %v2502 = vpop.f32.mrf.mxu0
  %v2503 = vadd.f32 %v1538, %v2502
  %2504 = vmatprep.mubr.bf16.mxu0 %v1215
  %2505 = vmatmul.mubr.bf16.gmra.mxu0 %v1214
  %v2506 = vpop.f32.mrf.mxu0
  %v2507 = vadd.f32 %v1534, %v2506
  %v2508 = vpop.f32.mrf.mxu0
  %v2509 = vadd.f32 %v1538, %v2508
  %v2510 = vpop.f32.mrf.mxu0
  %v2511 = vadd.f32 %v1534, %v2510
  %v2512 = vpop.f32.mrf.mxu0
  %v2513 = vadd.f32 %v1538, %v2512
  %2514 = vmatprep.mubr.bf16.mxu0 %v1222
  %2515 = vmatmul.mubr.bf16.gmra.mxu0 %v1221
  %v2516 = vpop.f32.mrf.mxu0
  %v2517 = vadd.f32 %v1534, %v2516
  %v2518 = vpop.f32.mrf.mxu0
  %v2519 = vadd.f32 %v1538, %v2518
  %v2520 = vpop.f32.mrf.mxu0
  %v2521 = vadd.f32 %v1534, %v2520
  %v2522 = vpop.f32.mrf.mxu0
  %v2523 = vadd.f32 %v1538, %v2522
  %2524 = vmatprep.mubr.bf16.mxu0 %v1229
  %2525 = vmatmul.mubr.bf16.gmra.mxu0 %v1228
  %v2526 = vpop.f32.mrf.mxu0
  %v2527 = vadd.f32 %v1534, %v2526
  %v2528 = vpop.f32.mrf.mxu0
  %v2529 = vadd.f32 %v1538, %v2528
  %v2530 = vpop.f32.mrf.mxu0
  %v2531 = vadd.f32 %v1534, %v2530
  %v2532 = vpop.f32.mrf.mxu0
  %v2533 = vadd.f32 %v1538, %v2532
  %2534 = vmatprep.mubr.bf16.mxu0 %v1236
  %2535 = vmatmul.mubr.bf16.gmra.mxu0 %v1235
  %v2536 = vpop.f32.mrf.mxu0
  %v2537 = vadd.f32 %v1534, %v2536
  %v2538 = vpop.f32.mrf.mxu0
  %v2539 = vadd.f32 %v1538, %v2538
  %v2540 = vpop.f32.mrf.mxu0
  %v2541 = vadd.f32 %v1534, %v2540
  %v2542 = vpop.f32.mrf.mxu0
  %v2543 = vadd.f32 %v1538, %v2542
  %2544 = vmatprep.mubr.bf16.mxu0 %v1243
  %2545 = vmatmul.mubr.bf16.gmra.mxu0 %v1242
  %v2546 = vpop.f32.mrf.mxu0
  %v2547 = vadd.f32 %v1534, %v2546
  %v2548 = vpop.f32.mrf.mxu0
  %v2549 = vadd.f32 %v1538, %v2548
  %v2550 = vpop.f32.mrf.mxu0
  %v2551 = vadd.f32 %v1534, %v2550
  %v2552 = vpop.f32.mrf.mxu0
  %v2553 = vadd.f32 %v1538, %v2552
  %2554 = vmatprep.mubr.bf16.mxu0 %v1250
  %2555 = vmatmul.mubr.bf16.gmra.mxu0 %v1249
  %v2556 = vpop.f32.mrf.mxu0
  %v2557 = vadd.f32 %v1534, %v2556
  %v2558 = vpop.f32.mrf.mxu0
  %v2559 = vadd.f32 %v1538, %v2558
  %v2560 = vpop.f32.mrf.mxu0
  %v2561 = vadd.f32 %v1534, %v2560
  %v2562 = vpop.f32.mrf.mxu0
  %v2563 = vadd.f32 %v1538, %v2562
  %2564 = vmatprep.mubr.bf16.mxu0 %v1257
  %2565 = vmatmul.mubr.bf16.gmra.mxu0 %v1256
  %v2566 = vpop.f32.mrf.mxu0
  %v2567 = vadd.f32 %v1534, %v2566
  %v2568 = vpop.f32.mrf.mxu0
  %v2569 = vadd.f32 %v1538, %v2568
  %v2570 = vpop.f32.mrf.mxu0
  %v2571 = vadd.f32 %v1534, %v2570
  %v2572 = vpop.f32.mrf.mxu0
  %v2573 = vadd.f32 %v1538, %v2572
  %2574 = vmatprep.mubr.bf16.mxu0 %v1264
  %2575 = vmatmul.mubr.bf16.gmra.mxu0 %v1263
  %v2576 = vpop.f32.mrf.mxu0
  %v2577 = vadd.f32 %v1534, %v2576
  %v2578 = vpop.f32.mrf.mxu0
  %v2579 = vadd.f32 %v1538, %v2578
  %v2580 = vpop.f32.mrf.mxu0
  %v2581 = vadd.f32 %v1534, %v2580
  %v2582 = vpop.f32.mrf.mxu0
  %v2583 = vadd.f32 %v1538, %v2582
  %2584 = vmatprep.mubr.bf16.mxu0 %v1271
  %2585 = vmatmul.mubr.bf16.gmra.mxu0 %v1270
  %v2586 = vpop.f32.mrf.mxu0
  %v2587 = vadd.f32 %v1534, %v2586
  %v2588 = vpop.f32.mrf.mxu0
  %v2589 = vadd.f32 %v1538, %v2588
  %v2590 = vpop.f32.mrf.mxu0
  %v2591 = vadd.f32 %v1534, %v2590
  %v2592 = vpop.f32.mrf.mxu0
  %v2593 = vadd.f32 %v1538, %v2592
  %2594 = vmatprep.mubr.bf16.mxu0 %v1278
  %2595 = vmatmul.mubr.bf16.gmra.mxu0 %v1277
  %v2596 = vpop.f32.mrf.mxu0
  %v2597 = vadd.f32 %v1534, %v2596
  %v2598 = vpop.f32.mrf.mxu0
  %v2599 = vadd.f32 %v1538, %v2598
  %v2600 = vpop.f32.mrf.mxu0
  %v2601 = vadd.f32 %v1534, %v2600
  %v2602 = vpop.f32.mrf.mxu0
  %v2603 = vadd.f32 %v1538, %v2602
  %2604 = vmatprep.mubr.bf16.mxu0 %v1285
  %2605 = vmatmul.mubr.bf16.gmra.mxu0 %v1284
  %v2606 = vpop.f32.mrf.mxu0
  %v2607 = vadd.f32 %v1534, %v2606
  %v2608 = vpop.f32.mrf.mxu0
  %v2609 = vadd.f32 %v1538, %v2608
  %v2610 = vpop.f32.mrf.mxu0
  %v2611 = vadd.f32 %v1534, %v2610
  %v2612 = vpop.f32.mrf.mxu0
  %v2613 = vadd.f32 %v1538, %v2612
  %2614 = vmatprep.mubr.bf16.mxu0 %v1292
  %2615 = vmatmul.mubr.bf16.gmra.mxu0 %v1291
  %v2616 = vpop.f32.mrf.mxu0
  %v2617 = vadd.f32 %v1534, %v2616
  %v2618 = vpop.f32.mrf.mxu0
  %v2619 = vadd.f32 %v1538, %v2618
  %v2620 = vpop.f32.mrf.mxu0
  %v2621 = vadd.f32 %v1534, %v2620
  %v2622 = vpop.f32.mrf.mxu0
  %v2623 = vadd.f32 %v1538, %v2622
  %2624 = vmatprep.mubr.bf16.mxu0 %v1299
  %2625 = vmatmul.mubr.bf16.gmra.mxu0 %v1298
  %v2626 = vpop.f32.mrf.mxu0
  %v2627 = vadd.f32 %v1534, %v2626
  %v2628 = vpop.f32.mrf.mxu0
  %v2629 = vadd.f32 %v1538, %v2628
  %v2630 = vpop.f32.mrf.mxu0
  %v2631 = vadd.f32 %v1534, %v2630
  %v2632 = vpop.f32.mrf.mxu0
  %v2633 = vadd.f32 %v1538, %v2632
  %2634 = vdwg.mxu0
  %2635 = vmatprep.subr.bf16.mxu0 %v2176
  %2636 = vmatpush1.bf16.msra.mxu0 %v2175
  %2637 = vmatprep.subr.bf16.mxu0 %v2173
  %2638 = vmatpush1.bf16.msra.mxu0 %v2172
  %2639 = vmatprep.subr.bf16.mxu0 %v2170
  %2640 = vmatpush1.bf16.msra.mxu0 %v2169
  %2641 = vmatprep.subr.bf16.mxu0 %v2167
  %2642 = vmatpush1.bf16.msra.mxu0 %v2166
  %2643 = vmatprep.subr.bf16.mxu0 %v2164
  %2644 = vmatpush1.bf16.msra.mxu0 %v2163
  %2645 = vmatprep.subr.bf16.mxu0 %v2161
  %2646 = vmatpush1.bf16.msra.mxu0 %v2160
  %2647 = vmatprep.subr.bf16.mxu0 %v2158
  %2648 = vmatpush1.bf16.msra.mxu0 %v2157
  %2649 = vmatprep.subr.bf16.mxu0 %v2155
  %2650 = vmatpush1.bf16.msra.mxu0 %v2154
  %2651 = vmatprep.subr.bf16.mxu0 %v2200
  %2652 = vmatpush2.bf16.msra.mxu0 %v2199
  %2653 = vmatprep.subr.bf16.mxu0 %v2197
  %2654 = vmatpush2.bf16.msra.mxu0 %v2196
  %2655 = vmatprep.subr.bf16.mxu0 %v2194
  %2656 = vmatpush2.bf16.msra.mxu0 %v2193
  %2657 = vmatprep.subr.bf16.mxu0 %v2191
  %2658 = vmatpush2.bf16.msra.mxu0 %v2190
  %2659 = vmatprep.subr.bf16.mxu0 %v2188
  %2660 = vmatpush2.bf16.msra.mxu0 %v2187
  %2661 = vmatprep.subr.bf16.mxu0 %v2185
  %2662 = vmatpush2.bf16.msra.mxu0 %v2184
  %2663 = vmatprep.subr.bf16.mxu0 %v2182
  %2664 = vmatpush2.bf16.msra.mxu0 %v2181
  %2665 = vmatprep.subr.bf16.mxu0 %v2179
  %2666 = vmatpush2.bf16.msra.mxu0 %v2178
  %2667 = vmatprep.mubr.bf16.mxu0 %v1196
  %2668 = vmatmul.mubr.bf16.gmra.mxu0 %v1195
  %v2669 = vpop.f32.mrf.mxu0
  %v2670 = vadd.f32 %v2477, %v2669
  %v2671 = vpop.f32.mrf.mxu0
  %v2672 = vadd.f32 %v2479, %v2671
  %v2673 = vpop.f32.mrf.mxu0
  %v2674 = vadd.f32 %v2481, %v2673
  %v2675 = vpop.f32.mrf.mxu0
  %v2676 = vadd.f32 %v2483, %v2675
  %2677 = vmatprep.mubr.bf16.mxu0 %v1203
  %2678 = vmatmul.mubr.bf16.gmra.mxu0 %v1202
  %v2679 = vpop.f32.mrf.mxu0
  %v2680 = vadd.f32 %v2487, %v2679
  %v2681 = vpop.f32.mrf.mxu0
  %v2682 = vadd.f32 %v2489, %v2681
  %v2683 = vpop.f32.mrf.mxu0
  %v2684 = vadd.f32 %v2491, %v2683
  %v2685 = vpop.f32.mrf.mxu0
  %v2686 = vadd.f32 %v2493, %v2685
  %2687 = vmatprep.mubr.bf16.mxu0 %v1210
  %2688 = vmatmul.mubr.bf16.gmra.mxu0 %v1209
  %v2689 = vpop.f32.mrf.mxu0
  %v2690 = vadd.f32 %v2497, %v2689
  %v2691 = vpop.f32.mrf.mxu0
  %v2692 = vadd.f32 %v2499, %v2691
  %v2693 = vpop.f32.mrf.mxu0
  %v2694 = vadd.f32 %v2501, %v2693
  %v2695 = vpop.f32.mrf.mxu0
  %v2696 = vadd.f32 %v2503, %v2695
  %2697 = vmatprep.mubr.bf16.mxu0 %v1217
  %2698 = vmatmul.mubr.bf16.gmra.mxu0 %v1216
  %v2699 = vpop.f32.mrf.mxu0
  %v2700 = vadd.f32 %v2507, %v2699
  %v2701 = vpop.f32.mrf.mxu0
  %v2702 = vadd.f32 %v2509, %v2701
  %v2703 = vpop.f32.mrf.mxu0
  %v2704 = vadd.f32 %v2511, %v2703
  %v2705 = vpop.f32.mrf.mxu0
  %v2706 = vadd.f32 %v2513, %v2705
  %2707 = vmatprep.mubr.bf16.mxu0 %v1224
  %2708 = vmatmul.mubr.bf16.gmra.mxu0 %v1223
  %v2709 = vpop.f32.mrf.mxu0
  %v2710 = vadd.f32 %v2517, %v2709
  %v2711 = vpop.f32.mrf.mxu0
  %v2712 = vadd.f32 %v2519, %v2711
  %v2713 = vpop.f32.mrf.mxu0
  %v2714 = vadd.f32 %v2521, %v2713
  %v2715 = vpop.f32.mrf.mxu0
  %v2716 = vadd.f32 %v2523, %v2715
  %2717 = vmatprep.mubr.bf16.mxu0 %v1231
  %2718 = vmatmul.mubr.bf16.gmra.mxu0 %v1230
  %v2719 = vpop.f32.mrf.mxu0
  %v2720 = vadd.f32 %v2527, %v2719
  %v2721 = vpop.f32.mrf.mxu0
  %v2722 = vadd.f32 %v2529, %v2721
  %v2723 = vpop.f32.mrf.mxu0
  %v2724 = vadd.f32 %v2531, %v2723
  %v2725 = vpop.f32.mrf.mxu0
  %v2726 = vadd.f32 %v2533, %v2725
  %2727 = vmatprep.mubr.bf16.mxu0 %v1238
  %2728 = vmatmul.mubr.bf16.gmra.mxu0 %v1237
  %v2729 = vpop.f32.mrf.mxu0
  %v2730 = vadd.f32 %v2537, %v2729
  %v2731 = vpop.f32.mrf.mxu0
  %v2732 = vadd.f32 %v2539, %v2731
  %v2733 = vpop.f32.mrf.mxu0
  %v2734 = vadd.f32 %v2541, %v2733
  %v2735 = vpop.f32.mrf.mxu0
  %v2736 = vadd.f32 %v2543, %v2735
  %2737 = vmatprep.mubr.bf16.mxu0 %v1245
  %2738 = vmatmul.mubr.bf16.gmra.mxu0 %v1244
  %v2739 = vpop.f32.mrf.mxu0
  %v2740 = vadd.f32 %v2547, %v2739
  %v2741 = vpop.f32.mrf.mxu0
  %v2742 = vadd.f32 %v2549, %v2741
  %v2743 = vpop.f32.mrf.mxu0
  %v2744 = vadd.f32 %v2551, %v2743
  %v2745 = vpop.f32.mrf.mxu0
  %v2746 = vadd.f32 %v2553, %v2745
  %2747 = vmatprep.mubr.bf16.mxu0 %v1252
  %2748 = vmatmul.mubr.bf16.gmra.mxu0 %v1251
  %v2749 = vpop.f32.mrf.mxu0
  %v2750 = vadd.f32 %v2557, %v2749
  %v2751 = vpop.f32.mrf.mxu0
  %v2752 = vadd.f32 %v2559, %v2751
  %v2753 = vpop.f32.mrf.mxu0
  %v2754 = vadd.f32 %v2561, %v2753
  %v2755 = vpop.f32.mrf.mxu0
  %v2756 = vadd.f32 %v2563, %v2755
  %2757 = vmatprep.mubr.bf16.mxu0 %v1259
  %2758 = vmatmul.mubr.bf16.gmra.mxu0 %v1258
  %v2759 = vpop.f32.mrf.mxu0
  %v2760 = vadd.f32 %v2567, %v2759
  %v2761 = vpop.f32.mrf.mxu0
  %v2762 = vadd.f32 %v2569, %v2761
  %v2763 = vpop.f32.mrf.mxu0
  %v2764 = vadd.f32 %v2571, %v2763
  %v2765 = vpop.f32.mrf.mxu0
  %v2766 = vadd.f32 %v2573, %v2765
  %2767 = vmatprep.mubr.bf16.mxu0 %v1266
  %2768 = vmatmul.mubr.bf16.gmra.mxu0 %v1265
  %v2769 = vpop.f32.mrf.mxu0
  %v2770 = vadd.f32 %v2577, %v2769
  %v2771 = vpop.f32.mrf.mxu0
  %v2772 = vadd.f32 %v2579, %v2771
  %v2773 = vpop.f32.mrf.mxu0
  %v2774 = vadd.f32 %v2581, %v2773
  %v2775 = vpop.f32.mrf.mxu0
  %v2776 = vadd.f32 %v2583, %v2775
  %2777 = vmatprep.mubr.bf16.mxu0 %v1273
  %2778 = vmatmul.mubr.bf16.gmra.mxu0 %v1272
  %v2779 = vpop.f32.mrf.mxu0
  %v2780 = vadd.f32 %v2587, %v2779
  %v2781 = vpop.f32.mrf.mxu0
  %v2782 = vadd.f32 %v2589, %v2781
  %v2783 = vpop.f32.mrf.mxu0
  %v2784 = vadd.f32 %v2591, %v2783
  %v2785 = vpop.f32.mrf.mxu0
  %v2786 = vadd.f32 %v2593, %v2785
  %2787 = vmatprep.mubr.bf16.mxu0 %v1280
  %2788 = vmatmul.mubr.bf16.gmra.mxu0 %v1279
  %v2789 = vpop.f32.mrf.mxu0
  %v2790 = vadd.f32 %v2597, %v2789
  %v2791 = vpop.f32.mrf.mxu0
  %v2792 = vadd.f32 %v2599, %v2791
  %v2793 = vpop.f32.mrf.mxu0
  %v2794 = vadd.f32 %v2601, %v2793
  %v2795 = vpop.f32.mrf.mxu0
  %v2796 = vadd.f32 %v2603, %v2795
  %2797 = vmatprep.mubr.bf16.mxu0 %v1287
  %2798 = vmatmul.mubr.bf16.gmra.mxu0 %v1286
  %v2799 = vpop.f32.mrf.mxu0
  %v2800 = vadd.f32 %v2607, %v2799
  %v2801 = vpop.f32.mrf.mxu0
  %v2802 = vadd.f32 %v2609, %v2801
  %v2803 = vpop.f32.mrf.mxu0
  %v2804 = vadd.f32 %v2611, %v2803
  %v2805 = vpop.f32.mrf.mxu0
  %v2806 = vadd.f32 %v2613, %v2805
  %2807 = vmatprep.mubr.bf16.mxu0 %v1294
  %2808 = vmatmul.mubr.bf16.gmra.mxu0 %v1293
  %v2809 = vpop.f32.mrf.mxu0
  %v2810 = vadd.f32 %v2617, %v2809
  %v2811 = vpop.f32.mrf.mxu0
  %v2812 = vadd.f32 %v2619, %v2811
  %v2813 = vpop.f32.mrf.mxu0
  %v2814 = vadd.f32 %v2621, %v2813
  %v2815 = vpop.f32.mrf.mxu0
  %v2816 = vadd.f32 %v2623, %v2815
  %2817 = vmatprep.mubr.bf16.mxu0 %v1301
  %2818 = vmatmul.mubr.bf16.gmra.mxu0 %v1300
  %v2819 = vpop.f32.mrf.mxu0
  %v2820 = vadd.f32 %v2627, %v2819
  %v2821 = vpop.f32.mrf.mxu0
  %v2822 = vadd.f32 %v2629, %v2821
  %v2823 = vpop.f32.mrf.mxu0
  %v2824 = vadd.f32 %v2631, %v2823
  %v2825 = vpop.f32.mrf.mxu0
  %v2826 = vadd.f32 %v2633, %v2825
  %2827 = vdwg.mxu0
  %2828 = vmatprep.subr.bf16.mxu0 %v2224
  %2829 = vmatpush1.bf16.msra.mxu0 %v2223
  %2830 = vmatprep.subr.bf16.mxu0 %v2221
  %2831 = vmatpush1.bf16.msra.mxu0 %v2220
  %2832 = vmatprep.subr.bf16.mxu0 %v2218
  %2833 = vmatpush1.bf16.msra.mxu0 %v2217
  %2834 = vmatprep.subr.bf16.mxu0 %v2215
  %2835 = vmatpush1.bf16.msra.mxu0 %v2214
  %2836 = vmatprep.subr.bf16.mxu0 %v2212
  %2837 = vmatpush1.bf16.msra.mxu0 %v2211
  %2838 = vmatprep.subr.bf16.mxu0 %v2209
  %2839 = vmatpush1.bf16.msra.mxu0 %v2208
  %2840 = vmatprep.subr.bf16.mxu0 %v2206
  %2841 = vmatpush1.bf16.msra.mxu0 %v2205
  %2842 = vmatprep.subr.bf16.mxu0 %v2203
  %2843 = vmatpush1.bf16.msra.mxu0 %v2202
  %2844 = vmatprep.subr.bf16.mxu0 %v2248
  %2845 = vmatpush2.bf16.msra.mxu0 %v2247
  %2846 = vmatprep.subr.bf16.mxu0 %v2245
  %2847 = vmatpush2.bf16.msra.mxu0 %v2244
  %2848 = vmatprep.subr.bf16.mxu0 %v2242
  %2849 = vmatpush2.bf16.msra.mxu0 %v2241
  %2850 = vmatprep.subr.bf16.mxu0 %v2239
  %2851 = vmatpush2.bf16.msra.mxu0 %v2238
  %2852 = vmatprep.subr.bf16.mxu0 %v2236
  %2853 = vmatpush2.bf16.msra.mxu0 %v2235
  %2854 = vmatprep.subr.bf16.mxu0 %v2233
  %2855 = vmatpush2.bf16.msra.mxu0 %v2232
  %2856 = vmatprep.subr.bf16.mxu0 %v2230
  %2857 = vmatpush2.bf16.msra.mxu0 %v2229
  %2858 = vmatprep.subr.bf16.mxu0 %v2227
  %2859 = vmatpush2.bf16.msra.mxu0 %v2226
  %2860 = vmatprep.mubr.bf16.mxu0 %v1198
  %2861 = vmatmul.mubr.bf16.gmra.mxu0 %v1197
  %v2862 = vpop.f32.mrf.mxu0
  %v2863 = vadd.f32 %v2670, %v2862
  %v2864 = vpop.f32.mrf.mxu0
  %v2865 = vadd.f32 %v2672, %v2864
  %v2866 = vpop.f32.mrf.mxu0
  %v2867 = vadd.f32 %v2674, %v2866
  %v2868 = vpop.f32.mrf.mxu0
  %v2869 = vadd.f32 %v2676, %v2868
  %2870 = vmatprep.mubr.bf16.mxu0 %v1205
  %2871 = vmatmul.mubr.bf16.gmra.mxu0 %v1204
  %v2872 = vpop.f32.mrf.mxu0
  %v2873 = vadd.f32 %v2680, %v2872
  %v2874 = vpop.f32.mrf.mxu0
  %v2875 = vadd.f32 %v2682, %v2874
  %v2876 = vpop.f32.mrf.mxu0
  %v2877 = vadd.f32 %v2684, %v2876
  %v2878 = vpop.f32.mrf.mxu0
  %v2879 = vadd.f32 %v2686, %v2878
  %2880 = vmatprep.mubr.bf16.mxu0 %v1212
  %2881 = vmatmul.mubr.bf16.gmra.mxu0 %v1211
  %v2882 = vpop.f32.mrf.mxu0
  %v2883 = vadd.f32 %v2690, %v2882
  %v2884 = vpop.f32.mrf.mxu0
  %v2885 = vadd.f32 %v2692, %v2884
  %v2886 = vpop.f32.mrf.mxu0
  %v2887 = vadd.f32 %v2694, %v2886
  %v2888 = vpop.f32.mrf.mxu0
  %v2889 = vadd.f32 %v2696, %v2888
  %2890 = vmatprep.mubr.bf16.mxu0 %v1219
  %2891 = vmatmul.mubr.bf16.gmra.mxu0 %v1218
  %v2892 = vpop.f32.mrf.mxu0
  %v2893 = vadd.f32 %v2700, %v2892
  %v2894 = vpop.f32.mrf.mxu0
  %v2895 = vadd.f32 %v2702, %v2894
  %v2896 = vpop.f32.mrf.mxu0
  %v2897 = vadd.f32 %v2704, %v2896
  %v2898 = vpop.f32.mrf.mxu0
  %v2899 = vadd.f32 %v2706, %v2898
  %2900 = vmatprep.mubr.bf16.mxu0 %v1226
  %2901 = vmatmul.mubr.bf16.gmra.mxu0 %v1225
  %v2902 = vpop.f32.mrf.mxu0
  %v2903 = vadd.f32 %v2710, %v2902
  %v2904 = vpop.f32.mrf.mxu0
  %v2905 = vadd.f32 %v2712, %v2904
  %v2906 = vpop.f32.mrf.mxu0
  %v2907 = vadd.f32 %v2714, %v2906
  %v2908 = vpop.f32.mrf.mxu0
  %v2909 = vadd.f32 %v2716, %v2908
  %2910 = vmatprep.mubr.bf16.mxu0 %v1233
  %2911 = vmatmul.mubr.bf16.gmra.mxu0 %v1232
  %v2912 = vpop.f32.mrf.mxu0
  %v2913 = vadd.f32 %v2720, %v2912
  %v2914 = vpop.f32.mrf.mxu0
  %v2915 = vadd.f32 %v2722, %v2914
  %v2916 = vpop.f32.mrf.mxu0
  %v2917 = vadd.f32 %v2724, %v2916
  %v2918 = vpop.f32.mrf.mxu0
  %v2919 = vadd.f32 %v2726, %v2918
  %2920 = vmatprep.mubr.bf16.mxu0 %v1240
  %2921 = vmatmul.mubr.bf16.gmra.mxu0 %v1239
  %v2922 = vpop.f32.mrf.mxu0
  %v2923 = vadd.f32 %v2730, %v2922
  %v2924 = vpop.f32.mrf.mxu0
  %v2925 = vadd.f32 %v2732, %v2924
  %v2926 = vpop.f32.mrf.mxu0
  %v2927 = vadd.f32 %v2734, %v2926
  %v2928 = vpop.f32.mrf.mxu0
  %v2929 = vadd.f32 %v2736, %v2928
  %2930 = vmatprep.mubr.bf16.mxu0 %v1247
  %2931 = vmatmul.mubr.bf16.gmra.mxu0 %v1246
  %v2932 = vpop.f32.mrf.mxu0
  %v2933 = vadd.f32 %v2740, %v2932
  %v2934 = vpop.f32.mrf.mxu0
  %v2935 = vadd.f32 %v2742, %v2934
  %v2936 = vpop.f32.mrf.mxu0
  %v2937 = vadd.f32 %v2744, %v2936
  %v2938 = vpop.f32.mrf.mxu0
  %v2939 = vadd.f32 %v2746, %v2938
  %2940 = vmatprep.mubr.bf16.mxu0 %v1254
  %2941 = vmatmul.mubr.bf16.gmra.mxu0 %v1253
  %v2942 = vpop.f32.mrf.mxu0
  %v2943 = vadd.f32 %v2750, %v2942
  %v2944 = vpop.f32.mrf.mxu0
  %v2945 = vadd.f32 %v2752, %v2944
  %v2946 = vpop.f32.mrf.mxu0
  %v2947 = vadd.f32 %v2754, %v2946
  %v2948 = vpop.f32.mrf.mxu0
  %v2949 = vadd.f32 %v2756, %v2948
  %2950 = vmatprep.mubr.bf16.mxu0 %v1261
  %2951 = vmatmul.mubr.bf16.gmra.mxu0 %v1260
  %v2952 = vpop.f32.mrf.mxu0
  %v2953 = vadd.f32 %v2760, %v2952
  %v2954 = vpop.f32.mrf.mxu0
  %v2955 = vadd.f32 %v2762, %v2954
  %v2956 = vpop.f32.mrf.mxu0
  %v2957 = vadd.f32 %v2764, %v2956
  %v2958 = vpop.f32.mrf.mxu0
  %v2959 = vadd.f32 %v2766, %v2958
  %2960 = vmatprep.mubr.bf16.mxu0 %v1268
  %2961 = vmatmul.mubr.bf16.gmra.mxu0 %v1267
  %v2962 = vpop.f32.mrf.mxu0
  %v2963 = vadd.f32 %v2770, %v2962
  %v2964 = vpop.f32.mrf.mxu0
  %v2965 = vadd.f32 %v2772, %v2964
  %v2966 = vpop.f32.mrf.mxu0
  %v2967 = vadd.f32 %v2774, %v2966
  %v2968 = vpop.f32.mrf.mxu0
  %v2969 = vadd.f32 %v2776, %v2968
  %2970 = vmatprep.mubr.bf16.mxu0 %v1275
  %2971 = vmatmul.mubr.bf16.gmra.mxu0 %v1274
  %v2972 = vpop.f32.mrf.mxu0
  %v2973 = vadd.f32 %v2780, %v2972
  %v2974 = vpop.f32.mrf.mxu0
  %v2975 = vadd.f32 %v2782, %v2974
  %v2976 = vpop.f32.mrf.mxu0
  %v2977 = vadd.f32 %v2784, %v2976
  %v2978 = vpop.f32.mrf.mxu0
  %v2979 = vadd.f32 %v2786, %v2978
  %2980 = vmatprep.mubr.bf16.mxu0 %v1282
  %2981 = vmatmul.mubr.bf16.gmra.mxu0 %v1281
  %v2982 = vpop.f32.mrf.mxu0
  %v2983 = vadd.f32 %v2790, %v2982
  %v2984 = vpop.f32.mrf.mxu0
  %v2985 = vadd.f32 %v2792, %v2984
  %v2986 = vpop.f32.mrf.mxu0
  %v2987 = vadd.f32 %v2794, %v2986
  %v2988 = vpop.f32.mrf.mxu0
  %v2989 = vadd.f32 %v2796, %v2988
  %2990 = vmatprep.mubr.bf16.mxu0 %v1289
  %2991 = vmatmul.mubr.bf16.gmra.mxu0 %v1288
  %v2992 = vpop.f32.mrf.mxu0
  %v2993 = vadd.f32 %v2800, %v2992
  %v2994 = vpop.f32.mrf.mxu0
  %v2995 = vadd.f32 %v2802, %v2994
  %v2996 = vpop.f32.mrf.mxu0
  %v2997 = vadd.f32 %v2804, %v2996
  %v2998 = vpop.f32.mrf.mxu0
  %v2999 = vadd.f32 %v2806, %v2998
  %3000 = vmatprep.mubr.bf16.mxu0 %v1296
  %3001 = vmatmul.mubr.bf16.gmra.mxu0 %v1295
  %v3002 = vpop.f32.mrf.mxu0
  %v3003 = vadd.f32 %v2810, %v3002
  %v3004 = vpop.f32.mrf.mxu0
  %v3005 = vadd.f32 %v2812, %v3004
  %v3006 = vpop.f32.mrf.mxu0
  %v3007 = vadd.f32 %v2814, %v3006
  %v3008 = vpop.f32.mrf.mxu0
  %v3009 = vadd.f32 %v2816, %v3008
  %3010 = vmatprep.mubr.bf16.mxu0 %v1303
  %3011 = vmatmul.mubr.bf16.gmra.mxu0 %v1302
  %v3012 = vpop.f32.mrf.mxu0
  %v3013 = vadd.f32 %v2820, %v3012
  %v3014 = vpop.f32.mrf.mxu0
  %v3015 = vadd.f32 %v2822, %v3014
  %v3016 = vpop.f32.mrf.mxu0
  %v3017 = vadd.f32 %v2824, %v3016
  %v3018 = vpop.f32.mrf.mxu0
  %v3019 = vadd.f32 %v2826, %v3018
  %3020 = vdwg.mxu0
  %3021 = vmatprep.subr.bf16.mxu0 %v2272
  %3022 = vmatpush1.bf16.msra.mxu0 %v2271
  %3023 = vmatprep.subr.bf16.mxu0 %v2269
  %3024 = vmatpush1.bf16.msra.mxu0 %v2268
  %3025 = vmatprep.subr.bf16.mxu0 %v2266
  %3026 = vmatpush1.bf16.msra.mxu0 %v2265
  %3027 = vmatprep.subr.bf16.mxu0 %v2263
  %3028 = vmatpush1.bf16.msra.mxu0 %v2262
  %3029 = vmatprep.subr.bf16.mxu0 %v2260
  %3030 = vmatpush1.bf16.msra.mxu0 %v2259
  %3031 = vmatprep.subr.bf16.mxu0 %v2257
  %3032 = vmatpush1.bf16.msra.mxu0 %v2256
  %3033 = vmatprep.subr.bf16.mxu0 %v2254
  %3034 = vmatpush1.bf16.msra.mxu0 %v2253
  %3035 = vmatprep.subr.bf16.mxu0 %v2251
  %3036 = vmatpush1.bf16.msra.mxu0 %v2250
  %3037 = vmatprep.subr.bf16.mxu0 0
  %3038 = vmatpush2.bf16.msra.mxu0 0
  %3039 = vmatprep.subr.bf16.mxu0 0
  %3040 = vmatpush2.bf16.msra.mxu0 0
  %3041 = vmatprep.subr.bf16.mxu0 0
  %3042 = vmatpush2.bf16.msra.mxu0 0
  %3043 = vmatprep.subr.bf16.mxu0 0
  %3044 = vmatpush2.bf16.msra.mxu0 0
  %3045 = vmatprep.subr.bf16.mxu0 0
  %3046 = vmatpush2.bf16.msra.mxu0 0
  %3047 = vmatprep.subr.bf16.mxu0 0
  %3048 = vmatpush2.bf16.msra.mxu0 0
  %3049 = vmatprep.subr.bf16.mxu0 0
  %3050 = vmatpush2.bf16.msra.mxu0 0
  %3051 = vmatprep.subr.bf16.mxu0 0
  %3052 = vmatpush2.bf16.msra.mxu0 0
  %3053 = vmatprep.mubr.bf16.mxu0 0
  %3054 = vmatmul.mubr.bf16.gmra.mxu0 %v1199
  %v3055 = vpop.f32.mrf.mxu0
  %v3056 = vadd.f32 %v2863, %v3055
  %v3057 = vpop.f32.mrf.mxu0
  %v3058 = vadd.f32 %v2865, %v3057
  %v3059 = vpop.f32.mrf.mxu0
  %v3060 = vadd.f32 %v2867, %v3059
  %v3061 = vpop.f32.mrf.mxu0
  %v3062 = vadd.f32 %v2869, %v3061
  %3063 = vmatprep.mubr.bf16.mxu0 0
  %3064 = vmatmul.mubr.bf16.gmra.mxu0 %v1206
  %v3065 = vpop.f32.mrf.mxu0
  %v3066 = vadd.f32 %v2873, %v3065
  %v3067 = vpop.f32.mrf.mxu0
  %v3068 = vadd.f32 %v2875, %v3067
  %v3069 = vpop.f32.mrf.mxu0
  %v3070 = vadd.f32 %v2877, %v3069
  %v3071 = vpop.f32.mrf.mxu0
  %v3072 = vadd.f32 %v2879, %v3071
  %3073 = vmatprep.mubr.bf16.mxu0 0
  %3074 = vmatmul.mubr.bf16.gmra.mxu0 %v1213
  %v3075 = vpop.f32.mrf.mxu0
  %v3076 = vadd.f32 %v2883, %v3075
  %v3077 = vpop.f32.mrf.mxu0
  %v3078 = vadd.f32 %v2885, %v3077
  %v3079 = vpop.f32.mrf.mxu0
  %v3080 = vadd.f32 %v2887, %v3079
  %v3081 = vpop.f32.mrf.mxu0
  %v3082 = vadd.f32 %v2889, %v3081
  %3083 = vmatprep.mubr.bf16.mxu0 0
  %3084 = vmatmul.mubr.bf16.gmra.mxu0 %v1220
  %v3085 = vpop.f32.mrf.mxu0
  %v3086 = vadd.f32 %v2893, %v3085
  %v3087 = vpop.f32.mrf.mxu0
  %v3088 = vadd.f32 %v2895, %v3087
  %v3089 = vpop.f32.mrf.mxu0
  %v3090 = vadd.f32 %v2897, %v3089
  %v3091 = vpop.f32.mrf.mxu0
  %v3092 = vadd.f32 %v2899, %v3091
  %3093 = vmatprep.mubr.bf16.mxu0 0
  %3094 = vmatmul.mubr.bf16.gmra.mxu0 %v1227
  %v3095 = vpop.f32.mrf.mxu0
  %v3096 = vadd.f32 %v2903, %v3095
  %v3097 = vpop.f32.mrf.mxu0
  %v3098 = vadd.f32 %v2905, %v3097
  %v3099 = vpop.f32.mrf.mxu0
  %v3100 = vadd.f32 %v2907, %v3099
  %v3101 = vpop.f32.mrf.mxu0
  %v3102 = vadd.f32 %v2909, %v3101
  %3103 = vmatprep.mubr.bf16.mxu0 0
  %3104 = vmatmul.mubr.bf16.gmra.mxu0 %v1234
  %v3105 = vpop.f32.mrf.mxu0
  %v3106 = vadd.f32 %v2913, %v3105
  %v3107 = vpop.f32.mrf.mxu0
  %v3108 = vadd.f32 %v2915, %v3107
  %v3109 = vpop.f32.mrf.mxu0
  %v3110 = vadd.f32 %v2917, %v3109
  %v3111 = vpop.f32.mrf.mxu0
  %v3112 = vadd.f32 %v2919, %v3111
  %3113 = vmatprep.mubr.bf16.mxu0 0
  %3114 = vmatmul.mubr.bf16.gmra.mxu0 %v1241
  %v3115 = vpop.f32.mrf.mxu0
  %v3116 = vadd.f32 %v2923, %v3115
  %v3117 = vpop.f32.mrf.mxu0
  %v3118 = vadd.f32 %v2925, %v3117
  %v3119 = vpop.f32.mrf.mxu0
  %v3120 = vadd.f32 %v2927, %v3119
  %v3121 = vpop.f32.mrf.mxu0
  %v3122 = vadd.f32 %v2929, %v3121
  %3123 = vmatprep.mubr.bf16.mxu0 0
  %3124 = vmatmul.mubr.bf16.gmra.mxu0 %v1248
  %v3125 = vpop.f32.mrf.mxu0
  %v3126 = vadd.f32 %v2933, %v3125
  %v3127 = vpop.f32.mrf.mxu0
  %v3128 = vadd.f32 %v2935, %v3127
  %v3129 = vpop.f32.mrf.mxu0
  %v3130 = vadd.f32 %v2937, %v3129
  %v3131 = vpop.f32.mrf.mxu0
  %v3132 = vadd.f32 %v2939, %v3131
  %3133 = vmatprep.mubr.bf16.mxu0 0
  %3134 = vmatmul.mubr.bf16.gmra.mxu0 %v1255
  %v3135 = vpop.f32.mrf.mxu0
  %v3136 = vadd.f32 %v2943, %v3135
  %v3137 = vpop.f32.mrf.mxu0
  %v3138 = vadd.f32 %v2945, %v3137
  %v3139 = vpop.f32.mrf.mxu0
  %v3140 = vadd.f32 %v2947, %v3139
  %v3141 = vpop.f32.mrf.mxu0
  %v3142 = vadd.f32 %v2949, %v3141
  %3143 = vmatprep.mubr.bf16.mxu0 0
  %3144 = vmatmul.mubr.bf16.gmra.mxu0 %v1262
  %v3145 = vpop.f32.mrf.mxu0
  %v3146 = vadd.f32 %v2953, %v3145
  %v3147 = vpop.f32.mrf.mxu0
  %v3148 = vadd.f32 %v2955, %v3147
  %v3149 = vpop.f32.mrf.mxu0
  %v3150 = vadd.f32 %v2957, %v3149
  %v3151 = vpop.f32.mrf.mxu0
  %v3152 = vadd.f32 %v2959, %v3151
  %3153 = vmatprep.mubr.bf16.mxu0 0
  %3154 = vmatmul.mubr.bf16.gmra.mxu0 %v1269
  %v3155 = vpop.f32.mrf.mxu0
  %v3156 = vadd.f32 %v2963, %v3155
  %v3157 = vpop.f32.mrf.mxu0
  %v3158 = vadd.f32 %v2965, %v3157
  %v3159 = vpop.f32.mrf.mxu0
  %v3160 = vadd.f32 %v2967, %v3159
  %v3161 = vpop.f32.mrf.mxu0
  %v3162 = vadd.f32 %v2969, %v3161
  %3163 = vmatprep.mubr.bf16.mxu0 0
  %3164 = vmatmul.mubr.bf16.gmra.mxu0 %v1276
  %v3165 = vpop.f32.mrf.mxu0
  %v3166 = vadd.f32 %v2973, %v3165
  %v3167 = vpop.f32.mrf.mxu0
  %v3168 = vadd.f32 %v2975, %v3167
  %v3169 = vpop.f32.mrf.mxu0
  %v3170 = vadd.f32 %v2977, %v3169
  %v3171 = vpop.f32.mrf.mxu0
  %v3172 = vadd.f32 %v2979, %v3171
  %3173 = vmatprep.mubr.bf16.mxu0 0
  %3174 = vmatmul.mubr.bf16.gmra.mxu0 %v1283
  %v3175 = vpop.f32.mrf.mxu0
  %v3176 = vadd.f32 %v2983, %v3175
  %v3177 = vpop.f32.mrf.mxu0
  %v3178 = vadd.f32 %v2985, %v3177
  %v3179 = vpop.f32.mrf.mxu0
  %v3180 = vadd.f32 %v2987, %v3179
  %v3181 = vpop.f32.mrf.mxu0
  %v3182 = vadd.f32 %v2989, %v3181
  %3183 = vmatprep.mubr.bf16.mxu0 0
  %3184 = vmatmul.mubr.bf16.gmra.mxu0 %v1290
  %v3185 = vpop.f32.mrf.mxu0
  %v3186 = vadd.f32 %v2993, %v3185
  %v3187 = vpop.f32.mrf.mxu0
  %v3188 = vadd.f32 %v2995, %v3187
  %v3189 = vpop.f32.mrf.mxu0
  %v3190 = vadd.f32 %v2997, %v3189
  %v3191 = vpop.f32.mrf.mxu0
  %v3192 = vadd.f32 %v2999, %v3191
  %3193 = vmatprep.mubr.bf16.mxu0 0
  %3194 = vmatmul.mubr.bf16.gmra.mxu0 %v1297
  %v3195 = vpop.f32.mrf.mxu0
  %v3196 = vadd.f32 %v3003, %v3195
  %v3197 = vpop.f32.mrf.mxu0
  %v3198 = vadd.f32 %v3005, %v3197
  %v3199 = vpop.f32.mrf.mxu0
  %v3200 = vadd.f32 %v3007, %v3199
  %v3201 = vpop.f32.mrf.mxu0
  %v3202 = vadd.f32 %v3009, %v3201
  %3203 = vmatprep.mubr.bf16.mxu0 0
  %3204 = vmatmul.mubr.bf16.gmra.mxu0 %v1304
  %v3205 = vpop.f32.mrf.mxu0
  %v3206 = vadd.f32 %v3013, %v3205
  %v3207 = vpop.f32.mrf.mxu0
  %v3208 = vadd.f32 %v3015, %v3207
  %v3209 = vpop.f32.mrf.mxu0
  %v3210 = vadd.f32 %v3017, %v3209
  %v3211 = vpop.f32.mrf.mxu0
  %v3212 = vadd.f32 %v3019, %v3211
  %3213 = vdwg.mxu0
  %3214 = vmatprep.subr.bf16.mxu0 0
  %3215 = vmatpush1.bf16.msra.mxu0 %v2129
  %3216 = vmatprep.subr.bf16.mxu0 0
  %3217 = vmatpush1.bf16.msra.mxu0 %v2126
  %3218 = vmatprep.subr.bf16.mxu0 0
  %3219 = vmatpush1.bf16.msra.mxu0 %v2123
  %3220 = vmatprep.subr.bf16.mxu0 0
  %3221 = vmatpush1.bf16.msra.mxu0 %v2120
  %3222 = vmatprep.subr.bf16.mxu0 0
  %3223 = vmatpush1.bf16.msra.mxu0 %v2117
  %3224 = vmatprep.subr.bf16.mxu0 0
  %3225 = vmatpush1.bf16.msra.mxu0 %v2114
  %3226 = vmatprep.subr.bf16.mxu0 0
  %3227 = vmatpush1.bf16.msra.mxu0 %v2111
  %3228 = vmatprep.subr.bf16.mxu0 0
  %3229 = vmatpush1.bf16.msra.mxu0 %v2108
  %3230 = vmatprep.subr.bf16.mxu0 0
  %3231 = vmatpush2.bf16.msra.mxu0 %v2153
  %3232 = vmatprep.subr.bf16.mxu0 0
  %3233 = vmatpush2.bf16.msra.mxu0 %v2150
  %3234 = vmatprep.subr.bf16.mxu0 0
  %3235 = vmatpush2.bf16.msra.mxu0 %v2147
  %3236 = vmatprep.subr.bf16.mxu0 0
  %3237 = vmatpush2.bf16.msra.mxu0 %v2144
  %3238 = vmatprep.subr.bf16.mxu0 0
  %3239 = vmatpush2.bf16.msra.mxu0 %v2141
  %3240 = vmatprep.subr.bf16.mxu0 0
  %3241 = vmatpush2.bf16.msra.mxu0 %v2138
  %3242 = vmatprep.subr.bf16.mxu0 0
  %3243 = vmatpush2.bf16.msra.mxu0 %v2135
  %3244 = vmatprep.subr.bf16.mxu0 0
  %3245 = vmatpush2.bf16.msra.mxu0 %v2132
  %3246 = vmatprep.mubr.bf16.mxu0 %v1194
  %3247 = vmatmul.mubr.bf16.gmra.mxu0 %v1193
  %v3248 = vpop.f32.mrf.mxu0
  %v3249 = vadd.f32 %v1542, %v3248
  %v3250 = vpop.f32.mrf.mxu0
  %v3251 = vpop.f32.mrf.mxu0
  %v3252 = vadd.f32 %v1542, %v3251
  %v3253 = vpop.f32.mrf.mxu0
  %3254 = vmatprep.mubr.bf16.mxu0 %v1201
  %3255 = vmatmul.mubr.bf16.gmra.mxu0 %v1200
  %v3256 = vpop.f32.mrf.mxu0
  %v3257 = vadd.f32 %v1542, %v3256
  %v3258 = vpop.f32.mrf.mxu0
  %v3259 = vpop.f32.mrf.mxu0
  %v3260 = vadd.f32 %v1542, %v3259
  %v3261 = vpop.f32.mrf.mxu0
  %3262 = vmatprep.mubr.bf16.mxu0 %v1208
  %3263 = vmatmul.mubr.bf16.gmra.mxu0 %v1207
  %v3264 = vpop.f32.mrf.mxu0
  %v3265 = vadd.f32 %v1542, %v3264
  %v3266 = vpop.f32.mrf.mxu0
  %v3267 = vpop.f32.mrf.mxu0
  %v3268 = vadd.f32 %v1542, %v3267
  %v3269 = vpop.f32.mrf.mxu0
  %3270 = vmatprep.mubr.bf16.mxu0 %v1215
  %3271 = vmatmul.mubr.bf16.gmra.mxu0 %v1214
  %v3272 = vpop.f32.mrf.mxu0
  %v3273 = vadd.f32 %v1542, %v3272
  %v3274 = vpop.f32.mrf.mxu0
  %v3275 = vpop.f32.mrf.mxu0
  %v3276 = vadd.f32 %v1542, %v3275
  %v3277 = vpop.f32.mrf.mxu0
  %3278 = vmatprep.mubr.bf16.mxu0 %v1222
  %3279 = vmatmul.mubr.bf16.gmra.mxu0 %v1221
  %v3280 = vpop.f32.mrf.mxu0
  %v3281 = vadd.f32 %v1542, %v3280
  %v3282 = vpop.f32.mrf.mxu0
  %v3283 = vpop.f32.mrf.mxu0
  %v3284 = vadd.f32 %v1542, %v3283
  %v3285 = vpop.f32.mrf.mxu0
  %3286 = vmatprep.mubr.bf16.mxu0 %v1229
  %3287 = vmatmul.mubr.bf16.gmra.mxu0 %v1228
  %v3288 = vpop.f32.mrf.mxu0
  %v3289 = vadd.f32 %v1542, %v3288
  %v3290 = vpop.f32.mrf.mxu0
  %v3291 = vpop.f32.mrf.mxu0
  %v3292 = vadd.f32 %v1542, %v3291
  %v3293 = vpop.f32.mrf.mxu0
  %3294 = vmatprep.mubr.bf16.mxu0 %v1236
  %3295 = vmatmul.mubr.bf16.gmra.mxu0 %v1235
  %v3296 = vpop.f32.mrf.mxu0
  %v3297 = vadd.f32 %v1542, %v3296
  %v3298 = vpop.f32.mrf.mxu0
  %v3299 = vpop.f32.mrf.mxu0
  %v3300 = vadd.f32 %v1542, %v3299
  %v3301 = vpop.f32.mrf.mxu0
  %3302 = vmatprep.mubr.bf16.mxu0 %v1243
  %3303 = vmatmul.mubr.bf16.gmra.mxu0 %v1242
  %v3304 = vpop.f32.mrf.mxu0
  %v3305 = vadd.f32 %v1542, %v3304
  %v3306 = vpop.f32.mrf.mxu0
  %v3307 = vpop.f32.mrf.mxu0
  %v3308 = vadd.f32 %v1542, %v3307
  %v3309 = vpop.f32.mrf.mxu0
  %3310 = vmatprep.mubr.bf16.mxu0 %v1250
  %3311 = vmatmul.mubr.bf16.gmra.mxu0 %v1249
  %v3312 = vpop.f32.mrf.mxu0
  %v3313 = vadd.f32 %v1542, %v3312
  %v3314 = vpop.f32.mrf.mxu0
  %v3315 = vpop.f32.mrf.mxu0
  %v3316 = vadd.f32 %v1542, %v3315
  %v3317 = vpop.f32.mrf.mxu0
  %3318 = vmatprep.mubr.bf16.mxu0 %v1257
  %3319 = vmatmul.mubr.bf16.gmra.mxu0 %v1256
  %v3320 = vpop.f32.mrf.mxu0
  %v3321 = vadd.f32 %v1542, %v3320
  %v3322 = vpop.f32.mrf.mxu0
  %v3323 = vpop.f32.mrf.mxu0
  %v3324 = vadd.f32 %v1542, %v3323
  %v3325 = vpop.f32.mrf.mxu0
  %3326 = vmatprep.mubr.bf16.mxu0 %v1264
  %3327 = vmatmul.mubr.bf16.gmra.mxu0 %v1263
  %v3328 = vpop.f32.mrf.mxu0
  %v3329 = vadd.f32 %v1542, %v3328
  %v3330 = vpop.f32.mrf.mxu0
  %v3331 = vpop.f32.mrf.mxu0
  %v3332 = vadd.f32 %v1542, %v3331
  %v3333 = vpop.f32.mrf.mxu0
  %3334 = vmatprep.mubr.bf16.mxu0 %v1271
  %3335 = vmatmul.mubr.bf16.gmra.mxu0 %v1270
  %v3336 = vpop.f32.mrf.mxu0
  %v3337 = vadd.f32 %v1542, %v3336
  %v3338 = vpop.f32.mrf.mxu0
  %v3339 = vpop.f32.mrf.mxu0
  %v3340 = vadd.f32 %v1542, %v3339
  %v3341 = vpop.f32.mrf.mxu0
  %3342 = vmatprep.mubr.bf16.mxu0 %v1278
  %3343 = vmatmul.mubr.bf16.gmra.mxu0 %v1277
  %v3344 = vpop.f32.mrf.mxu0
  %v3345 = vadd.f32 %v1542, %v3344
  %v3346 = vpop.f32.mrf.mxu0
  %v3347 = vpop.f32.mrf.mxu0
  %v3348 = vadd.f32 %v1542, %v3347
  %v3349 = vpop.f32.mrf.mxu0
  %3350 = vmatprep.mubr.bf16.mxu0 %v1285
  %3351 = vmatmul.mubr.bf16.gmra.mxu0 %v1284
  %v3352 = vpop.f32.mrf.mxu0
  %v3353 = vadd.f32 %v1542, %v3352
  %v3354 = vpop.f32.mrf.mxu0
  %v3355 = vpop.f32.mrf.mxu0
  %v3356 = vadd.f32 %v1542, %v3355
  %v3357 = vpop.f32.mrf.mxu0
  %3358 = vmatprep.mubr.bf16.mxu0 %v1292
  %3359 = vmatmul.mubr.bf16.gmra.mxu0 %v1291
  %v3360 = vpop.f32.mrf.mxu0
  %v3361 = vadd.f32 %v1542, %v3360
  %v3362 = vpop.f32.mrf.mxu0
  %v3363 = vpop.f32.mrf.mxu0
  %v3364 = vadd.f32 %v1542, %v3363
  %v3365 = vpop.f32.mrf.mxu0
  %3366 = vmatprep.mubr.bf16.mxu0 %v1299
  %3367 = vmatmul.mubr.bf16.gmra.mxu0 %v1298
  %v3368 = vpop.f32.mrf.mxu0
  %v3369 = vadd.f32 %v1542, %v3368
  %v3370 = vpop.f32.mrf.mxu0
  %v3371 = vpop.f32.mrf.mxu0
  %v3372 = vadd.f32 %v1542, %v3371
  %v3373 = vpop.f32.mrf.mxu0
  %3374 = vdwg.mxu0
  %3375 = vmatprep.subr.bf16.mxu0 0
  %3376 = vmatpush1.bf16.msra.mxu0 %v2177
  %3377 = vmatprep.subr.bf16.mxu0 0
  %3378 = vmatpush1.bf16.msra.mxu0 %v2174
  %3379 = vmatprep.subr.bf16.mxu0 0
  %3380 = vmatpush1.bf16.msra.mxu0 %v2171
  %3381 = vmatprep.subr.bf16.mxu0 0
  %3382 = vmatpush1.bf16.msra.mxu0 %v2168
  %3383 = vmatprep.subr.bf16.mxu0 0
  %3384 = vmatpush1.bf16.msra.mxu0 %v2165
  %3385 = vmatprep.subr.bf16.mxu0 0
  %3386 = vmatpush1.bf16.msra.mxu0 %v2162
  %3387 = vmatprep.subr.bf16.mxu0 0
  %3388 = vmatpush1.bf16.msra.mxu0 %v2159
  %3389 = vmatprep.subr.bf16.mxu0 0
  %3390 = vmatpush1.bf16.msra.mxu0 %v2156
  %3391 = vmatprep.subr.bf16.mxu0 0
  %3392 = vmatpush2.bf16.msra.mxu0 %v2201
  %3393 = vmatprep.subr.bf16.mxu0 0
  %3394 = vmatpush2.bf16.msra.mxu0 %v2198
  %3395 = vmatprep.subr.bf16.mxu0 0
  %3396 = vmatpush2.bf16.msra.mxu0 %v2195
  %3397 = vmatprep.subr.bf16.mxu0 0
  %3398 = vmatpush2.bf16.msra.mxu0 %v2192
  %3399 = vmatprep.subr.bf16.mxu0 0
  %3400 = vmatpush2.bf16.msra.mxu0 %v2189
  %3401 = vmatprep.subr.bf16.mxu0 0
  %3402 = vmatpush2.bf16.msra.mxu0 %v2186
  %3403 = vmatprep.subr.bf16.mxu0 0
  %3404 = vmatpush2.bf16.msra.mxu0 %v2183
  %3405 = vmatprep.subr.bf16.mxu0 0
  %3406 = vmatpush2.bf16.msra.mxu0 %v2180
  %3407 = vmatprep.mubr.bf16.mxu0 %v1196
  %3408 = vmatmul.mubr.bf16.gmra.mxu0 %v1195
  %v3409 = vpop.f32.mrf.mxu0
  %v3410 = vadd.f32 %v3249, %v3409
  %v3411 = vpop.f32.mrf.mxu0
  %v3412 = vpop.f32.mrf.mxu0
  %v3413 = vadd.f32 %v3252, %v3412
  %v3414 = vpop.f32.mrf.mxu0
  %3415 = vmatprep.mubr.bf16.mxu0 %v1203
  %3416 = vmatmul.mubr.bf16.gmra.mxu0 %v1202
  %v3417 = vpop.f32.mrf.mxu0
  %v3418 = vadd.f32 %v3257, %v3417
  %v3419 = vpop.f32.mrf.mxu0
  %v3420 = vpop.f32.mrf.mxu0
  %v3421 = vadd.f32 %v3260, %v3420
  %v3422 = vpop.f32.mrf.mxu0
  %3423 = vmatprep.mubr.bf16.mxu0 %v1210
  %3424 = vmatmul.mubr.bf16.gmra.mxu0 %v1209
  %v3425 = vpop.f32.mrf.mxu0
  %v3426 = vadd.f32 %v3265, %v3425
  %v3427 = vpop.f32.mrf.mxu0
  %v3428 = vpop.f32.mrf.mxu0
  %v3429 = vadd.f32 %v3268, %v3428
  %v3430 = vpop.f32.mrf.mxu0
  %3431 = vmatprep.mubr.bf16.mxu0 %v1217
  %3432 = vmatmul.mubr.bf16.gmra.mxu0 %v1216
  %v3433 = vpop.f32.mrf.mxu0
  %v3434 = vadd.f32 %v3273, %v3433
  %v3435 = vpop.f32.mrf.mxu0
  %v3436 = vpop.f32.mrf.mxu0
  %v3437 = vadd.f32 %v3276, %v3436
  %v3438 = vpop.f32.mrf.mxu0
  %3439 = vmatprep.mubr.bf16.mxu0 %v1224
  %3440 = vmatmul.mubr.bf16.gmra.mxu0 %v1223
  %v3441 = vpop.f32.mrf.mxu0
  %v3442 = vadd.f32 %v3281, %v3441
  %v3443 = vpop.f32.mrf.mxu0
  %v3444 = vpop.f32.mrf.mxu0
  %v3445 = vadd.f32 %v3284, %v3444
  %v3446 = vpop.f32.mrf.mxu0
  %3447 = vmatprep.mubr.bf16.mxu0 %v1231
  %3448 = vmatmul.mubr.bf16.gmra.mxu0 %v1230
  %v3449 = vpop.f32.mrf.mxu0
  %v3450 = vadd.f32 %v3289, %v3449
  %v3451 = vpop.f32.mrf.mxu0
  %v3452 = vpop.f32.mrf.mxu0
  %v3453 = vadd.f32 %v3292, %v3452
  %v3454 = vpop.f32.mrf.mxu0
  %3455 = vmatprep.mubr.bf16.mxu0 %v1238
  %3456 = vmatmul.mubr.bf16.gmra.mxu0 %v1237
  %v3457 = vpop.f32.mrf.mxu0
  %v3458 = vadd.f32 %v3297, %v3457
  %v3459 = vpop.f32.mrf.mxu0
  %v3460 = vpop.f32.mrf.mxu0
  %v3461 = vadd.f32 %v3300, %v3460
  %v3462 = vpop.f32.mrf.mxu0
  %3463 = vmatprep.mubr.bf16.mxu0 %v1245
  %3464 = vmatmul.mubr.bf16.gmra.mxu0 %v1244
  %v3465 = vpop.f32.mrf.mxu0
  %v3466 = vadd.f32 %v3305, %v3465
  %v3467 = vpop.f32.mrf.mxu0
  %v3468 = vpop.f32.mrf.mxu0
  %v3469 = vadd.f32 %v3308, %v3468
  %v3470 = vpop.f32.mrf.mxu0
  %3471 = vmatprep.mubr.bf16.mxu0 %v1252
  %3472 = vmatmul.mubr.bf16.gmra.mxu0 %v1251
  %v3473 = vpop.f32.mrf.mxu0
  %v3474 = vadd.f32 %v3313, %v3473
  %v3475 = vpop.f32.mrf.mxu0
  %v3476 = vpop.f32.mrf.mxu0
  %v3477 = vadd.f32 %v3316, %v3476
  %v3478 = vpop.f32.mrf.mxu0
  %3479 = vmatprep.mubr.bf16.mxu0 %v1259
  %3480 = vmatmul.mubr.bf16.gmra.mxu0 %v1258
  %v3481 = vpop.f32.mrf.mxu0
  %v3482 = vadd.f32 %v3321, %v3481
  %v3483 = vpop.f32.mrf.mxu0
  %v3484 = vpop.f32.mrf.mxu0
  %v3485 = vadd.f32 %v3324, %v3484
  %v3486 = vpop.f32.mrf.mxu0
  %3487 = vmatprep.mubr.bf16.mxu0 %v1266
  %3488 = vmatmul.mubr.bf16.gmra.mxu0 %v1265
  %v3489 = vpop.f32.mrf.mxu0
  %v3490 = vadd.f32 %v3329, %v3489
  %v3491 = vpop.f32.mrf.mxu0
  %v3492 = vpop.f32.mrf.mxu0
  %v3493 = vadd.f32 %v3332, %v3492
  %v3494 = vpop.f32.mrf.mxu0
  %3495 = vmatprep.mubr.bf16.mxu0 %v1273
  %3496 = vmatmul.mubr.bf16.gmra.mxu0 %v1272
  %v3497 = vpop.f32.mrf.mxu0
  %v3498 = vadd.f32 %v3337, %v3497
  %v3499 = vpop.f32.mrf.mxu0
  %v3500 = vpop.f32.mrf.mxu0
  %v3501 = vadd.f32 %v3340, %v3500
  %v3502 = vpop.f32.mrf.mxu0
  %3503 = vmatprep.mubr.bf16.mxu0 %v1280
  %3504 = vmatmul.mubr.bf16.gmra.mxu0 %v1279
  %v3505 = vpop.f32.mrf.mxu0
  %v3506 = vadd.f32 %v3345, %v3505
  %v3507 = vpop.f32.mrf.mxu0
  %v3508 = vpop.f32.mrf.mxu0
  %v3509 = vadd.f32 %v3348, %v3508
  %v3510 = vpop.f32.mrf.mxu0
  %3511 = vmatprep.mubr.bf16.mxu0 %v1287
  %3512 = vmatmul.mubr.bf16.gmra.mxu0 %v1286
  %v3513 = vpop.f32.mrf.mxu0
  %v3514 = vadd.f32 %v3353, %v3513
  %v3515 = vpop.f32.mrf.mxu0
  %v3516 = vpop.f32.mrf.mxu0
  %v3517 = vadd.f32 %v3356, %v3516
  %v3518 = vpop.f32.mrf.mxu0
  %3519 = vmatprep.mubr.bf16.mxu0 %v1294
  %3520 = vmatmul.mubr.bf16.gmra.mxu0 %v1293
  %v3521 = vpop.f32.mrf.mxu0
  %v3522 = vadd.f32 %v3361, %v3521
  %v3523 = vpop.f32.mrf.mxu0
  %v3524 = vpop.f32.mrf.mxu0
  %v3525 = vadd.f32 %v3364, %v3524
  %v3526 = vpop.f32.mrf.mxu0
  %3527 = vmatprep.mubr.bf16.mxu0 %v1301
  %3528 = vmatmul.mubr.bf16.gmra.mxu0 %v1300
  %v3529 = vpop.f32.mrf.mxu0
  %v3530 = vadd.f32 %v3369, %v3529
  %v3531 = vpop.f32.mrf.mxu0
  %v3532 = vpop.f32.mrf.mxu0
  %v3533 = vadd.f32 %v3372, %v3532
  %v3534 = vpop.f32.mrf.mxu0
  %3535 = vdwg.mxu0
  %3536 = vmatprep.subr.bf16.mxu0 0
  %3537 = vmatpush1.bf16.msra.mxu0 %v2225
  %3538 = vmatprep.subr.bf16.mxu0 0
  %3539 = vmatpush1.bf16.msra.mxu0 %v2222
  %3540 = vmatprep.subr.bf16.mxu0 0
  %3541 = vmatpush1.bf16.msra.mxu0 %v2219
  %3542 = vmatprep.subr.bf16.mxu0 0
  %3543 = vmatpush1.bf16.msra.mxu0 %v2216
  %3544 = vmatprep.subr.bf16.mxu0 0
  %3545 = vmatpush1.bf16.msra.mxu0 %v2213
  %3546 = vmatprep.subr.bf16.mxu0 0
  %3547 = vmatpush1.bf16.msra.mxu0 %v2210
  %3548 = vmatprep.subr.bf16.mxu0 0
  %3549 = vmatpush1.bf16.msra.mxu0 %v2207
  %3550 = vmatprep.subr.bf16.mxu0 0
  %3551 = vmatpush1.bf16.msra.mxu0 %v2204
  %3552 = vmatprep.subr.bf16.mxu0 0
  %3553 = vmatpush2.bf16.msra.mxu0 %v2249
  %3554 = vmatprep.subr.bf16.mxu0 0
  %3555 = vmatpush2.bf16.msra.mxu0 %v2246
  %3556 = vmatprep.subr.bf16.mxu0 0
  %3557 = vmatpush2.bf16.msra.mxu0 %v2243
  %3558 = vmatprep.subr.bf16.mxu0 0
  %3559 = vmatpush2.bf16.msra.mxu0 %v2240
  %3560 = vmatprep.subr.bf16.mxu0 0
  %3561 = vmatpush2.bf16.msra.mxu0 %v2237
  %3562 = vmatprep.subr.bf16.mxu0 0
  %3563 = vmatpush2.bf16.msra.mxu0 %v2234
  %3564 = vmatprep.subr.bf16.mxu0 0
  %3565 = vmatpush2.bf16.msra.mxu0 %v2231
  %3566 = vmatprep.subr.bf16.mxu0 0
  %3567 = vmatpush2.bf16.msra.mxu0 %v2228
  %3568 = vmatprep.mubr.bf16.mxu0 %v1198
  %3569 = vmatmul.mubr.bf16.gmra.mxu0 %v1197
  %v3570 = vpop.f32.mrf.mxu0
  %v3571 = vadd.f32 %v3410, %v3570
  %v3572 = vpop.f32.mrf.mxu0
  %v3573 = vpop.f32.mrf.mxu0
  %v3574 = vadd.f32 %v3413, %v3573
  %v3575 = vpop.f32.mrf.mxu0
  %3576 = vmatprep.mubr.bf16.mxu0 %v1205
  %3577 = vmatmul.mubr.bf16.gmra.mxu0 %v1204
  %v3578 = vpop.f32.mrf.mxu0
  %v3579 = vadd.f32 %v3418, %v3578
  %v3580 = vpop.f32.mrf.mxu0
  %v3581 = vpop.f32.mrf.mxu0
  %v3582 = vadd.f32 %v3421, %v3581
  %v3583 = vpop.f32.mrf.mxu0
  %3584 = vmatprep.mubr.bf16.mxu0 %v1212
  %3585 = vmatmul.mubr.bf16.gmra.mxu0 %v1211
  %v3586 = vpop.f32.mrf.mxu0
  %v3587 = vadd.f32 %v3426, %v3586
  %v3588 = vpop.f32.mrf.mxu0
  %v3589 = vpop.f32.mrf.mxu0
  %v3590 = vadd.f32 %v3429, %v3589
  %v3591 = vpop.f32.mrf.mxu0
  %3592 = vmatprep.mubr.bf16.mxu0 %v1219
  %3593 = vmatmul.mubr.bf16.gmra.mxu0 %v1218
  %v3594 = vpop.f32.mrf.mxu0
  %v3595 = vadd.f32 %v3434, %v3594
  %v3596 = vpop.f32.mrf.mxu0
  %v3597 = vpop.f32.mrf.mxu0
  %v3598 = vadd.f32 %v3437, %v3597
  %v3599 = vpop.f32.mrf.mxu0
  %3600 = vmatprep.mubr.bf16.mxu0 %v1226
  %3601 = vmatmul.mubr.bf16.gmra.mxu0 %v1225
  %v3602 = vpop.f32.mrf.mxu0
  %v3603 = vadd.f32 %v3442, %v3602
  %v3604 = vpop.f32.mrf.mxu0
  %v3605 = vpop.f32.mrf.mxu0
  %v3606 = vadd.f32 %v3445, %v3605
  %v3607 = vpop.f32.mrf.mxu0
  %3608 = vmatprep.mubr.bf16.mxu0 %v1233
  %3609 = vmatmul.mubr.bf16.gmra.mxu0 %v1232
  %v3610 = vpop.f32.mrf.mxu0
  %v3611 = vadd.f32 %v3450, %v3610
  %v3612 = vpop.f32.mrf.mxu0
  %v3613 = vpop.f32.mrf.mxu0
  %v3614 = vadd.f32 %v3453, %v3613
  %v3615 = vpop.f32.mrf.mxu0
  %3616 = vmatprep.mubr.bf16.mxu0 %v1240
  %3617 = vmatmul.mubr.bf16.gmra.mxu0 %v1239
  %v3618 = vpop.f32.mrf.mxu0
  %v3619 = vadd.f32 %v3458, %v3618
  %v3620 = vpop.f32.mrf.mxu0
  %v3621 = vpop.f32.mrf.mxu0
  %v3622 = vadd.f32 %v3461, %v3621
  %v3623 = vpop.f32.mrf.mxu0
  %3624 = vmatprep.mubr.bf16.mxu0 %v1247
  %3625 = vmatmul.mubr.bf16.gmra.mxu0 %v1246
  %v3626 = vpop.f32.mrf.mxu0
  %v3627 = vadd.f32 %v3466, %v3626
  %v3628 = vpop.f32.mrf.mxu0
  %v3629 = vpop.f32.mrf.mxu0
  %v3630 = vadd.f32 %v3469, %v3629
  %v3631 = vpop.f32.mrf.mxu0
  %3632 = vmatprep.mubr.bf16.mxu0 %v1254
  %3633 = vmatmul.mubr.bf16.gmra.mxu0 %v1253
  %v3634 = vpop.f32.mrf.mxu0
  %v3635 = vadd.f32 %v3474, %v3634
  %v3636 = vpop.f32.mrf.mxu0
  %v3637 = vpop.f32.mrf.mxu0
  %v3638 = vadd.f32 %v3477, %v3637
  %v3639 = vpop.f32.mrf.mxu0
  %3640 = vmatprep.mubr.bf16.mxu0 %v1261
  %3641 = vmatmul.mubr.bf16.gmra.mxu0 %v1260
  %v3642 = vpop.f32.mrf.mxu0
  %v3643 = vadd.f32 %v3482, %v3642
  %v3644 = vpop.f32.mrf.mxu0
  %v3645 = vpop.f32.mrf.mxu0
  %v3646 = vadd.f32 %v3485, %v3645
  %v3647 = vpop.f32.mrf.mxu0
  %3648 = vmatprep.mubr.bf16.mxu0 %v1268
  %3649 = vmatmul.mubr.bf16.gmra.mxu0 %v1267
  %v3650 = vpop.f32.mrf.mxu0
  %v3651 = vadd.f32 %v3490, %v3650
  %v3652 = vpop.f32.mrf.mxu0
  %v3653 = vpop.f32.mrf.mxu0
  %v3654 = vadd.f32 %v3493, %v3653
  %v3655 = vpop.f32.mrf.mxu0
  %3656 = vmatprep.mubr.bf16.mxu0 %v1275
  %3657 = vmatmul.mubr.bf16.gmra.mxu0 %v1274
  %v3658 = vpop.f32.mrf.mxu0
  %v3659 = vadd.f32 %v3498, %v3658
  %v3660 = vpop.f32.mrf.mxu0
  %v3661 = vpop.f32.mrf.mxu0
  %v3662 = vadd.f32 %v3501, %v3661
  %v3663 = vpop.f32.mrf.mxu0
  %3664 = vmatprep.mubr.bf16.mxu0 %v1282
  %3665 = vmatmul.mubr.bf16.gmra.mxu0 %v1281
  %v3666 = vpop.f32.mrf.mxu0
  %v3667 = vadd.f32 %v3506, %v3666
  %v3668 = vpop.f32.mrf.mxu0
  %v3669 = vpop.f32.mrf.mxu0
  %v3670 = vadd.f32 %v3509, %v3669
  %v3671 = vpop.f32.mrf.mxu0
  %3672 = vmatprep.mubr.bf16.mxu0 %v1289
  %3673 = vmatmul.mubr.bf16.gmra.mxu0 %v1288
  %v3674 = vpop.f32.mrf.mxu0
  %v3675 = vadd.f32 %v3514, %v3674
  %v3676 = vpop.f32.mrf.mxu0
  %v3677 = vpop.f32.mrf.mxu0
  %v3678 = vadd.f32 %v3517, %v3677
  %v3679 = vpop.f32.mrf.mxu0
  %3680 = vmatprep.mubr.bf16.mxu0 %v1296
  %3681 = vmatmul.mubr.bf16.gmra.mxu0 %v1295
  %v3682 = vpop.f32.mrf.mxu0
  %v3683 = vadd.f32 %v3522, %v3682
  %v3684 = vpop.f32.mrf.mxu0
  %v3685 = vpop.f32.mrf.mxu0
  %v3686 = vadd.f32 %v3525, %v3685
  %v3687 = vpop.f32.mrf.mxu0
  %3688 = vmatprep.mubr.bf16.mxu0 %v1303
  %3689 = vmatmul.mubr.bf16.gmra.mxu0 %v1302
  %v3690 = vpop.f32.mrf.mxu0
  %v3691 = vadd.f32 %v3530, %v3690
  %v3692 = vpop.f32.mrf.mxu0
  %v3693 = vpop.f32.mrf.mxu0
  %v3694 = vadd.f32 %v3533, %v3693
  %v3695 = vpop.f32.mrf.mxu0
  %3696 = vdwg.mxu0
  %3697 = vmatprep.subr.bf16.mxu0 0
  %3698 = vmatpush1.bf16.msra.mxu0 %v2273
  %3699 = vmatprep.subr.bf16.mxu0 0
  %3700 = vmatpush1.bf16.msra.mxu0 %v2270
  %3701 = vmatprep.subr.bf16.mxu0 0
  %3702 = vmatpush1.bf16.msra.mxu0 %v2267
  %3703 = vmatprep.subr.bf16.mxu0 0
  %3704 = vmatpush1.bf16.msra.mxu0 %v2264
  %3705 = vmatprep.subr.bf16.mxu0 0
  %3706 = vmatpush1.bf16.msra.mxu0 %v2261
  %3707 = vmatprep.subr.bf16.mxu0 0
  %3708 = vmatpush1.bf16.msra.mxu0 %v2258
  %3709 = vmatprep.subr.bf16.mxu0 0
  %3710 = vmatpush1.bf16.msra.mxu0 %v2255
  %3711 = vmatprep.subr.bf16.mxu0 0
  %3712 = vmatpush1.bf16.msra.mxu0 %v2252
  %3713 = vmatprep.subr.bf16.mxu0 0
  %3714 = vmatpush2.bf16.msra.mxu0 0
  %3715 = vmatprep.subr.bf16.mxu0 0
  %3716 = vmatpush2.bf16.msra.mxu0 0
  %3717 = vmatprep.subr.bf16.mxu0 0
  %3718 = vmatpush2.bf16.msra.mxu0 0
  %3719 = vmatprep.subr.bf16.mxu0 0
  %3720 = vmatpush2.bf16.msra.mxu0 0
  %3721 = vmatprep.subr.bf16.mxu0 0
  %3722 = vmatpush2.bf16.msra.mxu0 0
  %3723 = vmatprep.subr.bf16.mxu0 0
  %3724 = vmatpush2.bf16.msra.mxu0 0
  %3725 = vmatprep.subr.bf16.mxu0 0
  %3726 = vmatpush2.bf16.msra.mxu0 0
  %3727 = vmatprep.subr.bf16.mxu0 0
  %3728 = vmatpush2.bf16.msra.mxu0 0
  %3729 = vmatprep.mubr.bf16.mxu0 0
  %3730 = vmatmul.mubr.bf16.gmra.mxu0 %v1199
  %v3731 = vpop.f32.mrf.mxu0
  %v3732 = vadd.f32 %v3571, %v3731
  %v3733 = vpop.f32.mrf.mxu0
  %v3734 = vpop.f32.mrf.mxu0
  %v3735 = vadd.f32 %v3574, %v3734
  %v3736 = vpop.f32.mrf.mxu0
  %3737 = vmatprep.mubr.bf16.mxu0 0
  %3738 = vmatmul.mubr.bf16.gmra.mxu0 %v1206
  %v3739 = vpop.f32.mrf.mxu0
  %v3740 = vadd.f32 %v3579, %v3739
  %v3741 = vpop.f32.mrf.mxu0
  %v3742 = vpop.f32.mrf.mxu0
  %v3743 = vadd.f32 %v3582, %v3742
  %v3744 = vpop.f32.mrf.mxu0
  %3745 = vmatprep.mubr.bf16.mxu0 0
  %3746 = vmatmul.mubr.bf16.gmra.mxu0 %v1213
  %v3747 = vpop.f32.mrf.mxu0
  %v3748 = vadd.f32 %v3587, %v3747
  %v3749 = vpop.f32.mrf.mxu0
  %v3750 = vpop.f32.mrf.mxu0
  %v3751 = vadd.f32 %v3590, %v3750
  %v3752 = vpop.f32.mrf.mxu0
  %3753 = vmatprep.mubr.bf16.mxu0 0
  %3754 = vmatmul.mubr.bf16.gmra.mxu0 %v1220
  %v3755 = vpop.f32.mrf.mxu0
  %v3756 = vadd.f32 %v3595, %v3755
  %v3757 = vpop.f32.mrf.mxu0
  %v3758 = vpop.f32.mrf.mxu0
  %v3759 = vadd.f32 %v3598, %v3758
  %v3760 = vpop.f32.mrf.mxu0
  %3761 = vmatprep.mubr.bf16.mxu0 0
  %3762 = vmatmul.mubr.bf16.gmra.mxu0 %v1227
  %v3763 = vpop.f32.mrf.mxu0
  %v3764 = vadd.f32 %v3603, %v3763
  %v3765 = vpop.f32.mrf.mxu0
  %v3766 = vpop.f32.mrf.mxu0
  %v3767 = vadd.f32 %v3606, %v3766
  %v3768 = vpop.f32.mrf.mxu0
  %3769 = vmatprep.mubr.bf16.mxu0 0
  %3770 = vmatmul.mubr.bf16.gmra.mxu0 %v1234
  %v3771 = vpop.f32.mrf.mxu0
  %v3772 = vadd.f32 %v3611, %v3771
  %v3773 = vpop.f32.mrf.mxu0
  %v3774 = vpop.f32.mrf.mxu0
  %v3775 = vadd.f32 %v3614, %v3774
  %v3776 = vpop.f32.mrf.mxu0
  %3777 = vmatprep.mubr.bf16.mxu0 0
  %3778 = vmatmul.mubr.bf16.gmra.mxu0 %v1241
  %v3779 = vpop.f32.mrf.mxu0
  %v3780 = vadd.f32 %v3619, %v3779
  %v3781 = vpop.f32.mrf.mxu0
  %v3782 = vpop.f32.mrf.mxu0
  %v3783 = vadd.f32 %v3622, %v3782
  %v3784 = vpop.f32.mrf.mxu0
  %3785 = vmatprep.mubr.bf16.mxu0 0
  %3786 = vmatmul.mubr.bf16.gmra.mxu0 %v1248
  %v3787 = vpop.f32.mrf.mxu0
  %v3788 = vadd.f32 %v3627, %v3787
  %v3789 = vpop.f32.mrf.mxu0
  %v3790 = vpop.f32.mrf.mxu0
  %v3791 = vadd.f32 %v3630, %v3790
  %v3792 = vpop.f32.mrf.mxu0
  %3793 = vmatprep.mubr.bf16.mxu0 0
  %3794 = vmatmul.mubr.bf16.gmra.mxu0 %v1255
  %v3795 = vpop.f32.mrf.mxu0
  %v3796 = vadd.f32 %v3635, %v3795
  %v3797 = vpop.f32.mrf.mxu0
  %v3798 = vpop.f32.mrf.mxu0
  %v3799 = vadd.f32 %v3638, %v3798
  %v3800 = vpop.f32.mrf.mxu0
  %3801 = vmatprep.mubr.bf16.mxu0 0
  %3802 = vmatmul.mubr.bf16.gmra.mxu0 %v1262
  %v3803 = vpop.f32.mrf.mxu0
  %v3804 = vadd.f32 %v3643, %v3803
  %v3805 = vpop.f32.mrf.mxu0
  %v3806 = vpop.f32.mrf.mxu0
  %v3807 = vadd.f32 %v3646, %v3806
  %v3808 = vpop.f32.mrf.mxu0
  %3809 = vmatprep.mubr.bf16.mxu0 0
  %3810 = vmatmul.mubr.bf16.gmra.mxu0 %v1269
  %v3811 = vpop.f32.mrf.mxu0
  %v3812 = vadd.f32 %v3651, %v3811
  %v3813 = vpop.f32.mrf.mxu0
  %v3814 = vpop.f32.mrf.mxu0
  %v3815 = vadd.f32 %v3654, %v3814
  %v3816 = vpop.f32.mrf.mxu0
  %3817 = vmatprep.mubr.bf16.mxu0 0
  %3818 = vmatmul.mubr.bf16.gmra.mxu0 %v1276
  %v3819 = vpop.f32.mrf.mxu0
  %v3820 = vadd.f32 %v3659, %v3819
  %v3821 = vpop.f32.mrf.mxu0
  %v3822 = vpop.f32.mrf.mxu0
  %v3823 = vadd.f32 %v3662, %v3822
  %v3824 = vpop.f32.mrf.mxu0
  %3825 = vmatprep.mubr.bf16.mxu0 0
  %3826 = vmatmul.mubr.bf16.gmra.mxu0 %v1283
  %v3827 = vpop.f32.mrf.mxu0
  %v3828 = vadd.f32 %v3667, %v3827
  %v3829 = vpop.f32.mrf.mxu0
  %v3830 = vpop.f32.mrf.mxu0
  %v3831 = vadd.f32 %v3670, %v3830
  %v3832 = vpop.f32.mrf.mxu0
  %3833 = vmatprep.mubr.bf16.mxu0 0
  %3834 = vmatmul.mubr.bf16.gmra.mxu0 %v1290
  %v3835 = vpop.f32.mrf.mxu0
  %v3836 = vadd.f32 %v3675, %v3835
  %v3837 = vpop.f32.mrf.mxu0
  %v3838 = vpop.f32.mrf.mxu0
  %v3839 = vadd.f32 %v3678, %v3838
  %v3840 = vpop.f32.mrf.mxu0
  %3841 = vmatprep.mubr.bf16.mxu0 0
  %3842 = vmatmul.mubr.bf16.gmra.mxu0 %v1297
  %v3843 = vpop.f32.mrf.mxu0
  %v3844 = vadd.f32 %v3683, %v3843
  %v3845 = vpop.f32.mrf.mxu0
  %v3846 = vpop.f32.mrf.mxu0
  %v3847 = vadd.f32 %v3686, %v3846
  %v3848 = vpop.f32.mrf.mxu0
  %3849 = vmatprep.mubr.bf16.mxu0 0
  %3850 = vmatmul.mubr.bf16.gmra.mxu0 %v1304
  %v3851 = vpop.f32.mrf.mxu0
  %v3852 = vadd.f32 %v3691, %v3851
  %v3853 = vpop.f32.mrf.mxu0
  %v3854 = vpop.f32.mrf.mxu0
  %v3855 = vadd.f32 %v3694, %v3854
  %v3856 = vpop.f32.mrf.mxu0
  %3857 = vdwg.mxu0
  %v3858 = vmax.f32 %v3056, 0.0
  %v3859 = vmax.f32 %v3058, 0.0
  %v3860 = vmax.f32 %v3732, 0.0
  %v3861 = vmax.f32 %v3060, 0.0
  %v3862 = vmax.f32 %v3062, 0.0
  %v3863 = vmax.f32 %v3735, 0.0
  %v3864 = vmax.f32 %v3066, 0.0
  %v3865 = vmax.f32 %v3068, 0.0
  %v3866 = vmax.f32 %v3740, 0.0
  %v3867 = vmax.f32 %v3070, 0.0
  %v3868 = vmax.f32 %v3072, 0.0
  %v3869 = vmax.f32 %v3743, 0.0
  %v3870 = vmax.f32 %v3076, 0.0
  %v3871 = vmax.f32 %v3078, 0.0
  %v3872 = vmax.f32 %v3748, 0.0
  %v3873 = vmax.f32 %v3080, 0.0
  %v3874 = vmax.f32 %v3082, 0.0
  %v3875 = vmax.f32 %v3751, 0.0
  %v3876 = vmax.f32 %v3086, 0.0
  %v3877 = vmax.f32 %v3088, 0.0
  %v3878 = vmax.f32 %v3756, 0.0
  %v3879 = vmax.f32 %v3090, 0.0
  %v3880 = vmax.f32 %v3092, 0.0
  %v3881 = vmax.f32 %v3759, 0.0
  %v3882 = vmax.f32 %v3096, 0.0
  %v3883 = vmax.f32 %v3098, 0.0
  %v3884 = vmax.f32 %v3764, 0.0
  %v3885 = vmax.f32 %v3100, 0.0
  %v3886 = vmax.f32 %v3102, 0.0
  %v3887 = vmax.f32 %v3767, 0.0
  %v3888 = vmax.f32 %v3106, 0.0
  %v3889 = vmax.f32 %v3108, 0.0
  %v3890 = vmax.f32 %v3772, 0.0
  %v3891 = vmax.f32 %v3110, 0.0
  %v3892 = vmax.f32 %v3112, 0.0
  %v3893 = vmax.f32 %v3775, 0.0
  %v3894 = vmax.f32 %v3116, 0.0
  %v3895 = vmax.f32 %v3118, 0.0
  %v3896 = vmax.f32 %v3780, 0.0
  %v3897 = vmax.f32 %v3120, 0.0
  %v3898 = vmax.f32 %v3122, 0.0
  %v3899 = vmax.f32 %v3783, 0.0
  %v3900 = vmax.f32 %v3126, 0.0
  %v3901 = vmax.f32 %v3128, 0.0
  %v3902 = vmax.f32 %v3788, 0.0
  %v3903 = vmax.f32 %v3130, 0.0
  %v3904 = vmax.f32 %v3132, 0.0
  %v3905 = vmax.f32 %v3791, 0.0
  %v3906 = vmax.f32 %v3136, 0.0
  %v3907 = vmax.f32 %v3138, 0.0
  %v3908 = vmax.f32 %v3796, 0.0
  %v3909 = vmax.f32 %v3140, 0.0
  %v3910 = vmax.f32 %v3142, 0.0
  %v3911 = vmax.f32 %v3799, 0.0
  %v3912 = vmax.f32 %v3146, 0.0
  %v3913 = vmax.f32 %v3148, 0.0
  %v3914 = vmax.f32 %v3804, 0.0
  %v3915 = vmax.f32 %v3150, 0.0
  %v3916 = vmax.f32 %v3152, 0.0
  %v3917 = vmax.f32 %v3807, 0.0
  %v3918 = vmax.f32 %v3156, 0.0
  %v3919 = vmax.f32 %v3158, 0.0
  %v3920 = vmax.f32 %v3812, 0.0
  %v3921 = vmax.f32 %v3160, 0.0
  %v3922 = vmax.f32 %v3162, 0.0
  %v3923 = vmax.f32 %v3815, 0.0
  %v3924 = vmax.f32 %v3166, 0.0
  %v3925 = vmax.f32 %v3168, 0.0
  %v3926 = vmax.f32 %v3820, 0.0
  %v3927 = vmax.f32 %v3170, 0.0
  %v3928 = vmax.f32 %v3172, 0.0
  %v3929 = vmax.f32 %v3823, 0.0
  %v3930 = vmax.f32 %v3176, 0.0
  %v3931 = vmax.f32 %v3178, 0.0
  %v3932 = vmax.f32 %v3828, 0.0
  %v3933 = vmax.f32 %v3180, 0.0
  %v3934 = vmax.f32 %v3182, 0.0
  %v3935 = vmax.f32 %v3831, 0.0
  %v3936 = vmax.f32 %v3186, 0.0
  %v3937 = vmax.f32 %v3188, 0.0
  %v3938 = vmax.f32 %v3836, 0.0
  %v3939 = vmax.f32 %v3190, 0.0
  %v3940 = vmax.f32 %v3192, 0.0
  %v3941 = vmax.f32 %v3839, 0.0
  %v3942 = vmax.f32 %v3196, 0.0
  %v3943 = vmax.f32 %v3198, 0.0
  %v3944 = vmax.f32 %v3844, 0.0
  %v3945 = vmax.f32 %v3200, 0.0
  %v3946 = vmax.f32 %v3202, 0.0
  %v3947 = vmax.f32 %v3847, 0.0
  %v3948 = vmax.f32 %v3206, 0.0
  %v3949 = vmax.f32 %v3208, 0.0
  %v3950 = vmax.f32 %v3852, 0.0
  %v3951 = vmax.f32 %v3210, 0.0
  %v3952 = vmax.f32 %v3212, 0.0
  %v3953 = vmax.f32 %v3855, 0.0
  %v3954 = vpack.c.bf16 %v3861, %v3858
  %v3955 = vpack.c.bf16 %v3862, %v3859
  %v3956 = vpack.c.bf16 %v3863, %v3860
  %v3957 = vpack.c.bf16 %v3867, %v3864
  %v3958 = vpack.c.bf16 %v3868, %v3865
  %v3959 = vpack.c.bf16 %v3869, %v3866
  %v3960 = vpack.c.bf16 %v3873, %v3870
  %v3961 = vpack.c.bf16 %v3874, %v3871
  %v3962 = vpack.c.bf16 %v3875, %v3872
  %v3963 = vpack.c.bf16 %v3879, %v3876
  %v3964 = vpack.c.bf16 %v3880, %v3877
  %v3965 = vpack.c.bf16 %v3881, %v3878
  %v3966 = vpack.c.bf16 %v3885, %v3882
  %v3967 = vpack.c.bf16 %v3886, %v3883
  %v3968 = vpack.c.bf16 %v3887, %v3884
  %v3969 = vpack.c.bf16 %v3891, %v3888
  %v3970 = vpack.c.bf16 %v3892, %v3889
  %v3971 = vpack.c.bf16 %v3893, %v3890
  %v3972 = vpack.c.bf16 %v3897, %v3894
  %v3973 = vpack.c.bf16 %v3898, %v3895
  %v3974 = vpack.c.bf16 %v3899, %v3896
  %v3975 = vpack.c.bf16 %v3903, %v3900
  %v3976 = vpack.c.bf16 %v3904, %v3901
  %v3977 = vpack.c.bf16 %v3905, %v3902
  %v3978 = vpack.c.bf16 %v3909, %v3906
  %v3979 = vpack.c.bf16 %v3910, %v3907
  %v3980 = vpack.c.bf16 %v3911, %v3908
  %v3981 = vpack.c.bf16 %v3915, %v3912
  %v3982 = vpack.c.bf16 %v3916, %v3913
  %v3983 = vpack.c.bf16 %v3917, %v3914
  %v3984 = vpack.c.bf16 %v3921, %v3918
  %v3985 = vpack.c.bf16 %v3922, %v3919
  %v3986 = vpack.c.bf16 %v3923, %v3920
  %v3987 = vpack.c.bf16 %v3927, %v3924
  %v3988 = vpack.c.bf16 %v3928, %v3925
  %v3989 = vpack.c.bf16 %v3929, %v3926
  %v3990 = vpack.c.bf16 %v3933, %v3930
  %v3991 = vpack.c.bf16 %v3934, %v3931
  %v3992 = vpack.c.bf16 %v3935, %v3932
  %v3993 = vpack.c.bf16 %v3939, %v3936
  %v3994 = vpack.c.bf16 %v3940, %v3937
  %v3995 = vpack.c.bf16 %v3941, %v3938
  %v3996 = vpack.c.bf16 %v3945, %v3942
  %v3997 = vpack.c.bf16 %v3946, %v3943
  %v3998 = vpack.c.bf16 %v3947, %v3944
  %v3999 = vpack.c.bf16 %v3951, %v3948
  %v4000 = vpack.c.bf16 %v3952, %v3949
  %v4001 = vpack.c.bf16 %v3953, %v3950
  %v4002 = vld [vmem:[%s5] sm:$0xf]
  %v4003 = vld [vmem:[%s5 + $0x4] sm:$0xf]
  %v4004 = vld [vmem:[%s5 + $0x8] sm:$0xf]
  %v4005 = vld [vmem:[%s5 + $0xc] sm:$0xf]
  %v4006 = vld [vmem:[%s5 + $0x10] sm:$0xf]
  %v4007 = vld [vmem:[%s5 + $0x14] sm:$0xf]
  %v4008 = vld [vmem:[%s5 + $0x18] sm:$0xf]
  %v4009 = vld [vmem:[%s5 + $0x1c] sm:$0xf]
  %v4010 = vld [vmem:[%s5 + $0x20] sm:$0xf]
  %v4011 = vld [vmem:[%s5 + $0x24] sm:$0xf]
  %v4012 = vld [vmem:[%s5 + $0x28] sm:$0xf]
  %v4013 = vld [vmem:[%s5 + $0x2c] sm:$0xf]
  %v4014 = vld [vmem:[%s5 + $0x30] sm:$0xf]
  %v4015 = vld [vmem:[%s5 + $0x34] sm:$0xf]
  %v4016 = vld [vmem:[%s5 + $0x38] sm:$0xf]
  %v4017 = vld [vmem:[%s5 + $0x3c] sm:$0xf]
  %v4018 = vld [vmem:[%s5 + $0x40] sm:$0xf]
  %v4019 = vld [vmem:[%s5 + $0x44] sm:$0xf]
  %v4020 = vld [vmem:[%s5 + $0x48] sm:$0xf]
  %v4021 = vld [vmem:[%s5 + $0x4c] sm:$0xf]
  %v4022 = vld [vmem:[%s5 + $0x50] sm:$0xf]
  %v4023 = vld [vmem:[%s5 + $0x54] sm:$0xf]
  %v4024 = vld [vmem:[%s5 + $0x58] sm:$0xf]
  %v4025 = vld [vmem:[%s5 + $0x5c] sm:$0xf]
  %v4026 = vld [vmem:[%s5 + $0x60] sm:$0xf]
  %v4027 = vld [vmem:[%s5 + $0x64] sm:$0xf]
  %v4028 = vld [vmem:[%s5 + $0x68] sm:$0xf]
  %v4029 = vld [vmem:[%s5 + $0x6c] sm:$0xf]
  %v4030 = vld [vmem:[%s5 + $0x70] sm:$0xf]
  %v4031 = vld [vmem:[%s5 + $0x74] sm:$0xf]
  %v4032 = vld [vmem:[%s5 + $0x78] sm:$0xf]
  %v4033 = vld [vmem:[%s5 + $0x7c] sm:$0xf]
  %v4034 = vld [vmem:[%s5 + $0x80] sm:$0xf]
  %v4035 = vld [vmem:[%s5 + $0x84] sm:$0xf]
  %v4036 = vld [vmem:[%s5 + $0x88] sm:$0xf]
  %v4037 = vld [vmem:[%s5 + $0x8c] sm:$0xf]
  %v4038 = vld [vmem:[%s5 + $0x90] sm:$0xf]
  %v4039 = vld [vmem:[%s5 + $0x94] sm:$0xf]
  %v4040 = vld [vmem:[%s5 + $0x98] sm:$0xf]
  %v4041 = vld [vmem:[%s5 + $0x9c] sm:$0xf]
  %v4042 = vld [vmem:[%s5 + $0xa0] sm:$0xf]
  %v4043 = vld [vmem:[%s5 + $0xa4] sm:$0xf]
  %v4044 = vld [vmem:[%s5 + $0xa8] sm:$0xf]
  %v4045 = vld [vmem:[%s5 + $0xac] sm:$0xf]
  %v4046 = vld [vmem:[%s5 + $0xb0] sm:$0xf]
  %v4047 = vld [vmem:[%s5 + $0xb4] sm:$0xf]
  %v4048 = vld [vmem:[%s5 + $0xb8] sm:$0xf]
  %v4049 = vld [vmem:[%s5 + $0xbc] sm:$0xf]
  %v4050 = vld [vmem:[%s6] sm:$0x1]
  %v4052 = vlaneseq
  %v4053 = vshrl.u32 %v4052, 7
  %v4054 = vsub.s32 0, %v4053
  %v4055 = vrot.slane %v4050, %v4054
  %v4105 = vunpack.c.l.b16 %v4002
  %v4106 = vunpack.c.l.b16 %v4003
  %v4107 = vunpack.c.l.b16 %v4004
  %v4108 = vunpack.c.l.b16 %v4005
  %v4109 = vunpack.c.l.b16 %v4006
  %v4110 = vunpack.c.l.b16 %v4007
  %v4111 = vunpack.c.l.b16 %v4008
  %v4112 = vunpack.c.l.b16 %v4009
  %v4113 = vunpack.c.l.b16 %v4010
  %v4114 = vunpack.c.l.b16 %v4011
  %v4115 = vunpack.c.l.b16 %v4012
  %v4116 = vunpack.c.l.b16 %v4013
  %v4117 = vunpack.c.l.b16 %v4014
  %v4118 = vunpack.c.l.b16 %v4015
  %v4119 = vunpack.c.l.b16 %v4016
  %v4120 = vunpack.c.l.b16 %v4017
  %v4121 = vunpack.c.l.b16 %v4018
  %v4122 = vunpack.c.l.b16 %v4019
  %v4123 = vunpack.c.l.b16 %v4020
  %v4124 = vunpack.c.l.b16 %v4021
  %v4125 = vunpack.c.l.b16 %v4022
  %v4126 = vunpack.c.l.b16 %v4023
  %v4127 = vunpack.c.l.b16 %v4024
  %v4128 = vunpack.c.l.b16 %v4025
  %v4129 = vunpack.c.l.b16 %v4026
  %v4130 = vunpack.c.l.b16 %v4027
  %v4131 = vunpack.c.l.b16 %v4028
  %v4132 = vunpack.c.l.b16 %v4029
  %v4133 = vunpack.c.l.b16 %v4030
  %v4134 = vunpack.c.l.b16 %v4031
  %v4135 = vunpack.c.l.b16 %v4032
  %v4136 = vunpack.c.l.b16 %v4033
  %v4137 = vunpack.c.l.b16 %v4034
  %v4138 = vunpack.c.l.b16 %v4035
  %v4139 = vunpack.c.l.b16 %v4036
  %v4140 = vunpack.c.l.b16 %v4037
  %v4141 = vunpack.c.l.b16 %v4038
  %v4142 = vunpack.c.l.b16 %v4039
  %v4143 = vunpack.c.l.b16 %v4040
  %v4144 = vunpack.c.l.b16 %v4041
  %v4145 = vunpack.c.l.b16 %v4042
  %v4146 = vunpack.c.l.b16 %v4043
  %v4147 = vunpack.c.l.b16 %v4044
  %v4148 = vunpack.c.l.b16 %v4045
  %v4149 = vunpack.c.l.b16 %v4046
  %v4150 = vunpack.c.l.b16 %v4047
  %v4151 = vunpack.c.l.b16 %v4048
  %v4152 = vunpack.c.l.b16 %v4049
  %v4153 = vpack.c.b16 %v4106, %v4105
  %v4154 = vpack.c.b16 %v4108, %v4107
  %v4155 = vpack.c.b16 %v4110, %v4109
  %v4156 = vpack.c.b16 %v4112, %v4111
  %v4157 = vpack.c.b16 %v4114, %v4113
  %v4158 = vpack.c.b16 %v4116, %v4115
  %v4159 = vpack.c.b16 %v4118, %v4117
  %v4160 = vpack.c.b16 %v4120, %v4119
  %v4161 = vpack.c.b16 %v4122, %v4121
  %v4162 = vpack.c.b16 %v4124, %v4123
  %v4163 = vpack.c.b16 %v4126, %v4125
  %v4164 = vpack.c.b16 %v4128, %v4127
  %v4165 = vpack.c.b16 %v4130, %v4129
  %v4166 = vpack.c.b16 %v4132, %v4131
  %v4167 = vpack.c.b16 %v4134, %v4133
  %v4168 = vpack.c.b16 %v4136, %v4135
  %v4169 = vpack.c.b16 %v4138, %v4137
  %v4170 = vpack.c.b16 %v4140, %v4139
  %v4171 = vpack.c.b16 %v4142, %v4141
  %v4172 = vpack.c.b16 %v4144, %v4143
  %v4173 = vpack.c.b16 %v4146, %v4145
  %v4174 = vpack.c.b16 %v4148, %v4147
  %v4175 = vpack.c.b16 %v4150, %v4149
  %v4176 = vpack.c.b16 %v4152, %v4151
  %4201 = vmatprep.subr.bf16.mxu0 0
  %4202 = vmatpush1.bf16.msra.mxu0 %v4160
  %4203 = vmatprep.subr.bf16.mxu0 0
  %4204 = vmatpush1.bf16.msra.mxu0 %v4159
  %4205 = vmatprep.subr.bf16.mxu0 0
  %4206 = vmatpush1.bf16.msra.mxu0 %v4158
  %4207 = vmatprep.subr.bf16.mxu0 0
  %4208 = vmatpush1.bf16.msra.mxu0 %v4157
  %4209 = vmatprep.subr.bf16.mxu0 0
  %4210 = vmatpush1.bf16.msra.mxu0 %v4156
  %4211 = vmatprep.subr.bf16.mxu0 0
  %4212 = vmatpush1.bf16.msra.mxu0 %v4155
  %4213 = vmatprep.subr.bf16.mxu0 0
  %4214 = vmatpush1.bf16.msra.mxu0 %v4154
  %4215 = vmatprep.subr.bf16.mxu0 0
  %4216 = vmatpush1.bf16.msra.mxu0 %v4153
  %4217 = vmatprep.subr.bf16.mxu0 0
  %4218 = vmatpush2.bf16.msra.mxu0 %v4168
  %4219 = vmatprep.subr.bf16.mxu0 0
  %4220 = vmatpush2.bf16.msra.mxu0 %v4167
  %4221 = vmatprep.subr.bf16.mxu0 0
  %4222 = vmatpush2.bf16.msra.mxu0 %v4166
  %4223 = vmatprep.subr.bf16.mxu0 0
  %4224 = vmatpush2.bf16.msra.mxu0 %v4165
  %4225 = vmatprep.subr.bf16.mxu0 0
  %4226 = vmatpush2.bf16.msra.mxu0 %v4164
  %4227 = vmatprep.subr.bf16.mxu0 0
  %4228 = vmatpush2.bf16.msra.mxu0 %v4163
  %4229 = vmatprep.subr.bf16.mxu0 0
  %4230 = vmatpush2.bf16.msra.mxu0 %v4162
  %4231 = vmatprep.subr.bf16.mxu0 0
  %4232 = vmatpush2.bf16.msra.mxu0 %v4161
  %4233 = vmatprep.mubr.bf16.mxu0 %v3955
  %4234 = vmatmul.mubr.bf16.gmra.mxu0 %v3954
  %v4235 = vpop.f32.mrf.mxu0
  %v4236 = vadd.f32 %v4055, %v4235
  %v4237 = vpop.f32.mrf.mxu0
  %v4238 = vpop.f32.mrf.mxu0
  %v4239 = vadd.f32 %v4055, %v4238
  %v4240 = vpop.f32.mrf.mxu0
  %4241 = vmatprep.mubr.bf16.mxu0 %v3958
  %4242 = vmatmul.mubr.bf16.gmra.mxu0 %v3957
  %v4243 = vpop.f32.mrf.mxu0
  %v4244 = vadd.f32 %v4055, %v4243
  %v4245 = vpop.f32.mrf.mxu0
  %v4246 = vpop.f32.mrf.mxu0
  %v4247 = vadd.f32 %v4055, %v4246
  %v4248 = vpop.f32.mrf.mxu0
  %4249 = vmatprep.mubr.bf16.mxu0 %v3961
  %4250 = vmatmul.mubr.bf16.gmra.mxu0 %v3960
  %v4251 = vpop.f32.mrf.mxu0
  %v4252 = vadd.f32 %v4055, %v4251
  %v4253 = vpop.f32.mrf.mxu0
  %v4254 = vpop.f32.mrf.mxu0
  %v4255 = vadd.f32 %v4055, %v4254
  %v4256 = vpop.f32.mrf.mxu0
  %4257 = vmatprep.mubr.bf16.mxu0 %v3964
  %4258 = vmatmul.mubr.bf16.gmra.mxu0 %v3963
  %v4259 = vpop.f32.mrf.mxu0
  %v4260 = vadd.f32 %v4055, %v4259
  %v4261 = vpop.f32.mrf.mxu0
  %v4262 = vpop.f32.mrf.mxu0
  %v4263 = vadd.f32 %v4055, %v4262
  %v4264 = vpop.f32.mrf.mxu0
  %4265 = vmatprep.mubr.bf16.mxu0 %v3967
  %4266 = vmatmul.mubr.bf16.gmra.mxu0 %v3966
  %v4267 = vpop.f32.mrf.mxu0
  %v4268 = vadd.f32 %v4055, %v4267
  %v4269 = vpop.f32.mrf.mxu0
  %v4270 = vpop.f32.mrf.mxu0
  %v4271 = vadd.f32 %v4055, %v4270
  %v4272 = vpop.f32.mrf.mxu0
  %4273 = vmatprep.mubr.bf16.mxu0 %v3970
  %4274 = vmatmul.mubr.bf16.gmra.mxu0 %v3969
  %v4275 = vpop.f32.mrf.mxu0
  %v4276 = vadd.f32 %v4055, %v4275
  %v4277 = vpop.f32.mrf.mxu0
  %v4278 = vpop.f32.mrf.mxu0
  %v4279 = vadd.f32 %v4055, %v4278
  %v4280 = vpop.f32.mrf.mxu0
  %4281 = vmatprep.mubr.bf16.mxu0 %v3973
  %4282 = vmatmul.mubr.bf16.gmra.mxu0 %v3972
  %v4283 = vpop.f32.mrf.mxu0
  %v4284 = vadd.f32 %v4055, %v4283
  %v4285 = vpop.f32.mrf.mxu0
  %v4286 = vpop.f32.mrf.mxu0
  %v4287 = vadd.f32 %v4055, %v4286
  %v4288 = vpop.f32.mrf.mxu0
  %4289 = vmatprep.mubr.bf16.mxu0 %v3976
  %4290 = vmatmul.mubr.bf16.gmra.mxu0 %v3975
  %v4291 = vpop.f32.mrf.mxu0
  %v4292 = vadd.f32 %v4055, %v4291
  %v4293 = vpop.f32.mrf.mxu0
  %v4294 = vpop.f32.mrf.mxu0
  %v4295 = vadd.f32 %v4055, %v4294
  %v4296 = vpop.f32.mrf.mxu0
  %4297 = vmatprep.mubr.bf16.mxu0 %v3979
  %4298 = vmatmul.mubr.bf16.gmra.mxu0 %v3978
  %v4299 = vpop.f32.mrf.mxu0
  %v4300 = vadd.f32 %v4055, %v4299
  %v4301 = vpop.f32.mrf.mxu0
  %v4302 = vpop.f32.mrf.mxu0
  %v4303 = vadd.f32 %v4055, %v4302
  %v4304 = vpop.f32.mrf.mxu0
  %4305 = vmatprep.mubr.bf16.mxu0 %v3982
  %4306 = vmatmul.mubr.bf16.gmra.mxu0 %v3981
  %v4307 = vpop.f32.mrf.mxu0
  %v4308 = vadd.f32 %v4055, %v4307
  %v4309 = vpop.f32.mrf.mxu0
  %v4310 = vpop.f32.mrf.mxu0
  %v4311 = vadd.f32 %v4055, %v4310
  %v4312 = vpop.f32.mrf.mxu0
  %4313 = vmatprep.mubr.bf16.mxu0 %v3985
  %4314 = vmatmul.mubr.bf16.gmra.mxu0 %v3984
  %v4315 = vpop.f32.mrf.mxu0
  %v4316 = vadd.f32 %v4055, %v4315
  %v4317 = vpop.f32.mrf.mxu0
  %v4318 = vpop.f32.mrf.mxu0
  %v4319 = vadd.f32 %v4055, %v4318
  %v4320 = vpop.f32.mrf.mxu0
  %4321 = vmatprep.mubr.bf16.mxu0 %v3988
  %4322 = vmatmul.mubr.bf16.gmra.mxu0 %v3987
  %v4323 = vpop.f32.mrf.mxu0
  %v4324 = vadd.f32 %v4055, %v4323
  %v4325 = vpop.f32.mrf.mxu0
  %v4326 = vpop.f32.mrf.mxu0
  %v4327 = vadd.f32 %v4055, %v4326
  %v4328 = vpop.f32.mrf.mxu0
  %4329 = vmatprep.mubr.bf16.mxu0 %v3991
  %4330 = vmatmul.mubr.bf16.gmra.mxu0 %v3990
  %v4331 = vpop.f32.mrf.mxu0
  %v4332 = vadd.f32 %v4055, %v4331
  %v4333 = vpop.f32.mrf.mxu0
  %v4334 = vpop.f32.mrf.mxu0
  %v4335 = vadd.f32 %v4055, %v4334
  %v4336 = vpop.f32.mrf.mxu0
  %4337 = vmatprep.mubr.bf16.mxu0 %v3994
  %4338 = vmatmul.mubr.bf16.gmra.mxu0 %v3993
  %v4339 = vpop.f32.mrf.mxu0
  %v4340 = vadd.f32 %v4055, %v4339
  %v4341 = vpop.f32.mrf.mxu0
  %v4342 = vpop.f32.mrf.mxu0
  %v4343 = vadd.f32 %v4055, %v4342
  %v4344 = vpop.f32.mrf.mxu0
  %4345 = vmatprep.mubr.bf16.mxu0 %v3997
  %4346 = vmatmul.mubr.bf16.gmra.mxu0 %v3996
  %v4347 = vpop.f32.mrf.mxu0
  %v4348 = vadd.f32 %v4055, %v4347
  %v4349 = vpop.f32.mrf.mxu0
  %v4350 = vpop.f32.mrf.mxu0
  %v4351 = vadd.f32 %v4055, %v4350
  %v4352 = vpop.f32.mrf.mxu0
  %4353 = vmatprep.mubr.bf16.mxu0 %v4000
  %4354 = vmatmul.mubr.bf16.gmra.mxu0 %v3999
  %v4355 = vpop.f32.mrf.mxu0
  %v4356 = vadd.f32 %v4055, %v4355
  %v4357 = vpop.f32.mrf.mxu0
  %v4358 = vpop.f32.mrf.mxu0
  %v4359 = vadd.f32 %v4055, %v4358
  %v4360 = vpop.f32.mrf.mxu0
  %4361 = vdwg.mxu0
  %4362 = vmatprep.subr.bf16.mxu0 0
  %4363 = vmatpush1.bf16.msra.mxu0 %v4176
  %4364 = vmatprep.subr.bf16.mxu0 0
  %4365 = vmatpush1.bf16.msra.mxu0 %v4175
  %4366 = vmatprep.subr.bf16.mxu0 0
  %4367 = vmatpush1.bf16.msra.mxu0 %v4174
  %4368 = vmatprep.subr.bf16.mxu0 0
  %4369 = vmatpush1.bf16.msra.mxu0 %v4173
  %4370 = vmatprep.subr.bf16.mxu0 0
  %4371 = vmatpush1.bf16.msra.mxu0 %v4172
  %4372 = vmatprep.subr.bf16.mxu0 0
  %4373 = vmatpush1.bf16.msra.mxu0 %v4171
  %4374 = vmatprep.subr.bf16.mxu0 0
  %4375 = vmatpush1.bf16.msra.mxu0 %v4170
  %4376 = vmatprep.subr.bf16.mxu0 0
  %4377 = vmatpush1.bf16.msra.mxu0 %v4169
  %4378 = vmatprep.subr.bf16.mxu0 0
  %4379 = vmatpush2.bf16.msra.mxu0 0
  %4380 = vmatprep.subr.bf16.mxu0 0
  %4381 = vmatpush2.bf16.msra.mxu0 0
  %4382 = vmatprep.subr.bf16.mxu0 0
  %4383 = vmatpush2.bf16.msra.mxu0 0
  %4384 = vmatprep.subr.bf16.mxu0 0
  %4385 = vmatpush2.bf16.msra.mxu0 0
  %4386 = vmatprep.subr.bf16.mxu0 0
  %4387 = vmatpush2.bf16.msra.mxu0 0
  %4388 = vmatprep.subr.bf16.mxu0 0
  %4389 = vmatpush2.bf16.msra.mxu0 0
  %4390 = vmatprep.subr.bf16.mxu0 0
  %4391 = vmatpush2.bf16.msra.mxu0 0
  %4392 = vmatprep.subr.bf16.mxu0 0
  %4393 = vmatpush2.bf16.msra.mxu0 0
  %4394 = vmatprep.mubr.bf16.mxu0 0
  %4395 = vmatmul.mubr.bf16.gmra.mxu0 %v3956
  %v4396 = vpop.f32.mrf.mxu0
  %v4397 = vadd.f32 %v4236, %v4396
  %v4398 = vpop.f32.mrf.mxu0
  %v4399 = vpop.f32.mrf.mxu0
  %v4400 = vadd.f32 %v4239, %v4399
  %v4401 = vpop.f32.mrf.mxu0
  %4402 = vmatprep.mubr.bf16.mxu0 0
  %4403 = vmatmul.mubr.bf16.gmra.mxu0 %v3959
  %v4404 = vpop.f32.mrf.mxu0
  %v4405 = vadd.f32 %v4244, %v4404
  %v4406 = vpop.f32.mrf.mxu0
  %v4407 = vpop.f32.mrf.mxu0
  %v4408 = vadd.f32 %v4247, %v4407
  %v4409 = vpop.f32.mrf.mxu0
  %4410 = vmatprep.mubr.bf16.mxu0 0
  %4411 = vmatmul.mubr.bf16.gmra.mxu0 %v3962
  %v4412 = vpop.f32.mrf.mxu0
  %v4413 = vadd.f32 %v4252, %v4412
  %v4414 = vpop.f32.mrf.mxu0
  %v4415 = vpop.f32.mrf.mxu0
  %v4416 = vadd.f32 %v4255, %v4415
  %v4417 = vpop.f32.mrf.mxu0
  %4418 = vmatprep.mubr.bf16.mxu0 0
  %4419 = vmatmul.mubr.bf16.gmra.mxu0 %v3965
  %v4420 = vpop.f32.mrf.mxu0
  %v4421 = vadd.f32 %v4260, %v4420
  %v4422 = vpop.f32.mrf.mxu0
  %v4423 = vpop.f32.mrf.mxu0
  %v4424 = vadd.f32 %v4263, %v4423
  %v4425 = vpop.f32.mrf.mxu0
  %4426 = vmatprep.mubr.bf16.mxu0 0
  %4427 = vmatmul.mubr.bf16.gmra.mxu0 %v3968
  %v4428 = vpop.f32.mrf.mxu0
  %v4429 = vadd.f32 %v4268, %v4428
  %v4430 = vpop.f32.mrf.mxu0
  %v4431 = vpop.f32.mrf.mxu0
  %v4432 = vadd.f32 %v4271, %v4431
  %v4433 = vpop.f32.mrf.mxu0
  %4434 = vmatprep.mubr.bf16.mxu0 0
  %4435 = vmatmul.mubr.bf16.gmra.mxu0 %v3971
  %v4436 = vpop.f32.mrf.mxu0
  %v4437 = vadd.f32 %v4276, %v4436
  %v4438 = vpop.f32.mrf.mxu0
  %v4439 = vpop.f32.mrf.mxu0
  %v4440 = vadd.f32 %v4279, %v4439
  %v4441 = vpop.f32.mrf.mxu0
  %4442 = vmatprep.mubr.bf16.mxu0 0
  %4443 = vmatmul.mubr.bf16.gmra.mxu0 %v3974
  %v4444 = vpop.f32.mrf.mxu0
  %v4445 = vadd.f32 %v4284, %v4444
  %v4446 = vpop.f32.mrf.mxu0
  %v4447 = vpop.f32.mrf.mxu0
  %v4448 = vadd.f32 %v4287, %v4447
  %v4449 = vpop.f32.mrf.mxu0
  %4450 = vmatprep.mubr.bf16.mxu0 0
  %4451 = vmatmul.mubr.bf16.gmra.mxu0 %v3977
  %v4452 = vpop.f32.mrf.mxu0
  %v4453 = vadd.f32 %v4292, %v4452
  %v4454 = vpop.f32.mrf.mxu0
  %v4455 = vpop.f32.mrf.mxu0
  %v4456 = vadd.f32 %v4295, %v4455
  %v4457 = vpop.f32.mrf.mxu0
  %4458 = vmatprep.mubr.bf16.mxu0 0
  %4459 = vmatmul.mubr.bf16.gmra.mxu0 %v3980
  %v4460 = vpop.f32.mrf.mxu0
  %v4461 = vadd.f32 %v4300, %v4460
  %v4462 = vpop.f32.mrf.mxu0
  %v4463 = vpop.f32.mrf.mxu0
  %v4464 = vadd.f32 %v4303, %v4463
  %v4465 = vpop.f32.mrf.mxu0
  %4466 = vmatprep.mubr.bf16.mxu0 0
  %4467 = vmatmul.mubr.bf16.gmra.mxu0 %v3983
  %v4468 = vpop.f32.mrf.mxu0
  %v4469 = vadd.f32 %v4308, %v4468
  %v4470 = vpop.f32.mrf.mxu0
  %v4471 = vpop.f32.mrf.mxu0
  %v4472 = vadd.f32 %v4311, %v4471
  %v4473 = vpop.f32.mrf.mxu0
  %4474 = vmatprep.mubr.bf16.mxu0 0
  %4475 = vmatmul.mubr.bf16.gmra.mxu0 %v3986
  %v4476 = vpop.f32.mrf.mxu0
  %v4477 = vadd.f32 %v4316, %v4476
  %v4478 = vpop.f32.mrf.mxu0
  %v4479 = vpop.f32.mrf.mxu0
  %v4480 = vadd.f32 %v4319, %v4479
  %v4481 = vpop.f32.mrf.mxu0
  %4482 = vmatprep.mubr.bf16.mxu0 0
  %4483 = vmatmul.mubr.bf16.gmra.mxu0 %v3989
  %v4484 = vpop.f32.mrf.mxu0
  %v4485 = vadd.f32 %v4324, %v4484
  %v4486 = vpop.f32.mrf.mxu0
  %v4487 = vpop.f32.mrf.mxu0
  %v4488 = vadd.f32 %v4327, %v4487
  %v4489 = vpop.f32.mrf.mxu0
  %4490 = vmatprep.mubr.bf16.mxu0 0
  %4491 = vmatmul.mubr.bf16.gmra.mxu0 %v3992
  %v4492 = vpop.f32.mrf.mxu0
  %v4493 = vadd.f32 %v4332, %v4492
  %v4494 = vpop.f32.mrf.mxu0
  %v4495 = vpop.f32.mrf.mxu0
  %v4496 = vadd.f32 %v4335, %v4495
  %v4497 = vpop.f32.mrf.mxu0
  %4498 = vmatprep.mubr.bf16.mxu0 0
  %4499 = vmatmul.mubr.bf16.gmra.mxu0 %v3995
  %v4500 = vpop.f32.mrf.mxu0
  %v4501 = vadd.f32 %v4340, %v4500
  %v4502 = vpop.f32.mrf.mxu0
  %v4503 = vpop.f32.mrf.mxu0
  %v4504 = vadd.f32 %v4343, %v4503
  %v4505 = vpop.f32.mrf.mxu0
  %4506 = vmatprep.mubr.bf16.mxu0 0
  %4507 = vmatmul.mubr.bf16.gmra.mxu0 %v3998
  %v4508 = vpop.f32.mrf.mxu0
  %v4509 = vadd.f32 %v4348, %v4508
  %v4510 = vpop.f32.mrf.mxu0
  %v4511 = vpop.f32.mrf.mxu0
  %v4512 = vadd.f32 %v4351, %v4511
  %v4513 = vpop.f32.mrf.mxu0
  %4514 = vmatprep.mubr.bf16.mxu0 0
  %4515 = vmatmul.mubr.bf16.gmra.mxu0 %v4001
  %v4516 = vpop.f32.mrf.mxu0
  %v4517 = vadd.f32 %v4356, %v4516
  %v4518 = vpop.f32.mrf.mxu0
  %v4519 = vpop.f32.mrf.mxu0
  %v4520 = vadd.f32 %v4359, %v4519
  %v4521 = vpop.f32.mrf.mxu0
  %4522 = vdwg.mxu0
  %v4523 = vmax.f32 %v4397, 0.0
  %v4524 = vmax.f32 %v4400, 0.0
  %v4525 = vmax.f32 %v4405, 0.0
  %v4526 = vmax.f32 %v4408, 0.0
  %v4527 = vmax.f32 %v4413, 0.0
  %v4528 = vmax.f32 %v4416, 0.0
  %v4529 = vmax.f32 %v4421, 0.0
  %v4530 = vmax.f32 %v4424, 0.0
  %v4531 = vmax.f32 %v4429, 0.0
  %v4532 = vmax.f32 %v4432, 0.0
  %v4533 = vmax.f32 %v4437, 0.0
  %v4534 = vmax.f32 %v4440, 0.0
  %v4535 = vmax.f32 %v4445, 0.0
  %v4536 = vmax.f32 %v4448, 0.0
  %v4537 = vmax.f32 %v4453, 0.0
  %v4538 = vmax.f32 %v4456, 0.0
  %v4539 = vmax.f32 %v4461, 0.0
  %v4540 = vmax.f32 %v4464, 0.0
  %v4541 = vmax.f32 %v4469, 0.0
  %v4542 = vmax.f32 %v4472, 0.0
  %v4543 = vmax.f32 %v4477, 0.0
  %v4544 = vmax.f32 %v4480, 0.0
  %v4545 = vmax.f32 %v4485, 0.0
  %v4546 = vmax.f32 %v4488, 0.0
  %v4547 = vmax.f32 %v4493, 0.0
  %v4548 = vmax.f32 %v4496, 0.0
  %v4549 = vmax.f32 %v4501, 0.0
  %v4550 = vmax.f32 %v4504, 0.0
  %v4551 = vmax.f32 %v4509, 0.0
  %v4552 = vmax.f32 %v4512, 0.0
  %v4553 = vmax.f32 %v4517, 0.0
  %v4554 = vmax.f32 %v4520, 0.0
  %v4555 = vpack.c.bf16 %v4524, %v4523
  %v4556 = vpack.c.bf16 %v4526, %v4525
  %v4557 = vpack.c.bf16 %v4528, %v4527
  %v4558 = vpack.c.bf16 %v4530, %v4529
  %v4559 = vpack.c.bf16 %v4532, %v4531
  %v4560 = vpack.c.bf16 %v4534, %v4533
  %v4561 = vpack.c.bf16 %v4536, %v4535
  %v4562 = vpack.c.bf16 %v4538, %v4537
  %v4563 = vpack.c.bf16 %v4540, %v4539
  %v4564 = vpack.c.bf16 %v4542, %v4541
  %v4565 = vpack.c.bf16 %v4544, %v4543
  %v4566 = vpack.c.bf16 %v4546, %v4545
  %v4567 = vpack.c.bf16 %v4548, %v4547
  %v4568 = vpack.c.bf16 %v4550, %v4549
  %v4569 = vpack.c.bf16 %v4552, %v4551
  %v4570 = vpack.c.bf16 %v4554, %v4553
  %v4571 = vld [vmem:[%s7] sm:$0xf]
  %v4572 = vld [vmem:[%s7 + $0x4] sm:$0xf]
  %v4573 = vld [vmem:[%s7 + $0x8] sm:$0xf]
  %v4574 = vld [vmem:[%s7 + $0xc] sm:$0xf]
  %v4575 = vld [vmem:[%s7 + $0x10] sm:$0xf]
  %v4576 = vld [vmem:[%s7 + $0x14] sm:$0xf]
  %v4577 = vld [vmem:[%s7 + $0x18] sm:$0xf]
  %v4578 = vld [vmem:[%s7 + $0x1c] sm:$0xf]
  %v4579 = vld [vmem:[%s7 + $0x20] sm:$0xf]
  %v4580 = vld [vmem:[%s7 + $0x24] sm:$0xf]
  %v4581 = vld [vmem:[%s7 + $0x28] sm:$0xf]
  %v4582 = vld [vmem:[%s7 + $0x2c] sm:$0xf]
  %v4583 = vld [vmem:[%s7 + $0x30] sm:$0xf]
  %v4584 = vld [vmem:[%s7 + $0x34] sm:$0xf]
  %v4585 = vld [vmem:[%s7 + $0x38] sm:$0xf]
  %v4586 = vld [vmem:[%s7 + $0x3c] sm:$0xf]
  %v4587 = vld [vmem:[%s8] sm:$0x1]
  %v4589 = vlaneseq
  %v4590 = vshrl.u32 %v4589, 7
  %v4591 = vsub.s32 0, %v4590
  %v4592 = vrot.slane %v4587, %v4591
  %v4610 = vunpack.c.l.b16 %v4571
  %v4611 = vunpack.c.l.b16 %v4572
  %v4612 = vunpack.c.l.b16 %v4573
  %v4613 = vunpack.c.l.b16 %v4574
  %v4614 = vunpack.c.l.b16 %v4575
  %v4615 = vunpack.c.l.b16 %v4576
  %v4616 = vunpack.c.l.b16 %v4577
  %v4617 = vunpack.c.l.b16 %v4578
  %v4618 = vunpack.c.l.b16 %v4579
  %v4619 = vunpack.c.l.b16 %v4580
  %v4620 = vunpack.c.l.b16 %v4581
  %v4621 = vunpack.c.l.b16 %v4582
  %v4622 = vunpack.c.l.b16 %v4583
  %v4623 = vunpack.c.l.b16 %v4584
  %v4624 = vunpack.c.l.b16 %v4585
  %v4625 = vunpack.c.l.b16 %v4586
  %v4626 = vpack.c.b16 %v4611, %v4610
  %v4627 = vpack.c.b16 %v4613, %v4612
  %v4628 = vpack.c.b16 %v4615, %v4614
  %v4629 = vpack.c.b16 %v4617, %v4616
  %v4630 = vpack.c.b16 %v4619, %v4618
  %v4631 = vpack.c.b16 %v4621, %v4620
  %v4632 = vpack.c.b16 %v4623, %v4622
  %v4633 = vpack.c.b16 %v4625, %v4624
  %4642 = vmatprep.subr.bf16.mxu0 0
  %4643 = vmatpush1.bf16.msra.mxu0 %v4633
  %4644 = vmatprep.subr.bf16.mxu0 0
  %4645 = vmatpush1.bf16.msra.mxu0 %v4632
  %4646 = vmatprep.subr.bf16.mxu0 0
  %4647 = vmatpush1.bf16.msra.mxu0 %v4631
  %4648 = vmatprep.subr.bf16.mxu0 0
  %4649 = vmatpush1.bf16.msra.mxu0 %v4630
  %4650 = vmatprep.subr.bf16.mxu0 0
  %4651 = vmatpush1.bf16.msra.mxu0 %v4629
  %4652 = vmatprep.subr.bf16.mxu0 0
  %4653 = vmatpush1.bf16.msra.mxu0 %v4628
  %4654 = vmatprep.subr.bf16.mxu0 0
  %4655 = vmatpush1.bf16.msra.mxu0 %v4627
  %4656 = vmatprep.subr.bf16.mxu0 0
  %4657 = vmatpush1.bf16.msra.mxu0 %v4626
  %4658 = vmatprep.subr.bf16.mxu0 0
  %4659 = vmatpush2.bf16.msra.mxu0 0
  %4660 = vmatprep.subr.bf16.mxu0 0
  %4661 = vmatpush2.bf16.msra.mxu0 0
  %4662 = vmatprep.subr.bf16.mxu0 0
  %4663 = vmatpush2.bf16.msra.mxu0 0
  %4664 = vmatprep.subr.bf16.mxu0 0
  %4665 = vmatpush2.bf16.msra.mxu0 0
  %4666 = vmatprep.subr.bf16.mxu0 0
  %4667 = vmatpush2.bf16.msra.mxu0 0
  %4668 = vmatprep.subr.bf16.mxu0 0
  %4669 = vmatpush2.bf16.msra.mxu0 0
  %4670 = vmatprep.subr.bf16.mxu0 0
  %4671 = vmatpush2.bf16.msra.mxu0 0
  %4672 = vmatprep.subr.bf16.mxu0 0
  %4673 = vmatpush2.bf16.msra.mxu0 0
  %4674 = vmatprep.mubr.bf16.mxu0 0
  %4675 = vmatmul.mubr.bf16.gmra.mxu0 %v4555
  %v4676 = vpop.f32.mrf.mxu0
  %v4677 = vadd.f32 %v4592, %v4676
  %v4678 = vpop.f32.mrf.mxu0
  %v4679 = vpop.f32.mrf.mxu0
  %v4680 = vadd.f32 %v4592, %v4679
  %v4681 = vpop.f32.mrf.mxu0
  %4682 = vmatprep.mubr.bf16.mxu0 0
  %4683 = vmatmul.mubr.bf16.gmra.mxu0 %v4556
  %v4684 = vpop.f32.mrf.mxu0
  %v4685 = vadd.f32 %v4592, %v4684
  %v4686 = vpop.f32.mrf.mxu0
  %v4687 = vpop.f32.mrf.mxu0
  %v4688 = vadd.f32 %v4592, %v4687
  %v4689 = vpop.f32.mrf.mxu0
  %4690 = vmatprep.mubr.bf16.mxu0 0
  %4691 = vmatmul.mubr.bf16.gmra.mxu0 %v4557
  %v4692 = vpop.f32.mrf.mxu0
  %v4693 = vadd.f32 %v4592, %v4692
  %v4694 = vpop.f32.mrf.mxu0
  %v4695 = vpop.f32.mrf.mxu0
  %v4696 = vadd.f32 %v4592, %v4695
  %v4697 = vpop.f32.mrf.mxu0
  %4698 = vmatprep.mubr.bf16.mxu0 0
  %4699 = vmatmul.mubr.bf16.gmra.mxu0 %v4558
  %v4700 = vpop.f32.mrf.mxu0
  %v4701 = vadd.f32 %v4592, %v4700
  %v4702 = vpop.f32.mrf.mxu0
  %v4703 = vpop.f32.mrf.mxu0
  %v4704 = vadd.f32 %v4592, %v4703
  %v4705 = vpop.f32.mrf.mxu0
  %4706 = vmatprep.mubr.bf16.mxu0 0
  %4707 = vmatmul.mubr.bf16.gmra.mxu0 %v4559
  %v4708 = vpop.f32.mrf.mxu0
  %v4709 = vadd.f32 %v4592, %v4708
  %v4710 = vpop.f32.mrf.mxu0
  %v4711 = vpop.f32.mrf.mxu0
  %v4712 = vadd.f32 %v4592, %v4711
  %v4713 = vpop.f32.mrf.mxu0
  %4714 = vmatprep.mubr.bf16.mxu0 0
  %4715 = vmatmul.mubr.bf16.gmra.mxu0 %v4560
  %v4716 = vpop.f32.mrf.mxu0
  %v4717 = vadd.f32 %v4592, %v4716
  %v4718 = vpop.f32.mrf.mxu0
  %v4719 = vpop.f32.mrf.mxu0
  %v4720 = vadd.f32 %v4592, %v4719
  %v4721 = vpop.f32.mrf.mxu0
  %4722 = vmatprep.mubr.bf16.mxu0 0
  %4723 = vmatmul.mubr.bf16.gmra.mxu0 %v4561
  %v4724 = vpop.f32.mrf.mxu0
  %v4725 = vadd.f32 %v4592, %v4724
  %v4726 = vpop.f32.mrf.mxu0
  %v4727 = vpop.f32.mrf.mxu0
  %v4728 = vadd.f32 %v4592, %v4727
  %v4729 = vpop.f32.mrf.mxu0
  %4730 = vmatprep.mubr.bf16.mxu0 0
  %4731 = vmatmul.mubr.bf16.gmra.mxu0 %v4562
  %v4732 = vpop.f32.mrf.mxu0
  %v4733 = vadd.f32 %v4592, %v4732
  %v4734 = vpop.f32.mrf.mxu0
  %v4735 = vpop.f32.mrf.mxu0
  %v4736 = vadd.f32 %v4592, %v4735
  %v4737 = vpop.f32.mrf.mxu0
  %4738 = vmatprep.mubr.bf16.mxu0 0
  %4739 = vmatmul.mubr.bf16.gmra.mxu0 %v4563
  %v4740 = vpop.f32.mrf.mxu0
  %v4741 = vadd.f32 %v4592, %v4740
  %v4742 = vpop.f32.mrf.mxu0
  %v4743 = vpop.f32.mrf.mxu0
  %v4744 = vadd.f32 %v4592, %v4743
  %v4745 = vpop.f32.mrf.mxu0
  %4746 = vmatprep.mubr.bf16.mxu0 0
  %4747 = vmatmul.mubr.bf16.gmra.mxu0 %v4564
  %v4748 = vpop.f32.mrf.mxu0
  %v4749 = vadd.f32 %v4592, %v4748
  %v4750 = vpop.f32.mrf.mxu0
  %v4751 = vpop.f32.mrf.mxu0
  %v4752 = vadd.f32 %v4592, %v4751
  %v4753 = vpop.f32.mrf.mxu0
  %4754 = vmatprep.mubr.bf16.mxu0 0
  %4755 = vmatmul.mubr.bf16.gmra.mxu0 %v4565
  %v4756 = vpop.f32.mrf.mxu0
  %v4757 = vadd.f32 %v4592, %v4756
  %v4758 = vpop.f32.mrf.mxu0
  %v4759 = vpop.f32.mrf.mxu0
  %v4760 = vadd.f32 %v4592, %v4759
  %v4761 = vpop.f32.mrf.mxu0
  %4762 = vmatprep.mubr.bf16.mxu0 0
  %4763 = vmatmul.mubr.bf16.gmra.mxu0 %v4566
  %v4764 = vpop.f32.mrf.mxu0
  %v4765 = vadd.f32 %v4592, %v4764
  %v4766 = vpop.f32.mrf.mxu0
  %v4767 = vpop.f32.mrf.mxu0
  %v4768 = vadd.f32 %v4592, %v4767
  %v4769 = vpop.f32.mrf.mxu0
  %4770 = vmatprep.mubr.bf16.mxu0 0
  %4771 = vmatmul.mubr.bf16.gmra.mxu0 %v4567
  %v4772 = vpop.f32.mrf.mxu0
  %v4773 = vadd.f32 %v4592, %v4772
  %v4774 = vpop.f32.mrf.mxu0
  %v4775 = vpop.f32.mrf.mxu0
  %v4776 = vadd.f32 %v4592, %v4775
  %v4777 = vpop.f32.mrf.mxu0
  %4778 = vmatprep.mubr.bf16.mxu0 0
  %4779 = vmatmul.mubr.bf16.gmra.mxu0 %v4568
  %v4780 = vpop.f32.mrf.mxu0
  %v4781 = vadd.f32 %v4592, %v4780
  %v4782 = vpop.f32.mrf.mxu0
  %v4783 = vpop.f32.mrf.mxu0
  %v4784 = vadd.f32 %v4592, %v4783
  %v4785 = vpop.f32.mrf.mxu0
  %4786 = vmatprep.mubr.bf16.mxu0 0
  %4787 = vmatmul.mubr.bf16.gmra.mxu0 %v4569
  %v4788 = vpop.f32.mrf.mxu0
  %v4789 = vadd.f32 %v4592, %v4788
  %v4790 = vpop.f32.mrf.mxu0
  %v4791 = vpop.f32.mrf.mxu0
  %v4792 = vadd.f32 %v4592, %v4791
  %v4793 = vpop.f32.mrf.mxu0
  %4794 = vmatprep.mubr.bf16.mxu0 0
  %4795 = vmatmul.mubr.bf16.gmra.mxu0 %v4570
  %v4796 = vpop.f32.mrf.mxu0
  %v4797 = vadd.f32 %v4592, %v4796
  %v4798 = vpop.f32.mrf.mxu0
  %v4799 = vpop.f32.mrf.mxu0
  %v4800 = vadd.f32 %v4592, %v4799
  %v4801 = vpop.f32.mrf.mxu0
  %4802 = vdwg.mxu0
  %4803 = vst [vmem:[%s9] sm:$0xff] %v4677
  %4804 = vst [vmem:[%s9 + $0x8] sm:$0xff] %v4680
  %4805 = vst [vmem:[%s9 + $0x10] sm:$0xff] %v4685
  %4806 = vst [vmem:[%s9 + $0x18] sm:$0xff] %v4688
  %4807 = vst [vmem:[%s9 + $0x20] sm:$0xff] %v4693
  %4808 = vst [vmem:[%s9 + $0x28] sm:$0xff] %v4696
  %4809 = vst [vmem:[%s9 + $0x30] sm:$0xff] %v4701
  %4810 = vst [vmem:[%s9 + $0x38] sm:$0xff] %v4704
  %4811 = vst [vmem:[%s9 + $0x40] sm:$0xff] %v4709
  %4812 = vst [vmem:[%s9 + $0x48] sm:$0xff] %v4712
  %4813 = vst [vmem:[%s9 + $0x50] sm:$0xff] %v4717
  %4814 = vst [vmem:[%s9 + $0x58] sm:$0xff] %v4720
  %4815 = vst [vmem:[%s9 + $0x60] sm:$0xff] %v4725
  %4816 = vst [vmem:[%s9 + $0x68] sm:$0xff] %v4728
  %4817 = vst [vmem:[%s9 + $0x70] sm:$0xff] %v4733
  %4818 = vst [vmem:[%s9 + $0x78] sm:$0xff] %v4736
  %4819 = vst [vmem:[%s9 + $0x80] sm:$0xff] %v4741
  %4820 = vst [vmem:[%s9 + $0x88] sm:$0xff] %v4744
  %4821 = vst [vmem:[%s9 + $0x90] sm:$0xff] %v4749
  %4822 = vst [vmem:[%s9 + $0x98] sm:$0xff] %v4752
  %4823 = vst [vmem:[%s9 + $0xa0] sm:$0xff] %v4757
  %4824 = vst [vmem:[%s9 + $0xa8] sm:$0xff] %v4760
  %4825 = vst [vmem:[%s9 + $0xb0] sm:$0xff] %v4765
  %4826 = vst [vmem:[%s9 + $0xb8] sm:$0xff] %v4768
  %4827 = vst [vmem:[%s9 + $0xc0] sm:$0xff] %v4773
  %4828 = vst [vmem:[%s9 + $0xc8] sm:$0xff] %v4776
  %4829 = vst [vmem:[%s9 + $0xd0] sm:$0xff] %v4781
  %4830 = vst [vmem:[%s9 + $0xd8] sm:$0xff] %v4784
  %4831 = vst [vmem:[%s9 + $0xe0] sm:$0xff] %v4789
  %4832 = vst [vmem:[%s9 + $0xe8] sm:$0xff] %v4792
  %4833 = vst [vmem:[%s9 + $0xf0] sm:$0xff] %v4797
  %4834 = vst [vmem:[%s9 + $0xf8] sm:$0xff] %v4800
  // Predicated region
  $region38: #{fc1_large_forward.1} parent=0 // pred_check
    _
  $region39: #{fc1_large_forward.1} parent=0 // pred_check_branch
    %4836 = sbr.rel (0) target = $region41
  $region40: #{fc1_large_forward.1} parent=0 // pred_region
    _
  $region41: #{fc1_large_forward.1} parent=0 // pred_fallthru
    _
  // Predicated region
  $region42: #{fc1_large_forward.1} parent=0 // pred_check
    _
  $region43: #{fc1_large_forward.1} parent=0 // pred_check_branch
    %4838 = sbr.rel (0) target = $region45
  $region44: #{fc1_large_forward.1} parent=0 // pred_region
    _
  $region45: #{fc1_large_forward.1} parent=0 // pred_fallthru
    _

</llo_original>
